<compile_context>
chip_gen: v7x
topology: tpu7x:2x2x1
jax: 0.10.0
libtpu: 0.0.40
codegen_flags: <defaults>
</compile_context>

<pallas_src>
import functools

import jax
import jax.numpy as jnp
import numpy as np
from jax.experimental import pallas as pl
from jax.experimental.pallas import tpu as pltpu

LEAKY_SLOPE = 0.2


# ----------------------------------------------------------------------------
# Pallas kernel: the entire discriminator forward in one launch
# ----------------------------------------------------------------------------
def _discriminator_fused_kernel(*refs, acts):
    """refs = (x_ref, w0, b0, w1, b1, ..., w4, b4, o_ref).

    x_ref : (B, nf_in*H*W)    per-sample flattened NCHW input
    w_i   : (F_in_i, F_out_i) dense init-time-folded conv operator
    b_i   : (1, F_out_i)
    o_ref : (B, 1)            final logits (only HBM store of the kernel)

    Every layer is a single MXU matmul; no in-kernel im2col / slicing /
    relayouts; all intermediates stay in vregs/VMEM.
    """
    x_ref, o_ref = refs[0], refs[-1]
    h = x_ref[...]
    for i, act in enumerate(acts):
        w_ref = refs[1 + 2 * i]
        b_ref = refs[2 + 2 * i]
        h = jnp.dot(h, w_ref[...], preferred_element_type=jnp.float32) + b_ref[...]
        if act:  # LeakyReLU(0.2) on all SN convs except the last; none on final 1x1
            h = jnp.where(h >= 0, h, LEAKY_SLOPE * h)
    o_ref[...] = h


# ----------------------------------------------------------------------------
# Forward wrapper
# ----------------------------------------------------------------------------
def discriminator2d_forward(x_nchw, dense_params):
    """Semantics of Discriminator2D.forward; output is NHWC (B, 1, 1, 1),
    exactly what the PyTorch permute(0, 2, 3, 1).contiguous() returns."""
    B = x_nchw.shape[0]
    x_flat = x_nchw.reshape(B, -1)                       # flattened NCHW per sample
    n = len(dense_params)                                # 4 SN convs + final 1x1 = 5
    acts = tuple(i < n - 2 for i in range(n))            # (T, T, T, F, F)

    flat_args = []
    for D, bias in dense_params:
        flat_args += [D, bias]

    out = pl.pallas_call(
        functools.partial(_discriminator_fused_kernel, acts=acts),
        out_shape=jax.ShapeDtypeStruct((B, dense_params[-1][0].shape[1]), jnp.float32),
        in_specs=[pl.BlockSpec(memory_space=pltpu.MemorySpace.VMEM)] * (1 + 2 * n),
        out_specs=pl.BlockSpec(memory_space=pltpu.MemorySpace.VMEM),
        compiler_params=pltpu.CompilerParams(vmem_limit_bytes=32 * 1024 * 1024),
    )(x_flat, *flat_args)
    return out.reshape(B, 1, 1, 1)


# ----------------------------------------------------------------------------
# Init-time weight folding (pure repacking, done once outside the forward path)
# ----------------------------------------------------------------------------
def conv4x4s2p1_as_dense(w_oihw, b, H, W):
    """Fold Conv2d(Ci->Co, k=4, stride=2, pad=1) acting on an (Ci, H, W) map into
    a dense matrix on the flattened-NCHW vector:  y_flat = x_flat @ D + bias,
    with flattening index (c*H + h)*W + w.  Exact (zero-padding baked in)."""
    w = np.asarray(w_oihw, dtype=np.float32)
    bb = np.asarray(b, dtype=np.float32)
    Co, Ci, KH, KW = w.shape
    Ho, Wo = H // 2, W // 2
    D = np.zeros((Ci * H * W, Co * Ho * Wo), dtype=np.float32)
    ci_idx = np.arange(Ci)
    co_idx = np.arange(Co)
    for oh in range(Ho):
        for ow in range(Wo):
            out_idx = (co_idx * Ho + oh) * Wo + ow                   # (Co,)
            for kh in range(KH):
                ih = 2 * oh + kh - 1
                if ih < 0 or ih >= H:
                    continue
                for kw in range(KW):
                    iw = 2 * ow + kw - 1
                    if iw < 0 or iw >= W:
                        continue
                    in_idx = (ci_idx * H + ih) * W + iw              # (Ci,)
                    D[np.ix_(in_idx, out_idx)] = w[:, :, kh, kw].T   # (Ci, Co)
    bias = np.repeat(bb, Ho * Wo)                                    # b[co] per (oh, ow)
    return jnp.asarray(D), jnp.asarray(bias)


def conv1x1_as_dense(w_oihw, b, H, W):
    """Final 1x1 conv on a (Ci, 1, 1) map -> plain (Ci, Co) matrix."""
    assert H == 1 and W == 1, (H, W)
    w = np.asarray(w_oihw, dtype=np.float32)
    Co, Ci = w.shape[0], w.shape[1]
    D = w.reshape(Co, Ci).T
    return jnp.asarray(D), jnp.asarray(np.asarray(b, dtype=np.float32))


def fold_params_to_dense(conv_params, final_params, image_hw):
    """Repack all layer weights into dense per-layer operators + biases (done
    once at init, never re-executed inside the jitted forward)."""
    H, W = image_hw
    dense = []
    for (w, b) in conv_params:
        D, bias = conv4x4s2p1_as_dense(w, b, H, W)
        dense.append((D, bias[None, :]))
        H, W = H // 2, W // 2
    wf, bf = final_params
    Df, biasf = conv1x1_as_dense(wf, bf, H, W)
    dense.append((Df, biasf[None, :]))
    return dense


# ----------------------------------------------------------------------------
# Parameter setup (deterministic, synthetic) -- plain JAX / numpy glue
# ----------------------------------------------------------------------------
def spectral_norm_weight(w_oihw, u_key, n_power_iterations=1, eps=1e-12):
    """torch.nn.utils.spectral_norm semantics: W / sigma, sigma from power
    iteration on W reshaped to (O, I*kh*kw).  Init-time preprocessing, not
    kernel code."""
    O = w_oihw.shape[0]
    w_mat = w_oihw.reshape(O, -1)
    u = jax.random.normal(u_key, (O,), dtype=jnp.float32)
    u = u / (jnp.linalg.norm(u) + eps)
    v = None
    for _ in range(n_power_iterations):
        v = w_mat.T @ u
        v = v / (jnp.linalg.norm(v) + eps)
        u = w_mat @ v
        u = u / (jnp.linalg.norm(u) + eps)
    sigma = u @ (w_mat @ v)
    return w_oihw / sigma


def init_params(key, nf_in, nf):
    layer_dims = [(nf_in, 2 * nf), (2 * nf, 4 * nf),
                  (4 * nf, 8 * nf), (8 * nf, 8 * nf)]
    conv_params = []
    for (ci, co) in layer_dims:
        key, kw, kb, ku = jax.random.split(key, 4)
        fan_in = ci * 16
        w = jax.random.normal(kw, (co, ci, 4, 4), jnp.float32) * (2.0 / fan_in) ** 0.5
        b = jax.random.normal(kb, (co,), jnp.float32) * 0.05
        w = spectral_norm_weight(w, ku)
        conv_params.append((w, b))
    key, kwf, kbf = jax.random.split(key, 3)
    wf = jax.random.normal(kwf, (1, 8 * nf, 1, 1), jnp.float32) * 0.1
    bf = jax.random.normal(kbf, (1,), jnp.float32) * 0.05
    return conv_params, (wf, bf)


# ----------------------------------------------------------------------------
# Pure-JAX reference (for correctness check only)
# ----------------------------------------------------------------------------
def reference_forward(x_nchw, conv_params, final_params):
    x = x_nchw
    n = len(conv_params)
    for i, (w, b) in enumerate(conv_params):
        x = jax.lax.conv_general_dilated(
            x, w, (2, 2), [(1, 1), (1, 1)],
            dimension_numbers=("NCHW", "OIHW", "NCHW"),
            precision=jax.lax.Precision.HIGHEST)
        x = x + b.reshape(1, -1, 1, 1)
        if i < n - 1:
            x = jnp.where(x >= 0, x, LEAKY_SLOPE * x)
    wf, bf = final_params
    x = jax.lax.conv_general_dilated(
        x, wf, (1, 1), [(0, 0), (0, 0)],
        dimension_numbers=("NCHW", "OIHW", "NCHW"),
        precision=jax.lax.Precision.HIGHEST)
    x = x + bf.reshape(1, -1, 1, 1)
    return jnp.transpose(x, (0, 2, 3, 1))


if __name__ == "__main__":
    B, nf_in, nf, H, W = 2, 4, 8, 16, 16

    key = jax.random.PRNGKey(0)
    key, kx = jax.random.split(key)
    x = jax.random.normal(kx, (B, nf_in, H, W), jnp.float32)   # NCHW like PyTorch
    conv_params, final_params = init_params(key, nf_in, nf)

    # One-time weight repacking (outside the jitted forward path).
    dense_params = fold_params_to_dense(conv_params, final_params, (H, W))

    fwd = jax.jit(discriminator2d_forward)
    out = fwd(x, dense_params)
    out = jax.block_until_ready(out)

    ref = reference_forward(x, conv_params, final_params)
    assert out.shape == (B, 1, 1, 1), out.shape
    np.testing.assert_allclose(np.asarray(out), np.asarray(ref),
                               rtol=1e-3, atol=1e-3)
    print("KERNEL_OK")
</pallas_src>

<mosaic_0001>
module attributes {stable_mosaic.version = 11 : i64} {
  func.func @_discriminator_fused_kernel(%arg0: memref<2x1024xf32, #tpu.memory_space<vmem>>, %arg1: memref<1024x1024xf32, #tpu.memory_space<vmem>>, %arg2: memref<1x1024xf32, #tpu.memory_space<vmem>>, %arg3: memref<1024x512xf32, #tpu.memory_space<vmem>>, %arg4: memref<1x512xf32, #tpu.memory_space<vmem>>, %arg5: memref<512x256xf32, #tpu.memory_space<vmem>>, %arg6: memref<1x256xf32, #tpu.memory_space<vmem>>, %arg7: memref<256x64xf32, #tpu.memory_space<vmem>>, %arg8: memref<1x64xf32, #tpu.memory_space<vmem>>, %arg9: memref<64x1xf32, #tpu.memory_space<vmem>>, %arg10: memref<1x1xf32, #tpu.memory_space<vmem>>, %arg11: memref<2x1xf32, #tpu.memory_space<vmem>>) attributes {dimension_semantics = [], scalar_prefetch = 0 : i64, scratch_operands = 0 : i64, tpu.core_type = #tpu.core_type<tc>} {
    %c0 = arith.constant 0 : index
    %c0_0 = arith.constant 0 : index
    %0 = vector.load %arg0[%c0, %c0_0] : memref<2x1024xf32, #tpu.memory_space<vmem>>, vector<2x1024xf32>
    %c0_1 = arith.constant 0 : index
    %c0_2 = arith.constant 0 : index
    %1 = vector.load %arg1[%c0_1, %c0_2] : memref<1024x1024xf32, #tpu.memory_space<vmem>>, vector<1024x1024xf32>
    %cst = arith.constant dense<0.000000e+00> : vector<2x1024xf32>
    %2 = tpu.matmul %0, %1, %cst {dimension_numbers = #tpu.dot_dimension_numbers<[1], [0], [0], [1], [0, 0, 1, 1], [], []>} : vector<2x1024xf32>, vector<1024x1024xf32>, vector<2x1024xf32> -> vector<2x1024xf32>
    %c0_3 = arith.constant 0 : index
    %c0_4 = arith.constant 0 : index
    %3 = vector.load %arg2[%c0_3, %c0_4] : memref<1x1024xf32, #tpu.memory_space<vmem>>, vector<1x1024xf32>
    %4 = vector.broadcast %3 : vector<1x1024xf32> to vector<2x1024xf32>
    %5 = arith.addf %2, %4 : vector<2x1024xf32>
    %cst_5 = arith.constant 0.000000e+00 : f32
    %6 = vector.broadcast %cst_5 : f32 to vector<2x1024xf32>
    %7 = arith.cmpf oge, %5, %6 : vector<2x1024xf32>
    %cst_6 = arith.constant 2.000000e-01 : f32
    %8 = vector.broadcast %cst_6 : f32 to vector<2x1024xf32>
    %9 = arith.mulf %8, %5 : vector<2x1024xf32>
    %10 = arith.select %7, %5, %9 : vector<2x1024xi1>, vector<2x1024xf32>
    %c0_7 = arith.constant 0 : index
    %c0_8 = arith.constant 0 : index
    %11 = vector.load %arg3[%c0_7, %c0_8] : memref<1024x512xf32, #tpu.memory_space<vmem>>, vector<1024x512xf32>
    %cst_9 = arith.constant dense<0.000000e+00> : vector<2x512xf32>
    %12 = tpu.matmul %10, %11, %cst_9 {dimension_numbers = #tpu.dot_dimension_numbers<[1], [0], [0], [1], [0, 0, 1, 1], [], []>} : vector<2x1024xf32>, vector<1024x512xf32>, vector<2x512xf32> -> vector<2x512xf32>
    %c0_10 = arith.constant 0 : index
    %c0_11 = arith.constant 0 : index
    %13 = vector.load %arg4[%c0_10, %c0_11] : memref<1x512xf32, #tpu.memory_space<vmem>>, vector<1x512xf32>
    %14 = vector.broadcast %13 : vector<1x512xf32> to vector<2x512xf32>
    %15 = arith.addf %12, %14 : vector<2x512xf32>
    %cst_12 = arith.constant 0.000000e+00 : f32
    %16 = vector.broadcast %cst_12 : f32 to vector<2x512xf32>
    %17 = arith.cmpf oge, %15, %16 : vector<2x512xf32>
    %cst_13 = arith.constant 2.000000e-01 : f32
    %18 = vector.broadcast %cst_13 : f32 to vector<2x512xf32>
    %19 = arith.mulf %18, %15 : vector<2x512xf32>
    %20 = arith.select %17, %15, %19 : vector<2x512xi1>, vector<2x512xf32>
    %c0_14 = arith.constant 0 : index
    %c0_15 = arith.constant 0 : index
    %21 = vector.load %arg5[%c0_14, %c0_15] : memref<512x256xf32, #tpu.memory_space<vmem>>, vector<512x256xf32>
    %cst_16 = arith.constant dense<0.000000e+00> : vector<2x256xf32>
    %22 = tpu.matmul %20, %21, %cst_16 {dimension_numbers = #tpu.dot_dimension_numbers<[1], [0], [0], [1], [0, 0, 1, 1], [], []>} : vector<2x512xf32>, vector<512x256xf32>, vector<2x256xf32> -> vector<2x256xf32>
    %c0_17 = arith.constant 0 : index
    %c0_18 = arith.constant 0 : index
    %23 = vector.load %arg6[%c0_17, %c0_18] : memref<1x256xf32, #tpu.memory_space<vmem>>, vector<1x256xf32>
    %24 = vector.broadcast %23 : vector<1x256xf32> to vector<2x256xf32>
    %25 = arith.addf %22, %24 : vector<2x256xf32>
    %cst_19 = arith.constant 0.000000e+00 : f32
    %26 = vector.broadcast %cst_19 : f32 to vector<2x256xf32>
    %27 = arith.cmpf oge, %25, %26 : vector<2x256xf32>
    %cst_20 = arith.constant 2.000000e-01 : f32
    %28 = vector.broadcast %cst_20 : f32 to vector<2x256xf32>
    %29 = arith.mulf %28, %25 : vector<2x256xf32>
    %30 = arith.select %27, %25, %29 : vector<2x256xi1>, vector<2x256xf32>
    %c0_21 = arith.constant 0 : index
    %c0_22 = arith.constant 0 : index
    %31 = vector.load %arg7[%c0_21, %c0_22] : memref<256x64xf32, #tpu.memory_space<vmem>>, vector<256x64xf32>
    %cst_23 = arith.constant dense<0.000000e+00> : vector<2x64xf32>
    %32 = tpu.matmul %30, %31, %cst_23 {dimension_numbers = #tpu.dot_dimension_numbers<[1], [0], [0], [1], [0, 0, 1, 1], [], []>} : vector<2x256xf32>, vector<256x64xf32>, vector<2x64xf32> -> vector<2x64xf32>
    %c0_24 = arith.constant 0 : index
    %c0_25 = arith.constant 0 : index
    %33 = vector.load %arg8[%c0_24, %c0_25] : memref<1x64xf32, #tpu.memory_space<vmem>>, vector<1x64xf32>
    %34 = vector.broadcast %33 : vector<1x64xf32> to vector<2x64xf32>
    %35 = arith.addf %32, %34 : vector<2x64xf32>
    %c0_26 = arith.constant 0 : index
    %c0_27 = arith.constant 0 : index
    %36 = vector.load %arg9[%c0_26, %c0_27] : memref<64x1xf32, #tpu.memory_space<vmem>>, vector<64x1xf32>
    %cst_28 = arith.constant dense<0.000000e+00> : vector<2x1xf32>
    %37 = tpu.matmul %35, %36, %cst_28 {dimension_numbers = #tpu.dot_dimension_numbers<[1], [0], [0], [1], [0, 0, 1, 1], [], []>} : vector<2x64xf32>, vector<64x1xf32>, vector<2x1xf32> -> vector<2x1xf32>
    %c0_29 = arith.constant 0 : index
    %c0_30 = arith.constant 0 : index
    %38 = vector.load %arg10[%c0_29, %c0_30] : memref<1x1xf32, #tpu.memory_space<vmem>>, vector<1x1xf32>
    %39 = vector.broadcast %38 : vector<1x1xf32> to vector<2x1xf32>
    %40 = arith.addf %37, %39 : vector<2x1xf32>
    %c0_31 = arith.constant 0 : index
    %c0_32 = arith.constant 0 : index
    %41 = vector.load %arg11[%c0_31, %c0_32] : memref<2x1xf32, #tpu.memory_space<vmem>>, vector<2x1xf32>
    tpu.vector_store %arg11[%c0_31, %c0_32], %40 {strides = array<i32>} : memref<2x1xf32, #tpu.memory_space<vmem>>, vector<2x1xf32>,
    return
  }
}

</mosaic_0001>

<llo_original>
// kernel: discriminator2d_forward.1
$region0: #{discriminator2d_forward.1}
  #allocation0 [shape = 'u32[]', space=smem, size = 0x4, offset = 0x4, fixed_abs, tag = 'smem constant byte address 0x4 - core index']
  #allocation1 [shape = 'u32[144,128]{1,0:T(1,128)}', space=vmem, size = 0x12000, scoped, tag = 'internal scratch']
  #allocation2 [shape = 'f32[1,1]{1,0:T(1,128)S(1)}', space=vmem, size = 0x200, scoped, tag = 'scoped memory for discriminator2d_forward.1']
  %s0 = inlined_call_operand.vmem [shape: f32[2,1024], index: 0, kind: input, shape index: {}]
  %s1 = inlined_call_operand.hbm [shape: f32[1024,1024], index: 1, kind: input, shape index: {}]
  %s2 = inlined_call_operand.hbm [shape: f32[1,1024], index: 2, kind: input, shape index: {}]
  %s3 = inlined_call_operand.hbm [shape: f32[1024,512], index: 3, kind: input, shape index: {}]
  %s4 = inlined_call_operand.hbm [shape: f32[1,512], index: 4, kind: input, shape index: {}]
  %s5 = inlined_call_operand.hbm [shape: f32[512,256], index: 5, kind: input, shape index: {}]
  %s6 = inlined_call_operand.hbm [shape: f32[1,256], index: 6, kind: input, shape index: {}]
  %s7 = inlined_call_operand.vmem [shape: f32[256,64], index: 7, kind: input, shape index: {}]
  %s8 = inlined_call_operand.hbm [shape: f32[1,64], index: 8, kind: input, shape index: {}]
  %s9 = inlined_call_operand.vmem [shape: f32[64,1], index: 9, kind: input, shape index: {}]
  %s10 = inlined_call_operand.<no memory space> [shape: f32[1,1], index: 10, kind: input, shape index: {}]
  %s11 = inlined_call_operand.vmem [shape: f32[2,1], index: 11, kind: output, shape index: {}]
  %s12 = sld [smem:[#allocation0]]
  $region82: #{discriminator2d_forward.1} parent=0
    _
  %s14 = ssub.s32 1, %s12
  %s15 = scalar_select 0, %s14, %s12
  %v16 = vstv %s10
  %17 = vst [vmem:[#allocation2] sm:$0x1] %v16
  $region1: #{discriminator2d_forward.1} parent=0
    #allocation3 [shape = 'u8[4194304]{0}', space=vmem, size = 0x400000, scoped, tag = 'input window, operand 1, single buffered']
    #allocation4 [shape = 's32[1]{0}', space=sflag, size = 0x4, scoped, tag = 'scoped memory for discriminator2d_forward.1']
    #allocation5 [shape = 'u8[4096]{0}', space=vmem, size = 0x1000, scoped, tag = 'input window, operand 2, single buffered']
    #allocation6 [shape = 's32[1]{0}', space=sflag, size = 0x4, scoped, tag = 'scoped memory for discriminator2d_forward.1']
    #allocation7 [shape = 'u8[2097152]{0}', space=vmem, size = 0x200000, scoped, tag = 'input window, operand 3, single buffered']
    #allocation8 [shape = 'u8[2048]{0}', space=vmem, size = 0x800, scoped, tag = 'input window, operand 4, single buffered']
    #allocation9 [shape = 's32[1]{0}', space=sflag, size = 0x4, scoped, tag = 'scoped memory for discriminator2d_forward.1']
    #allocation10 [shape = 'u8[524288]{0}', space=vmem, size = 0x80000, scoped, tag = 'input window, operand 5, single buffered']
    #allocation11 [shape = 'u8[1024]{0}', space=vmem, size = 0x400, scoped, tag = 'input window, operand 6, single buffered']
    #allocation12 [shape = 's32[1]{0}', space=sflag, size = 0x4, scoped, tag = 'scoped memory for discriminator2d_forward.1']
    #allocation13 [shape = 'u8[512]{0}', space=vmem, size = 0x400, scoped, tag = 'input window, operand 8, single buffered']
    %18 = vsyncpa [#allocation4], 0
    %19 = vsyncpa [#allocation6], 0
    %20 = vsyncpa [#allocation9], 0
    %21 = vsyncpa [#allocation12], 0
    // Predicated region
    $region2: #{discriminator2d_forward.1} parent=1 // pred_check
      _
    $region3: #{discriminator2d_forward.1} parent=1 // pred_check_branch
      %23 = sbr.rel (0) target = $region5
    $region4: #{discriminator2d_forward.1} parent=1 // pred_region
      _
    $region5: #{discriminator2d_forward.1} parent=1 // pred_fallthru
      _
    // Predicated region
    $region6: #{discriminator2d_forward.1} parent=1 // pred_check
      _
    $region7: #{discriminator2d_forward.1} parent=1 // pred_check_branch
      %25 = sbr.rel (0) target = $region9
    $region8: #{discriminator2d_forward.1} parent=1 // pred_region
      %s27 = ssub.s32 131072, 131072
      %28 = vsyncadd [#allocation4], %s27
      %s29 = sshll.u32 [#allocation3], 4
      %s30 = int_to_ptr.vmem [resolvable:$true] %s29
      %35 = dma.hbm_to_vmem [thread:$0]  %s1, 131072, %s30, [#allocation4], 1024, 1024, 64
    $region9: #{discriminator2d_forward.1} parent=1 // pred_fallthru
      _
    // Predicated region
    $region10: #{discriminator2d_forward.1} parent=1 // pred_check
      _
    $region11: #{discriminator2d_forward.1} parent=1 // pred_check_branch
      %37 = sbr.rel (0) target = $region13
    $region12: #{discriminator2d_forward.1} parent=1 // pred_region
      %s39 = ssub.s32 128, 128
      %40 = vsyncadd [#allocation6], %s39
      %s42 = sshll.u32 [#allocation5], 4
      %s43 = int_to_ptr.vmem [resolvable:$true] %s42
      %45 = dma.hbm_to_vmem [thread:$0]  %s2, 128, %s43, [#allocation6]
    $region13: #{discriminator2d_forward.1} parent=1 // pred_fallthru
      _
    // Predicated region
    $region14: #{discriminator2d_forward.1} parent=1 // pred_check
      _
    $region15: #{discriminator2d_forward.1} parent=1 // pred_check_branch
      %47 = sbr.rel (0) target = $region17
    $region16: #{discriminator2d_forward.1} parent=1 // pred_region
      %s49 = ssub.s32 65536, 65536
      %50 = vsyncadd [#allocation6], %s49
      %s51 = sshll.u32 [#allocation7], 4
      %s52 = int_to_ptr.vmem [resolvable:$true] %s51
      %57 = dma.hbm_to_vmem [thread:$0]  %s3, 65536, %s52, [#allocation6], 512, 512, 32
    $region17: #{discriminator2d_forward.1} parent=1 // pred_fallthru
      _
    // Predicated region
    $region18: #{discriminator2d_forward.1} parent=1 // pred_check
      _
    $region19: #{discriminator2d_forward.1} parent=1 // pred_check_branch
      %59 = sbr.rel (0) target = $region21
    $region20: #{discriminator2d_forward.1} parent=1 // pred_region
      %s61 = ssub.s32 64, 64
      %62 = vsyncadd [#allocation9], %s61
      %s64 = sshll.u32 [#allocation8], 4
      %s65 = int_to_ptr.vmem [resolvable:$true] %s64
      %67 = dma.hbm_to_vmem [thread:$0]  %s4, 64, %s65, [#allocation9]
    $region21: #{discriminator2d_forward.1} parent=1 // pred_fallthru
      _
    // Predicated region
    $region22: #{discriminator2d_forward.1} parent=1 // pred_check
      _
    $region23: #{discriminator2d_forward.1} parent=1 // pred_check_branch
      %69 = sbr.rel (0) target = $region25
    $region24: #{discriminator2d_forward.1} parent=1 // pred_region
      %s71 = ssub.s32 16384, 16384
      %72 = vsyncadd [#allocation9], %s71
      %s73 = sshll.u32 [#allocation10], 4
      %s74 = int_to_ptr.vmem [resolvable:$true] %s73
      %79 = dma.hbm_to_vmem [thread:$0]  %s5, 16384, %s74, [#allocation9], 256, 256, 16
    $region25: #{discriminator2d_forward.1} parent=1 // pred_fallthru
      _
    // Predicated region
    $region26: #{discriminator2d_forward.1} parent=1 // pred_check
      _
    $region27: #{discriminator2d_forward.1} parent=1 // pred_check_branch
      %81 = sbr.rel (0) target = $region29
    $region28: #{discriminator2d_forward.1} parent=1 // pred_region
      %s83 = ssub.s32 32, 32
      %84 = vsyncadd [#allocation12], %s83
      %s86 = sshll.u32 [#allocation11], 4
      %s87 = int_to_ptr.vmem [resolvable:$true] %s86
      %89 = dma.hbm_to_vmem [thread:$0]  %s6, 32, %s87, [#allocation12]
    $region29: #{discriminator2d_forward.1} parent=1 // pred_fallthru
      _
    // Predicated region
    $region30: #{discriminator2d_forward.1} parent=1 // pred_check
      _
    $region31: #{discriminator2d_forward.1} parent=1 // pred_check_branch
      %91 = sbr.rel (0) target = $region33
    $region32: #{discriminator2d_forward.1} parent=1 // pred_region
      _
    $region33: #{discriminator2d_forward.1} parent=1 // pred_fallthru
      _
    // Predicated region
    $region34: #{discriminator2d_forward.1} parent=1 // pred_check
      _
    $region35: #{discriminator2d_forward.1} parent=1 // pred_check_branch
      %93 = sbr.rel (0) target = $region37
    $region36: #{discriminator2d_forward.1} parent=1 // pred_region
      %s95 = ssub.s32 16, 16
      %96 = vsyncadd [#allocation12], %s95
      %s98 = sshll.u32 [#allocation13], 4
      %s99 = int_to_ptr.vmem [resolvable:$true] %s98
      %101 = dma.hbm_to_vmem [thread:$0]  %s8, 16, %s99, [#allocation12]
    $region37: #{discriminator2d_forward.1} parent=1 // pred_fallthru
      _
    // Predicated region
    $region38: #{discriminator2d_forward.1} parent=1 // pred_check
      _
    $region39: #{discriminator2d_forward.1} parent=1 // pred_check_branch
      %103 = sbr.rel (0) target = $region41
    $region40: #{discriminator2d_forward.1} parent=1 // pred_region
      _
    $region41: #{discriminator2d_forward.1} parent=1 // pred_fallthru
      _
    // Predicated region
    $region42: #{discriminator2d_forward.1} parent=1 // pred_check
      _
    $region43: #{discriminator2d_forward.1} parent=1 // pred_check_branch
      %105 = sbr.rel (0) target = $region45
    $region44: #{discriminator2d_forward.1} parent=1 // pred_region
      _
    $region45: #{discriminator2d_forward.1} parent=1 // pred_fallthru
      _
    // Predicated region
    $region46: #{discriminator2d_forward.1} parent=1 // pred_check
      _
    $region47: #{discriminator2d_forward.1} parent=1 // pred_check_branch
      %107 = sbr.rel (0) target = $region49
    $region48: #{discriminator2d_forward.1} parent=1 // pred_region
      %108 = dma.done [#allocation4], 131072
    $region49: #{discriminator2d_forward.1} parent=1 // pred_fallthru
      _
    // Predicated region
    $region50: #{discriminator2d_forward.1} parent=1 // pred_check
      _
    $region51: #{discriminator2d_forward.1} parent=1 // pred_check_branch
      %110 = sbr.rel (0) target = $region53
    $region52: #{discriminator2d_forward.1} parent=1 // pred_region
      %111 = dma.done [#allocation6], 128
    $region53: #{discriminator2d_forward.1} parent=1 // pred_fallthru
      _
    // Predicated region
    $region54: #{discriminator2d_forward.1} parent=1 // pred_check
      _
    $region55: #{discriminator2d_forward.1} parent=1 // pred_check_branch
      %113 = sbr.rel (0) target = $region57
    $region56: #{discriminator2d_forward.1} parent=1 // pred_region
      %114 = dma.done [#allocation6], 65536
    $region57: #{discriminator2d_forward.1} parent=1 // pred_fallthru
      _
    // Predicated region
    $region58: #{discriminator2d_forward.1} parent=1 // pred_check
      _
    $region59: #{discriminator2d_forward.1} parent=1 // pred_check_branch
      %116 = sbr.rel (0) target = $region61
    $region60: #{discriminator2d_forward.1} parent=1 // pred_region
      %117 = dma.done [#allocation9], 64
    $region61: #{discriminator2d_forward.1} parent=1 // pred_fallthru
      _
    // Predicated region
    $region62: #{discriminator2d_forward.1} parent=1 // pred_check
      _
    $region63: #{discriminator2d_forward.1} parent=1 // pred_check_branch
      %119 = sbr.rel (0) target = $region65
    $region64: #{discriminator2d_forward.1} parent=1 // pred_region
      %120 = dma.done [#allocation9], 16384
    $region65: #{discriminator2d_forward.1} parent=1 // pred_fallthru
      _
    // Predicated region
    $region66: #{discriminator2d_forward.1} parent=1 // pred_check
      _
    $region67: #{discriminator2d_forward.1} parent=1 // pred_check_branch
      %122 = sbr.rel (0) target = $region69
    $region68: #{discriminator2d_forward.1} parent=1 // pred_region
      %123 = dma.done [#allocation12], 32
    $region69: #{discriminator2d_forward.1} parent=1 // pred_fallthru
      _
    // Predicated region
    $region70: #{discriminator2d_forward.1} parent=1 // pred_check
      _
    $region71: #{discriminator2d_forward.1} parent=1 // pred_check_branch
      %125 = sbr.rel (0) target = $region73
    $region72: #{discriminator2d_forward.1} parent=1 // pred_region
      %126 = dma.done [#allocation12], 16
    $region73: #{discriminator2d_forward.1} parent=1 // pred_fallthru
      _
    %v127 = vld [vmem:[%s0] sm:$0xff]
    %v128 = vld [vmem:[%s0 + $0x8] sm:$0xff]
    %v129 = vld [vmem:[#allocation3] sm:$0xff]
    %v130 = vld [vmem:[#allocation3 + $0x8] sm:$0xff]
    %v131 = vld [vmem:[#allocation3 + $0x10] sm:$0xff]
    %v132 = vld [vmem:[#allocation3 + $0x18] sm:$0xff]
    %v133 = vld [vmem:[#allocation3 + $0x20] sm:$0xff]
    %v134 = vld [vmem:[#allocation3 + $0x28] sm:$0xff]
    %v135 = vld [vmem:[#allocation3 + $0x30] sm:$0xff]
    %v136 = vld [vmem:[#allocation3 + $0x38] sm:$0xff]
    %v137 = vld [vmem:[#allocation3 + $0x40] sm:$0xff]
    %v138 = vld [vmem:[#allocation3 + $0x48] sm:$0xff]
    %v139 = vld [vmem:[#allocation3 + $0x50] sm:$0xff]
    %v140 = vld [vmem:[#allocation3 + $0x58] sm:$0xff]
    %v141 = vld [vmem:[#allocation3 + $0x60] sm:$0xff]
    %v142 = vld [vmem:[#allocation3 + $0x68] sm:$0xff]
    %v143 = vld [vmem:[#allocation3 + $0x70] sm:$0xff]
    %v144 = vld [vmem:[#allocation3 + $0x78] sm:$0xff]
    %v145 = vld [vmem:[#allocation3 + $0x80] sm:$0xff]
    %v146 = vld [vmem:[#allocation3 + $0x88] sm:$0xff]
    %v147 = vld [vmem:[#allocation3 + $0x90] sm:$0xff]
    %v148 = vld [vmem:[#allocation3 + $0x98] sm:$0xff]
    %v149 = vld [vmem:[#allocation3 + $0xa0] sm:$0xff]
    %v150 = vld [vmem:[#allocation3 + $0xa8] sm:$0xff]
    %v151 = vld [vmem:[#allocation3 + $0xb0] sm:$0xff]
    %v152 = vld [vmem:[#allocation3 + $0xb8] sm:$0xff]
    %v153 = vld [vmem:[#allocation3 + $0xc0] sm:$0xff]
    %v154 = vld [vmem:[#allocation3 + $0xc8] sm:$0xff]
    %v155 = vld [vmem:[#allocation3 + $0xd0] sm:$0xff]
    %v156 = vld [vmem:[#allocation3 + $0xd8] sm:$0xff]
    %v157 = vld [vmem:[#allocation3 + $0xe0] sm:$0xff]
    %v158 = vld [vmem:[#allocation3 + $0xe8] sm:$0xff]
    %v159 = vld [vmem:[#allocation3 + $0xf0] sm:$0xff]
    %v160 = vld [vmem:[#allocation3 + $0xf8] sm:$0xff]
    %v161 = vld [vmem:[#allocation3 + $0x100] sm:$0xff]
    %v162 = vld [vmem:[#allocation3 + $0x108] sm:$0xff]
    %v163 = vld [vmem:[#allocation3 + $0x110] sm:$0xff]
    %v164 = vld [vmem:[#allocation3 + $0x118] sm:$0xff]
    %v165 = vld [vmem:[#allocation3 + $0x120] sm:$0xff]
    %v166 = vld [vmem:[#allocation3 + $0x128] sm:$0xff]
    %v167 = vld [vmem:[#allocation3 + $0x130] sm:$0xff]
    %v168 = vld [vmem:[#allocation3 + $0x138] sm:$0xff]
    %v169 = vld [vmem:[#allocation3 + $0x140] sm:$0xff]
    %v170 = vld [vmem:[#allocation3 + $0x148] sm:$0xff]
    %v171 = vld [vmem:[#allocation3 + $0x150] sm:$0xff]
    %v172 = vld [vmem:[#allocation3 + $0x158] sm:$0xff]
    %v173 = vld [vmem:[#allocation3 + $0x160] sm:$0xff]
    %v174 = vld [vmem:[#allocation3 + $0x168] sm:$0xff]
    %v175 = vld [vmem:[#allocation3 + $0x170] sm:$0xff]
    %v176 = vld [vmem:[#allocation3 + $0x178] sm:$0xff]
    %v177 = vld [vmem:[#allocation3 + $0x180] sm:$0xff]
    %v178 = vld [vmem:[#allocation3 + $0x188] sm:$0xff]
    %v179 = vld [vmem:[#allocation3 + $0x190] sm:$0xff]
    %v180 = vld [vmem:[#allocation3 + $0x198] sm:$0xff]
    %v181 = vld [vmem:[#allocation3 + $0x1a0] sm:$0xff]
    %v182 = vld [vmem:[#allocation3 + $0x1a8] sm:$0xff]
    %v183 = vld [vmem:[#allocation3 + $0x1b0] sm:$0xff]
    %v184 = vld [vmem:[#allocation3 + $0x1b8] sm:$0xff]
    %v185 = vld [vmem:[#allocation3 + $0x1c0] sm:$0xff]
    %v186 = vld [vmem:[#allocation3 + $0x1c8] sm:$0xff]
    %v187 = vld [vmem:[#allocation3 + $0x1d0] sm:$0xff]
    %v188 = vld [vmem:[#allocation3 + $0x1d8] sm:$0xff]
    %v189 = vld [vmem:[#allocation3 + $0x1e0] sm:$0xff]
    %v190 = vld [vmem:[#allocation3 + $0x1e8] sm:$0xff]
    %v191 = vld [vmem:[#allocation3 + $0x1f0] sm:$0xff]
    %v192 = vld [vmem:[#allocation3 + $0x1f8] sm:$0xff]
    %v193 = vld [vmem:[#allocation3 + $0x200] sm:$0xff]
    %v194 = vld [vmem:[#allocation3 + $0x208] sm:$0xff]
    %v195 = vld [vmem:[#allocation3 + $0x210] sm:$0xff]
    %v196 = vld [vmem:[#allocation3 + $0x218] sm:$0xff]
    %v197 = vld [vmem:[#allocation3 + $0x220] sm:$0xff]
    %v198 = vld [vmem:[#allocation3 + $0x228] sm:$0xff]
    %v199 = vld [vmem:[#allocation3 + $0x230] sm:$0xff]
    %v200 = vld [vmem:[#allocation3 + $0x238] sm:$0xff]
    %v201 = vld [vmem:[#allocation3 + $0x240] sm:$0xff]
    %v202 = vld [vmem:[#allocation3 + $0x248] sm:$0xff]
    %v203 = vld [vmem:[#allocation3 + $0x250] sm:$0xff]
    %v204 = vld [vmem:[#allocation3 + $0x258] sm:$0xff]
    %v205 = vld [vmem:[#allocation3 + $0x260] sm:$0xff]
    %v206 = vld [vmem:[#allocation3 + $0x268] sm:$0xff]
    %v207 = vld [vmem:[#allocation3 + $0x270] sm:$0xff]
    %v208 = vld [vmem:[#allocation3 + $0x278] sm:$0xff]
    %v209 = vld [vmem:[#allocation3 + $0x280] sm:$0xff]
    %v210 = vld [vmem:[#allocation3 + $0x288] sm:$0xff]
    %v211 = vld [vmem:[#allocation3 + $0x290] sm:$0xff]
    %v212 = vld [vmem:[#allocation3 + $0x298] sm:$0xff]
    %v213 = vld [vmem:[#allocation3 + $0x2a0] sm:$0xff]
    %v214 = vld [vmem:[#allocation3 + $0x2a8] sm:$0xff]
    %v215 = vld [vmem:[#allocation3 + $0x2b0] sm:$0xff]
    %v216 = vld [vmem:[#allocation3 + $0x2b8] sm:$0xff]
    %v217 = vld [vmem:[#allocation3 + $0x2c0] sm:$0xff]
    %v218 = vld [vmem:[#allocation3 + $0x2c8] sm:$0xff]
    %v219 = vld [vmem:[#allocation3 + $0x2d0] sm:$0xff]
    %v220 = vld [vmem:[#allocation3 + $0x2d8] sm:$0xff]
    %v221 = vld [vmem:[#allocation3 + $0x2e0] sm:$0xff]
    %v222 = vld [vmem:[#allocation3 + $0x2e8] sm:$0xff]
    %v223 = vld [vmem:[#allocation3 + $0x2f0] sm:$0xff]
    %v224 = vld [vmem:[#allocation3 + $0x2f8] sm:$0xff]
    %v225 = vld [vmem:[#allocation3 + $0x300] sm:$0xff]
    %v226 = vld [vmem:[#allocation3 + $0x308] sm:$0xff]
    %v227 = vld [vmem:[#allocation3 + $0x310] sm:$0xff]
    %v228 = vld [vmem:[#allocation3 + $0x318] sm:$0xff]
    %v229 = vld [vmem:[#allocation3 + $0x320] sm:$0xff]
    %v230 = vld [vmem:[#allocation3 + $0x328] sm:$0xff]
    %v231 = vld [vmem:[#allocation3 + $0x330] sm:$0xff]
    %v232 = vld [vmem:[#allocation3 + $0x338] sm:$0xff]
    %v233 = vld [vmem:[#allocation3 + $0x340] sm:$0xff]
    %v234 = vld [vmem:[#allocation3 + $0x348] sm:$0xff]
    %v235 = vld [vmem:[#allocation3 + $0x350] sm:$0xff]
    %v236 = vld [vmem:[#allocation3 + $0x358] sm:$0xff]
    %v237 = vld [vmem:[#allocation3 + $0x360] sm:$0xff]
    %v238 = vld [vmem:[#allocation3 + $0x368] sm:$0xff]
    %v239 = vld [vmem:[#allocation3 + $0x370] sm:$0xff]
    %v240 = vld [vmem:[#allocation3 + $0x378] sm:$0xff]
    %v241 = vld [vmem:[#allocation3 + $0x380] sm:$0xff]
    %v242 = vld [vmem:[#allocation3 + $0x388] sm:$0xff]
    %v243 = vld [vmem:[#allocation3 + $0x390] sm:$0xff]
    %v244 = vld [vmem:[#allocation3 + $0x398] sm:$0xff]
    %v245 = vld [vmem:[#allocation3 + $0x3a0] sm:$0xff]
    %v246 = vld [vmem:[#allocation3 + $0x3a8] sm:$0xff]
    %v247 = vld [vmem:[#allocation3 + $0x3b0] sm:$0xff]
    %v248 = vld [vmem:[#allocation3 + $0x3b8] sm:$0xff]
    %v249 = vld [vmem:[#allocation3 + $0x3c0] sm:$0xff]
    %v250 = vld [vmem:[#allocation3 + $0x3c8] sm:$0xff]
    %v251 = vld [vmem:[#allocation3 + $0x3d0] sm:$0xff]
    %v252 = vld [vmem:[#allocation3 + $0x3d8] sm:$0xff]
    %v253 = vld [vmem:[#allocation3 + $0x3e0] sm:$0xff]
    %v254 = vld [vmem:[#allocation3 + $0x3e8] sm:$0xff]
    %v255 = vld [vmem:[#allocation3 + $0x3f0] sm:$0xff]
    %v256 = vld [vmem:[#allocation3 + $0x3f8] sm:$0xff]
    %v257 = vld [vmem:[#allocation3 + $0x400] sm:$0xff]
    %v258 = vld [vmem:[#allocation3 + $0x408] sm:$0xff]
    %v259 = vld [vmem:[#allocation3 + $0x410] sm:$0xff]
    %v260 = vld [vmem:[#allocation3 + $0x418] sm:$0xff]
    %v261 = vld [vmem:[#allocation3 + $0x420] sm:$0xff]
    %v262 = vld [vmem:[#allocation3 + $0x428] sm:$0xff]
    %v263 = vld [vmem:[#allocation3 + $0x430] sm:$0xff]
    %v264 = vld [vmem:[#allocation3 + $0x438] sm:$0xff]
    %v265 = vld [vmem:[#allocation3 + $0x440] sm:$0xff]
    %v266 = vld [vmem:[#allocation3 + $0x448] sm:$0xff]
    %v267 = vld [vmem:[#allocation3 + $0x450] sm:$0xff]
    %v268 = vld [vmem:[#allocation3 + $0x458] sm:$0xff]
    %v269 = vld [vmem:[#allocation3 + $0x460] sm:$0xff]
    %v270 = vld [vmem:[#allocation3 + $0x468] sm:$0xff]
    %v271 = vld [vmem:[#allocation3 + $0x470] sm:$0xff]
    %v272 = vld [vmem:[#allocation3 + $0x478] sm:$0xff]
    %v273 = vld [vmem:[#allocation3 + $0x480] sm:$0xff]
    %v274 = vld [vmem:[#allocation3 + $0x488] sm:$0xff]
    %v275 = vld [vmem:[#allocation3 + $0x490] sm:$0xff]
    %v276 = vld [vmem:[#allocation3 + $0x498] sm:$0xff]
    %v277 = vld [vmem:[#allocation3 + $0x4a0] sm:$0xff]
    %v278 = vld [vmem:[#allocation3 + $0x4a8] sm:$0xff]
    %v279 = vld [vmem:[#allocation3 + $0x4b0] sm:$0xff]
    %v280 = vld [vmem:[#allocation3 + $0x4b8] sm:$0xff]
    %v281 = vld [vmem:[#allocation3 + $0x4c0] sm:$0xff]
    %v282 = vld [vmem:[#allocation3 + $0x4c8] sm:$0xff]
    %v283 = vld [vmem:[#allocation3 + $0x4d0] sm:$0xff]
    %v284 = vld [vmem:[#allocation3 + $0x4d8] sm:$0xff]
    %v285 = vld [vmem:[#allocation3 + $0x4e0] sm:$0xff]
    %v286 = vld [vmem:[#allocation3 + $0x4e8] sm:$0xff]
    %v287 = vld [vmem:[#allocation3 + $0x4f0] sm:$0xff]
    %v288 = vld [vmem:[#allocation3 + $0x4f8] sm:$0xff]
    %v289 = vld [vmem:[#allocation3 + $0x500] sm:$0xff]
    %v290 = vld [vmem:[#allocation3 + $0x508] sm:$0xff]
    %v291 = vld [vmem:[#allocation3 + $0x510] sm:$0xff]
    %v292 = vld [vmem:[#allocation3 + $0x518] sm:$0xff]
    %v293 = vld [vmem:[#allocation3 + $0x520] sm:$0xff]
    %v294 = vld [vmem:[#allocation3 + $0x528] sm:$0xff]
    %v295 = vld [vmem:[#allocation3 + $0x530] sm:$0xff]
    %v296 = vld [vmem:[#allocation3 + $0x538] sm:$0xff]
    %v297 = vld [vmem:[#allocation3 + $0x540] sm:$0xff]
    %v298 = vld [vmem:[#allocation3 + $0x548] sm:$0xff]
    %v299 = vld [vmem:[#allocation3 + $0x550] sm:$0xff]
    %v300 = vld [vmem:[#allocation3 + $0x558] sm:$0xff]
    %v301 = vld [vmem:[#allocation3 + $0x560] sm:$0xff]
    %v302 = vld [vmem:[#allocation3 + $0x568] sm:$0xff]
    %v303 = vld [vmem:[#allocation3 + $0x570] sm:$0xff]
    %v304 = vld [vmem:[#allocation3 + $0x578] sm:$0xff]
    %v305 = vld [vmem:[#allocation3 + $0x580] sm:$0xff]
    %v306 = vld [vmem:[#allocation3 + $0x588] sm:$0xff]
    %v307 = vld [vmem:[#allocation3 + $0x590] sm:$0xff]
    %v308 = vld [vmem:[#allocation3 + $0x598] sm:$0xff]
    %v309 = vld [vmem:[#allocation3 + $0x5a0] sm:$0xff]
    %v310 = vld [vmem:[#allocation3 + $0x5a8] sm:$0xff]
    %v311 = vld [vmem:[#allocation3 + $0x5b0] sm:$0xff]
    %v312 = vld [vmem:[#allocation3 + $0x5b8] sm:$0xff]
    %v313 = vld [vmem:[#allocation3 + $0x5c0] sm:$0xff]
    %v314 = vld [vmem:[#allocation3 + $0x5c8] sm:$0xff]
    %v315 = vld [vmem:[#allocation3 + $0x5d0] sm:$0xff]
    %v316 = vld [vmem:[#allocation3 + $0x5d8] sm:$0xff]
    %v317 = vld [vmem:[#allocation3 + $0x5e0] sm:$0xff]
    %v318 = vld [vmem:[#allocation3 + $0x5e8] sm:$0xff]
    %v319 = vld [vmem:[#allocation3 + $0x5f0] sm:$0xff]
    %v320 = vld [vmem:[#allocation3 + $0x5f8] sm:$0xff]
    %v321 = vld [vmem:[#allocation3 + $0x600] sm:$0xff]
    %v322 = vld [vmem:[#allocation3 + $0x608] sm:$0xff]
    %v323 = vld [vmem:[#allocation3 + $0x610] sm:$0xff]
    %v324 = vld [vmem:[#allocation3 + $0x618] sm:$0xff]
    %v325 = vld [vmem:[#allocation3 + $0x620] sm:$0xff]
    %v326 = vld [vmem:[#allocation3 + $0x628] sm:$0xff]
    %v327 = vld [vmem:[#allocation3 + $0x630] sm:$0xff]
    %v328 = vld [vmem:[#allocation3 + $0x638] sm:$0xff]
    %v329 = vld [vmem:[#allocation3 + $0x640] sm:$0xff]
    %v330 = vld [vmem:[#allocation3 + $0x648] sm:$0xff]
    %v331 = vld [vmem:[#allocation3 + $0x650] sm:$0xff]
    %v332 = vld [vmem:[#allocation3 + $0x658] sm:$0xff]
    %v333 = vld [vmem:[#allocation3 + $0x660] sm:$0xff]
    %v334 = vld [vmem:[#allocation3 + $0x668] sm:$0xff]
    %v335 = vld [vmem:[#allocation3 + $0x670] sm:$0xff]
    %v336 = vld [vmem:[#allocation3 + $0x678] sm:$0xff]
    %v337 = vld [vmem:[#allocation3 + $0x680] sm:$0xff]
    %v338 = vld [vmem:[#allocation3 + $0x688] sm:$0xff]
    %v339 = vld [vmem:[#allocation3 + $0x690] sm:$0xff]
    %v340 = vld [vmem:[#allocation3 + $0x698] sm:$0xff]
    %v341 = vld [vmem:[#allocation3 + $0x6a0] sm:$0xff]
    %v342 = vld [vmem:[#allocation3 + $0x6a8] sm:$0xff]
    %v343 = vld [vmem:[#allocation3 + $0x6b0] sm:$0xff]
    %v344 = vld [vmem:[#allocation3 + $0x6b8] sm:$0xff]
    %v345 = vld [vmem:[#allocation3 + $0x6c0] sm:$0xff]
    %v346 = vld [vmem:[#allocation3 + $0x6c8] sm:$0xff]
    %v347 = vld [vmem:[#allocation3 + $0x6d0] sm:$0xff]
    %v348 = vld [vmem:[#allocation3 + $0x6d8] sm:$0xff]
    %v349 = vld [vmem:[#allocation3 + $0x6e0] sm:$0xff]
    %v350 = vld [vmem:[#allocation3 + $0x6e8] sm:$0xff]
    %v351 = vld [vmem:[#allocation3 + $0x6f0] sm:$0xff]
    %v352 = vld [vmem:[#allocation3 + $0x6f8] sm:$0xff]
    %v353 = vld [vmem:[#allocation3 + $0x700] sm:$0xff]
    %v354 = vld [vmem:[#allocation3 + $0x708] sm:$0xff]
    %v355 = vld [vmem:[#allocation3 + $0x710] sm:$0xff]
    %v356 = vld [vmem:[#allocation3 + $0x718] sm:$0xff]
    %v357 = vld [vmem:[#allocation3 + $0x720] sm:$0xff]
    %v358 = vld [vmem:[#allocation3 + $0x728] sm:$0xff]
    %v359 = vld [vmem:[#allocation3 + $0x730] sm:$0xff]
    %v360 = vld [vmem:[#allocation3 + $0x738] sm:$0xff]
    %v361 = vld [vmem:[#allocation3 + $0x740] sm:$0xff]
    %v362 = vld [vmem:[#allocation3 + $0x748] sm:$0xff]
    %v363 = vld [vmem:[#allocation3 + $0x750] sm:$0xff]
    %v364 = vld [vmem:[#allocation3 + $0x758] sm:$0xff]
    %v365 = vld [vmem:[#allocation3 + $0x760] sm:$0xff]
    %v366 = vld [vmem:[#allocation3 + $0x768] sm:$0xff]
    %v367 = vld [vmem:[#allocation3 + $0x770] sm:$0xff]
    %v368 = vld [vmem:[#allocation3 + $0x778] sm:$0xff]
    %v369 = vld [vmem:[#allocation3 + $0x780] sm:$0xff]
    %v370 = vld [vmem:[#allocation3 + $0x788] sm:$0xff]
    %v371 = vld [vmem:[#allocation3 + $0x790] sm:$0xff]
    %v372 = vld [vmem:[#allocation3 + $0x798] sm:$0xff]
    %v373 = vld [vmem:[#allocation3 + $0x7a0] sm:$0xff]
    %v374 = vld [vmem:[#allocation3 + $0x7a8] sm:$0xff]
    %v375 = vld [vmem:[#allocation3 + $0x7b0] sm:$0xff]
    %v376 = vld [vmem:[#allocation3 + $0x7b8] sm:$0xff]
    %v377 = vld [vmem:[#allocation3 + $0x7c0] sm:$0xff]
    %v378 = vld [vmem:[#allocation3 + $0x7c8] sm:$0xff]
    %v379 = vld [vmem:[#allocation3 + $0x7d0] sm:$0xff]
    %v380 = vld [vmem:[#allocation3 + $0x7d8] sm:$0xff]
    %v381 = vld [vmem:[#allocation3 + $0x7e0] sm:$0xff]
    %v382 = vld [vmem:[#allocation3 + $0x7e8] sm:$0xff]
    %v383 = vld [vmem:[#allocation3 + $0x7f0] sm:$0xff]
    %v384 = vld [vmem:[#allocation3 + $0x7f8] sm:$0xff]
    %v385 = vld [vmem:[#allocation3 + $0x800] sm:$0xff]
    %v386 = vld [vmem:[#allocation3 + $0x808] sm:$0xff]
    %v387 = vld [vmem:[#allocation3 + $0x810] sm:$0xff]
    %v388 = vld [vmem:[#allocation3 + $0x818] sm:$0xff]
    %v389 = vld [vmem:[#allocation3 + $0x820] sm:$0xff]
    %v390 = vld [vmem:[#allocation3 + $0x828] sm:$0xff]
    %v391 = vld [vmem:[#allocation3 + $0x830] sm:$0xff]
    %v392 = vld [vmem:[#allocation3 + $0x838] sm:$0xff]
    %v393 = vld [vmem:[#allocation3 + $0x840] sm:$0xff]
    %v394 = vld [vmem:[#allocation3 + $0x848] sm:$0xff]
    %v395 = vld [vmem:[#allocation3 + $0x850] sm:$0xff]
    %v396 = vld [vmem:[#allocation3 + $0x858] sm:$0xff]
    %v397 = vld [vmem:[#allocation3 + $0x860] sm:$0xff]
    %v398 = vld [vmem:[#allocation3 + $0x868] sm:$0xff]
    %v399 = vld [vmem:[#allocation3 + $0x870] sm:$0xff]
    %v400 = vld [vmem:[#allocation3 + $0x878] sm:$0xff]
    %v401 = vld [vmem:[#allocation3 + $0x880] sm:$0xff]
    %v402 = vld [vmem:[#allocation3 + $0x888] sm:$0xff]
    %v403 = vld [vmem:[#allocation3 + $0x890] sm:$0xff]
    %v404 = vld [vmem:[#allocation3 + $0x898] sm:$0xff]
    %v405 = vld [vmem:[#allocation3 + $0x8a0] sm:$0xff]
    %v406 = vld [vmem:[#allocation3 + $0x8a8] sm:$0xff]
    %v407 = vld [vmem:[#allocation3 + $0x8b0] sm:$0xff]
    %v408 = vld [vmem:[#allocation3 + $0x8b8] sm:$0xff]
    %v409 = vld [vmem:[#allocation3 + $0x8c0] sm:$0xff]
    %v410 = vld [vmem:[#allocation3 + $0x8c8] sm:$0xff]
    %v411 = vld [vmem:[#allocation3 + $0x8d0] sm:$0xff]
    %v412 = vld [vmem:[#allocation3 + $0x8d8] sm:$0xff]
    %v413 = vld [vmem:[#allocation3 + $0x8e0] sm:$0xff]
    %v414 = vld [vmem:[#allocation3 + $0x8e8] sm:$0xff]
    %v415 = vld [vmem:[#allocation3 + $0x8f0] sm:$0xff]
    %v416 = vld [vmem:[#allocation3 + $0x8f8] sm:$0xff]
    %v417 = vld [vmem:[#allocation3 + $0x900] sm:$0xff]
    %v418 = vld [vmem:[#allocation3 + $0x908] sm:$0xff]
    %v419 = vld [vmem:[#allocation3 + $0x910] sm:$0xff]
    %v420 = vld [vmem:[#allocation3 + $0x918] sm:$0xff]
    %v421 = vld [vmem:[#allocation3 + $0x920] sm:$0xff]
    %v422 = vld [vmem:[#allocation3 + $0x928] sm:$0xff]
    %v423 = vld [vmem:[#allocation3 + $0x930] sm:$0xff]
    %v424 = vld [vmem:[#allocation3 + $0x938] sm:$0xff]
    %v425 = vld [vmem:[#allocation3 + $0x940] sm:$0xff]
    %v426 = vld [vmem:[#allocation3 + $0x948] sm:$0xff]
    %v427 = vld [vmem:[#allocation3 + $0x950] sm:$0xff]
    %v428 = vld [vmem:[#allocation3 + $0x958] sm:$0xff]
    %v429 = vld [vmem:[#allocation3 + $0x960] sm:$0xff]
    %v430 = vld [vmem:[#allocation3 + $0x968] sm:$0xff]
    %v431 = vld [vmem:[#allocation3 + $0x970] sm:$0xff]
    %v432 = vld [vmem:[#allocation3 + $0x978] sm:$0xff]
    %v433 = vld [vmem:[#allocation3 + $0x980] sm:$0xff]
    %v434 = vld [vmem:[#allocation3 + $0x988] sm:$0xff]
    %v435 = vld [vmem:[#allocation3 + $0x990] sm:$0xff]
    %v436 = vld [vmem:[#allocation3 + $0x998] sm:$0xff]
    %v437 = vld [vmem:[#allocation3 + $0x9a0] sm:$0xff]
    %v438 = vld [vmem:[#allocation3 + $0x9a8] sm:$0xff]
    %v439 = vld [vmem:[#allocation3 + $0x9b0] sm:$0xff]
    %v440 = vld [vmem:[#allocation3 + $0x9b8] sm:$0xff]
    %v441 = vld [vmem:[#allocation3 + $0x9c0] sm:$0xff]
    %v442 = vld [vmem:[#allocation3 + $0x9c8] sm:$0xff]
    %v443 = vld [vmem:[#allocation3 + $0x9d0] sm:$0xff]
    %v444 = vld [vmem:[#allocation3 + $0x9d8] sm:$0xff]
    %v445 = vld [vmem:[#allocation3 + $0x9e0] sm:$0xff]
    %v446 = vld [vmem:[#allocation3 + $0x9e8] sm:$0xff]
    %v447 = vld [vmem:[#allocation3 + $0x9f0] sm:$0xff]
    %v448 = vld [vmem:[#allocation3 + $0x9f8] sm:$0xff]
    %v449 = vld [vmem:[#allocation3 + $0xa00] sm:$0xff]
    %v450 = vld [vmem:[#allocation3 + $0xa08] sm:$0xff]
    %v451 = vld [vmem:[#allocation3 + $0xa10] sm:$0xff]
    %v452 = vld [vmem:[#allocation3 + $0xa18] sm:$0xff]
    %v453 = vld [vmem:[#allocation3 + $0xa20] sm:$0xff]
    %v454 = vld [vmem:[#allocation3 + $0xa28] sm:$0xff]
    %v455 = vld [vmem:[#allocation3 + $0xa30] sm:$0xff]
    %v456 = vld [vmem:[#allocation3 + $0xa38] sm:$0xff]
    %v457 = vld [vmem:[#allocation3 + $0xa40] sm:$0xff]
    %v458 = vld [vmem:[#allocation3 + $0xa48] sm:$0xff]
    %v459 = vld [vmem:[#allocation3 + $0xa50] sm:$0xff]
    %v460 = vld [vmem:[#allocation3 + $0xa58] sm:$0xff]
    %v461 = vld [vmem:[#allocation3 + $0xa60] sm:$0xff]
    %v462 = vld [vmem:[#allocation3 + $0xa68] sm:$0xff]
    %v463 = vld [vmem:[#allocation3 + $0xa70] sm:$0xff]
    %v464 = vld [vmem:[#allocation3 + $0xa78] sm:$0xff]
    %v465 = vld [vmem:[#allocation3 + $0xa80] sm:$0xff]
    %v466 = vld [vmem:[#allocation3 + $0xa88] sm:$0xff]
    %v467 = vld [vmem:[#allocation3 + $0xa90] sm:$0xff]
    %v468 = vld [vmem:[#allocation3 + $0xa98] sm:$0xff]
    %v469 = vld [vmem:[#allocation3 + $0xaa0] sm:$0xff]
    %v470 = vld [vmem:[#allocation3 + $0xaa8] sm:$0xff]
    %v471 = vld [vmem:[#allocation3 + $0xab0] sm:$0xff]
    %v472 = vld [vmem:[#allocation3 + $0xab8] sm:$0xff]
    %v473 = vld [vmem:[#allocation3 + $0xac0] sm:$0xff]
    %v474 = vld [vmem:[#allocation3 + $0xac8] sm:$0xff]
    %v475 = vld [vmem:[#allocation3 + $0xad0] sm:$0xff]
    %v476 = vld [vmem:[#allocation3 + $0xad8] sm:$0xff]
    %v477 = vld [vmem:[#allocation3 + $0xae0] sm:$0xff]
    %v478 = vld [vmem:[#allocation3 + $0xae8] sm:$0xff]
    %v479 = vld [vmem:[#allocation3 + $0xaf0] sm:$0xff]
    %v480 = vld [vmem:[#allocation3 + $0xaf8] sm:$0xff]
    %v481 = vld [vmem:[#allocation3 + $0xb00] sm:$0xff]
    %v482 = vld [vmem:[#allocation3 + $0xb08] sm:$0xff]
    %v483 = vld [vmem:[#allocation3 + $0xb10] sm:$0xff]
    %v484 = vld [vmem:[#allocation3 + $0xb18] sm:$0xff]
    %v485 = vld [vmem:[#allocation3 + $0xb20] sm:$0xff]
    %v486 = vld [vmem:[#allocation3 + $0xb28] sm:$0xff]
    %v487 = vld [vmem:[#allocation3 + $0xb30] sm:$0xff]
    %v488 = vld [vmem:[#allocation3 + $0xb38] sm:$0xff]
    %v489 = vld [vmem:[#allocation3 + $0xb40] sm:$0xff]
    %v490 = vld [vmem:[#allocation3 + $0xb48] sm:$0xff]
    %v491 = vld [vmem:[#allocation3 + $0xb50] sm:$0xff]
    %v492 = vld [vmem:[#allocation3 + $0xb58] sm:$0xff]
    %v493 = vld [vmem:[#allocation3 + $0xb60] sm:$0xff]
    %v494 = vld [vmem:[#allocation3 + $0xb68] sm:$0xff]
    %v495 = vld [vmem:[#allocation3 + $0xb70] sm:$0xff]
    %v496 = vld [vmem:[#allocation3 + $0xb78] sm:$0xff]
    %v497 = vld [vmem:[#allocation3 + $0xb80] sm:$0xff]
    %v498 = vld [vmem:[#allocation3 + $0xb88] sm:$0xff]
    %v499 = vld [vmem:[#allocation3 + $0xb90] sm:$0xff]
    %v500 = vld [vmem:[#allocation3 + $0xb98] sm:$0xff]
    %v501 = vld [vmem:[#allocation3 + $0xba0] sm:$0xff]
    %v502 = vld [vmem:[#allocation3 + $0xba8] sm:$0xff]
    %v503 = vld [vmem:[#allocation3 + $0xbb0] sm:$0xff]
    %v504 = vld [vmem:[#allocation3 + $0xbb8] sm:$0xff]
    %v505 = vld [vmem:[#allocation3 + $0xbc0] sm:$0xff]
    %v506 = vld [vmem:[#allocation3 + $0xbc8] sm:$0xff]
    %v507 = vld [vmem:[#allocation3 + $0xbd0] sm:$0xff]
    %v508 = vld [vmem:[#allocation3 + $0xbd8] sm:$0xff]
    %v509 = vld [vmem:[#allocation3 + $0xbe0] sm:$0xff]
    %v510 = vld [vmem:[#allocation3 + $0xbe8] sm:$0xff]
    %v511 = vld [vmem:[#allocation3 + $0xbf0] sm:$0xff]
    %v512 = vld [vmem:[#allocation3 + $0xbf8] sm:$0xff]
    %v513 = vld [vmem:[#allocation3 + $0xc00] sm:$0xff]
    %v514 = vld [vmem:[#allocation3 + $0xc08] sm:$0xff]
    %v515 = vld [vmem:[#allocation3 + $0xc10] sm:$0xff]
    %v516 = vld [vmem:[#allocation3 + $0xc18] sm:$0xff]
    %v517 = vld [vmem:[#allocation3 + $0xc20] sm:$0xff]
    %v518 = vld [vmem:[#allocation3 + $0xc28] sm:$0xff]
    %v519 = vld [vmem:[#allocation3 + $0xc30] sm:$0xff]
    %v520 = vld [vmem:[#allocation3 + $0xc38] sm:$0xff]
    %v521 = vld [vmem:[#allocation3 + $0xc40] sm:$0xff]
    %v522 = vld [vmem:[#allocation3 + $0xc48] sm:$0xff]
    %v523 = vld [vmem:[#allocation3 + $0xc50] sm:$0xff]
    %v524 = vld [vmem:[#allocation3 + $0xc58] sm:$0xff]
    %v525 = vld [vmem:[#allocation3 + $0xc60] sm:$0xff]
    %v526 = vld [vmem:[#allocation3 + $0xc68] sm:$0xff]
    %v527 = vld [vmem:[#allocation3 + $0xc70] sm:$0xff]
    %v528 = vld [vmem:[#allocation3 + $0xc78] sm:$0xff]
    %v529 = vld [vmem:[#allocation3 + $0xc80] sm:$0xff]
    %v530 = vld [vmem:[#allocation3 + $0xc88] sm:$0xff]
    %v531 = vld [vmem:[#allocation3 + $0xc90] sm:$0xff]
    %v532 = vld [vmem:[#allocation3 + $0xc98] sm:$0xff]
    %v533 = vld [vmem:[#allocation3 + $0xca0] sm:$0xff]
    %v534 = vld [vmem:[#allocation3 + $0xca8] sm:$0xff]
    %v535 = vld [vmem:[#allocation3 + $0xcb0] sm:$0xff]
    %v536 = vld [vmem:[#allocation3 + $0xcb8] sm:$0xff]
    %v537 = vld [vmem:[#allocation3 + $0xcc0] sm:$0xff]
    %v538 = vld [vmem:[#allocation3 + $0xcc8] sm:$0xff]
    %v539 = vld [vmem:[#allocation3 + $0xcd0] sm:$0xff]
    %v540 = vld [vmem:[#allocation3 + $0xcd8] sm:$0xff]
    %v541 = vld [vmem:[#allocation3 + $0xce0] sm:$0xff]
    %v542 = vld [vmem:[#allocation3 + $0xce8] sm:$0xff]
    %v543 = vld [vmem:[#allocation3 + $0xcf0] sm:$0xff]
    %v544 = vld [vmem:[#allocation3 + $0xcf8] sm:$0xff]
    %v545 = vld [vmem:[#allocation3 + $0xd00] sm:$0xff]
    %v546 = vld [vmem:[#allocation3 + $0xd08] sm:$0xff]
    %v547 = vld [vmem:[#allocation3 + $0xd10] sm:$0xff]
    %v548 = vld [vmem:[#allocation3 + $0xd18] sm:$0xff]
    %v549 = vld [vmem:[#allocation3 + $0xd20] sm:$0xff]
    %v550 = vld [vmem:[#allocation3 + $0xd28] sm:$0xff]
    %v551 = vld [vmem:[#allocation3 + $0xd30] sm:$0xff]
    %v552 = vld [vmem:[#allocation3 + $0xd38] sm:$0xff]
    %v553 = vld [vmem:[#allocation3 + $0xd40] sm:$0xff]
    %v554 = vld [vmem:[#allocation3 + $0xd48] sm:$0xff]
    %v555 = vld [vmem:[#allocation3 + $0xd50] sm:$0xff]
    %v556 = vld [vmem:[#allocation3 + $0xd58] sm:$0xff]
    %v557 = vld [vmem:[#allocation3 + $0xd60] sm:$0xff]
    %v558 = vld [vmem:[#allocation3 + $0xd68] sm:$0xff]
    %v559 = vld [vmem:[#allocation3 + $0xd70] sm:$0xff]
    %v560 = vld [vmem:[#allocation3 + $0xd78] sm:$0xff]
    %v561 = vld [vmem:[#allocation3 + $0xd80] sm:$0xff]
    %v562 = vld [vmem:[#allocation3 + $0xd88] sm:$0xff]
    %v563 = vld [vmem:[#allocation3 + $0xd90] sm:$0xff]
    %v564 = vld [vmem:[#allocation3 + $0xd98] sm:$0xff]
    %v565 = vld [vmem:[#allocation3 + $0xda0] sm:$0xff]
    %v566 = vld [vmem:[#allocation3 + $0xda8] sm:$0xff]
    %v567 = vld [vmem:[#allocation3 + $0xdb0] sm:$0xff]
    %v568 = vld [vmem:[#allocation3 + $0xdb8] sm:$0xff]
    %v569 = vld [vmem:[#allocation3 + $0xdc0] sm:$0xff]
    %v570 = vld [vmem:[#allocation3 + $0xdc8] sm:$0xff]
    %v571 = vld [vmem:[#allocation3 + $0xdd0] sm:$0xff]
    %v572 = vld [vmem:[#allocation3 + $0xdd8] sm:$0xff]
    %v573 = vld [vmem:[#allocation3 + $0xde0] sm:$0xff]
    %v574 = vld [vmem:[#allocation3 + $0xde8] sm:$0xff]
    %v575 = vld [vmem:[#allocation3 + $0xdf0] sm:$0xff]
    %v576 = vld [vmem:[#allocation3 + $0xdf8] sm:$0xff]
    %v577 = vld [vmem:[#allocation3 + $0xe00] sm:$0xff]
    %v578 = vld [vmem:[#allocation3 + $0xe08] sm:$0xff]
    %v579 = vld [vmem:[#allocation3 + $0xe10] sm:$0xff]
    %v580 = vld [vmem:[#allocation3 + $0xe18] sm:$0xff]
    %v581 = vld [vmem:[#allocation3 + $0xe20] sm:$0xff]
    %v582 = vld [vmem:[#allocation3 + $0xe28] sm:$0xff]
    %v583 = vld [vmem:[#allocation3 + $0xe30] sm:$0xff]
    %v584 = vld [vmem:[#allocation3 + $0xe38] sm:$0xff]
    %v585 = vld [vmem:[#allocation3 + $0xe40] sm:$0xff]
    %v586 = vld [vmem:[#allocation3 + $0xe48] sm:$0xff]
    %v587 = vld [vmem:[#allocation3 + $0xe50] sm:$0xff]
    %v588 = vld [vmem:[#allocation3 + $0xe58] sm:$0xff]
    %v589 = vld [vmem:[#allocation3 + $0xe60] sm:$0xff]
    %v590 = vld [vmem:[#allocation3 + $0xe68] sm:$0xff]
    %v591 = vld [vmem:[#allocation3 + $0xe70] sm:$0xff]
    %v592 = vld [vmem:[#allocation3 + $0xe78] sm:$0xff]
    %v593 = vld [vmem:[#allocation3 + $0xe80] sm:$0xff]
    %v594 = vld [vmem:[#allocation3 + $0xe88] sm:$0xff]
    %v595 = vld [vmem:[#allocation3 + $0xe90] sm:$0xff]
    %v596 = vld [vmem:[#allocation3 + $0xe98] sm:$0xff]
    %v597 = vld [vmem:[#allocation3 + $0xea0] sm:$0xff]
    %v598 = vld [vmem:[#allocation3 + $0xea8] sm:$0xff]
    %v599 = vld [vmem:[#allocation3 + $0xeb0] sm:$0xff]
    %v600 = vld [vmem:[#allocation3 + $0xeb8] sm:$0xff]
    %v601 = vld [vmem:[#allocation3 + $0xec0] sm:$0xff]
    %v602 = vld [vmem:[#allocation3 + $0xec8] sm:$0xff]
    %v603 = vld [vmem:[#allocation3 + $0xed0] sm:$0xff]
    %v604 = vld [vmem:[#allocation3 + $0xed8] sm:$0xff]
    %v605 = vld [vmem:[#allocation3 + $0xee0] sm:$0xff]
    %v606 = vld [vmem:[#allocation3 + $0xee8] sm:$0xff]
    %v607 = vld [vmem:[#allocation3 + $0xef0] sm:$0xff]
    %v608 = vld [vmem:[#allocation3 + $0xef8] sm:$0xff]
    %v609 = vld [vmem:[#allocation3 + $0xf00] sm:$0xff]
    %v610 = vld [vmem:[#allocation3 + $0xf08] sm:$0xff]
    %v611 = vld [vmem:[#allocation3 + $0xf10] sm:$0xff]
    %v612 = vld [vmem:[#allocation3 + $0xf18] sm:$0xff]
    %v613 = vld [vmem:[#allocation3 + $0xf20] sm:$0xff]
    %v614 = vld [vmem:[#allocation3 + $0xf28] sm:$0xff]
    %v615 = vld [vmem:[#allocation3 + $0xf30] sm:$0xff]
    %v616 = vld [vmem:[#allocation3 + $0xf38] sm:$0xff]
    %v617 = vld [vmem:[#allocation3 + $0xf40] sm:$0xff]
    %v618 = vld [vmem:[#allocation3 + $0xf48] sm:$0xff]
    %v619 = vld [vmem:[#allocation3 + $0xf50] sm:$0xff]
    %v620 = vld [vmem:[#allocation3 + $0xf58] sm:$0xff]
    %v621 = vld [vmem:[#allocation3 + $0xf60] sm:$0xff]
    %v622 = vld [vmem:[#allocation3 + $0xf68] sm:$0xff]
    %v623 = vld [vmem:[#allocation3 + $0xf70] sm:$0xff]
    %v624 = vld [vmem:[#allocation3 + $0xf78] sm:$0xff]
    %v625 = vld [vmem:[#allocation3 + $0xf80] sm:$0xff]
    %v626 = vld [vmem:[#allocation3 + $0xf88] sm:$0xff]
    %v627 = vld [vmem:[#allocation3 + $0xf90] sm:$0xff]
    %v628 = vld [vmem:[#allocation3 + $0xf98] sm:$0xff]
    %v629 = vld [vmem:[#allocation3 + $0xfa0] sm:$0xff]
    %v630 = vld [vmem:[#allocation3 + $0xfa8] sm:$0xff]
    %v631 = vld [vmem:[#allocation3 + $0xfb0] sm:$0xff]
    %v632 = vld [vmem:[#allocation3 + $0xfb8] sm:$0xff]
    %v633 = vld [vmem:[#allocation3 + $0xfc0] sm:$0xff]
    %v634 = vld [vmem:[#allocation3 + $0xfc8] sm:$0xff]
    %v635 = vld [vmem:[#allocation3 + $0xfd0] sm:$0xff]
    %v636 = vld [vmem:[#allocation3 + $0xfd8] sm:$0xff]
    %v637 = vld [vmem:[#allocation3 + $0xfe0] sm:$0xff]
    %v638 = vld [vmem:[#allocation3 + $0xfe8] sm:$0xff]
    %v639 = vld [vmem:[#allocation3 + $0xff0] sm:$0xff]
    %v640 = vld [vmem:[#allocation3 + $0xff8] sm:$0xff]
    %v641 = vld [vmem:[#allocation3 + $0x1000] sm:$0xff]
    %v642 = vld [vmem:[#allocation3 + $0x1008] sm:$0xff]
    %v643 = vld [vmem:[#allocation3 + $0x1010] sm:$0xff]
    %v644 = vld [vmem:[#allocation3 + $0x1018] sm:$0xff]
    %v645 = vld [vmem:[#allocation3 + $0x1020] sm:$0xff]
    %v646 = vld [vmem:[#allocation3 + $0x1028] sm:$0xff]
    %v647 = vld [vmem:[#allocation3 + $0x1030] sm:$0xff]
    %v648 = vld [vmem:[#allocation3 + $0x1038] sm:$0xff]
    %v649 = vld [vmem:[#allocation3 + $0x1040] sm:$0xff]
    %v650 = vld [vmem:[#allocation3 + $0x1048] sm:$0xff]
    %v651 = vld [vmem:[#allocation3 + $0x1050] sm:$0xff]
    %v652 = vld [vmem:[#allocation3 + $0x1058] sm:$0xff]
    %v653 = vld [vmem:[#allocation3 + $0x1060] sm:$0xff]
    %v654 = vld [vmem:[#allocation3 + $0x1068] sm:$0xff]
    %v655 = vld [vmem:[#allocation3 + $0x1070] sm:$0xff]
    %v656 = vld [vmem:[#allocation3 + $0x1078] sm:$0xff]
    %v657 = vld [vmem:[#allocation3 + $0x1080] sm:$0xff]
    %v658 = vld [vmem:[#allocation3 + $0x1088] sm:$0xff]
    %v659 = vld [vmem:[#allocation3 + $0x1090] sm:$0xff]
    %v660 = vld [vmem:[#allocation3 + $0x1098] sm:$0xff]
    %v661 = vld [vmem:[#allocation3 + $0x10a0] sm:$0xff]
    %v662 = vld [vmem:[#allocation3 + $0x10a8] sm:$0xff]
    %v663 = vld [vmem:[#allocation3 + $0x10b0] sm:$0xff]
    %v664 = vld [vmem:[#allocation3 + $0x10b8] sm:$0xff]
    %v665 = vld [vmem:[#allocation3 + $0x10c0] sm:$0xff]
    %v666 = vld [vmem:[#allocation3 + $0x10c8] sm:$0xff]
    %v667 = vld [vmem:[#allocation3 + $0x10d0] sm:$0xff]
    %v668 = vld [vmem:[#allocation3 + $0x10d8] sm:$0xff]
    %v669 = vld [vmem:[#allocation3 + $0x10e0] sm:$0xff]
    %v670 = vld [vmem:[#allocation3 + $0x10e8] sm:$0xff]
    %v671 = vld [vmem:[#allocation3 + $0x10f0] sm:$0xff]
    %v672 = vld [vmem:[#allocation3 + $0x10f8] sm:$0xff]
    %v673 = vld [vmem:[#allocation3 + $0x1100] sm:$0xff]
    %v674 = vld [vmem:[#allocation3 + $0x1108] sm:$0xff]
    %v675 = vld [vmem:[#allocation3 + $0x1110] sm:$0xff]
    %v676 = vld [vmem:[#allocation3 + $0x1118] sm:$0xff]
    %v677 = vld [vmem:[#allocation3 + $0x1120] sm:$0xff]
    %v678 = vld [vmem:[#allocation3 + $0x1128] sm:$0xff]
    %v679 = vld [vmem:[#allocation3 + $0x1130] sm:$0xff]
    %v680 = vld [vmem:[#allocation3 + $0x1138] sm:$0xff]
    %v681 = vld [vmem:[#allocation3 + $0x1140] sm:$0xff]
    %v682 = vld [vmem:[#allocation3 + $0x1148] sm:$0xff]
    %v683 = vld [vmem:[#allocation3 + $0x1150] sm:$0xff]
    %v684 = vld [vmem:[#allocation3 + $0x1158] sm:$0xff]
    %v685 = vld [vmem:[#allocation3 + $0x1160] sm:$0xff]
    %v686 = vld [vmem:[#allocation3 + $0x1168] sm:$0xff]
    %v687 = vld [vmem:[#allocation3 + $0x1170] sm:$0xff]
    %v688 = vld [vmem:[#allocation3 + $0x1178] sm:$0xff]
    %v689 = vld [vmem:[#allocation3 + $0x1180] sm:$0xff]
    %v690 = vld [vmem:[#allocation3 + $0x1188] sm:$0xff]
    %v691 = vld [vmem:[#allocation3 + $0x1190] sm:$0xff]
    %v692 = vld [vmem:[#allocation3 + $0x1198] sm:$0xff]
    %v693 = vld [vmem:[#allocation3 + $0x11a0] sm:$0xff]
    %v694 = vld [vmem:[#allocation3 + $0x11a8] sm:$0xff]
    %v695 = vld [vmem:[#allocation3 + $0x11b0] sm:$0xff]
    %v696 = vld [vmem:[#allocation3 + $0x11b8] sm:$0xff]
    %v697 = vld [vmem:[#allocation3 + $0x11c0] sm:$0xff]
    %v698 = vld [vmem:[#allocation3 + $0x11c8] sm:$0xff]
    %v699 = vld [vmem:[#allocation3 + $0x11d0] sm:$0xff]
    %v700 = vld [vmem:[#allocation3 + $0x11d8] sm:$0xff]
    %v701 = vld [vmem:[#allocation3 + $0x11e0] sm:$0xff]
    %v702 = vld [vmem:[#allocation3 + $0x11e8] sm:$0xff]
    %v703 = vld [vmem:[#allocation3 + $0x11f0] sm:$0xff]
    %v704 = vld [vmem:[#allocation3 + $0x11f8] sm:$0xff]
    %v705 = vld [vmem:[#allocation3 + $0x1200] sm:$0xff]
    %v706 = vld [vmem:[#allocation3 + $0x1208] sm:$0xff]
    %v707 = vld [vmem:[#allocation3 + $0x1210] sm:$0xff]
    %v708 = vld [vmem:[#allocation3 + $0x1218] sm:$0xff]
    %v709 = vld [vmem:[#allocation3 + $0x1220] sm:$0xff]
    %v710 = vld [vmem:[#allocation3 + $0x1228] sm:$0xff]
    %v711 = vld [vmem:[#allocation3 + $0x1230] sm:$0xff]
    %v712 = vld [vmem:[#allocation3 + $0x1238] sm:$0xff]
    %v713 = vld [vmem:[#allocation3 + $0x1240] sm:$0xff]
    %v714 = vld [vmem:[#allocation3 + $0x1248] sm:$0xff]
    %v715 = vld [vmem:[#allocation3 + $0x1250] sm:$0xff]
    %v716 = vld [vmem:[#allocation3 + $0x1258] sm:$0xff]
    %v717 = vld [vmem:[#allocation3 + $0x1260] sm:$0xff]
    %v718 = vld [vmem:[#allocation3 + $0x1268] sm:$0xff]
    %v719 = vld [vmem:[#allocation3 + $0x1270] sm:$0xff]
    %v720 = vld [vmem:[#allocation3 + $0x1278] sm:$0xff]
    %v721 = vld [vmem:[#allocation3 + $0x1280] sm:$0xff]
    %v722 = vld [vmem:[#allocation3 + $0x1288] sm:$0xff]
    %v723 = vld [vmem:[#allocation3 + $0x1290] sm:$0xff]
    %v724 = vld [vmem:[#allocation3 + $0x1298] sm:$0xff]
    %v725 = vld [vmem:[#allocation3 + $0x12a0] sm:$0xff]
    %v726 = vld [vmem:[#allocation3 + $0x12a8] sm:$0xff]
    %v727 = vld [vmem:[#allocation3 + $0x12b0] sm:$0xff]
    %v728 = vld [vmem:[#allocation3 + $0x12b8] sm:$0xff]
    %v729 = vld [vmem:[#allocation3 + $0x12c0] sm:$0xff]
    %v730 = vld [vmem:[#allocation3 + $0x12c8] sm:$0xff]
    %v731 = vld [vmem:[#allocation3 + $0x12d0] sm:$0xff]
    %v732 = vld [vmem:[#allocation3 + $0x12d8] sm:$0xff]
    %v733 = vld [vmem:[#allocation3 + $0x12e0] sm:$0xff]
    %v734 = vld [vmem:[#allocation3 + $0x12e8] sm:$0xff]
    %v735 = vld [vmem:[#allocation3 + $0x12f0] sm:$0xff]
    %v736 = vld [vmem:[#allocation3 + $0x12f8] sm:$0xff]
    %v737 = vld [vmem:[#allocation3 + $0x1300] sm:$0xff]
    %v738 = vld [vmem:[#allocation3 + $0x1308] sm:$0xff]
    %v739 = vld [vmem:[#allocation3 + $0x1310] sm:$0xff]
    %v740 = vld [vmem:[#allocation3 + $0x1318] sm:$0xff]
    %v741 = vld [vmem:[#allocation3 + $0x1320] sm:$0xff]
    %v742 = vld [vmem:[#allocation3 + $0x1328] sm:$0xff]
    %v743 = vld [vmem:[#allocation3 + $0x1330] sm:$0xff]
    %v744 = vld [vmem:[#allocation3 + $0x1338] sm:$0xff]
    %v745 = vld [vmem:[#allocation3 + $0x1340] sm:$0xff]
    %v746 = vld [vmem:[#allocation3 + $0x1348] sm:$0xff]
    %v747 = vld [vmem:[#allocation3 + $0x1350] sm:$0xff]
    %v748 = vld [vmem:[#allocation3 + $0x1358] sm:$0xff]
    %v749 = vld [vmem:[#allocation3 + $0x1360] sm:$0xff]
    %v750 = vld [vmem:[#allocation3 + $0x1368] sm:$0xff]
    %v751 = vld [vmem:[#allocation3 + $0x1370] sm:$0xff]
    %v752 = vld [vmem:[#allocation3 + $0x1378] sm:$0xff]
    %v753 = vld [vmem:[#allocation3 + $0x1380] sm:$0xff]
    %v754 = vld [vmem:[#allocation3 + $0x1388] sm:$0xff]
    %v755 = vld [vmem:[#allocation3 + $0x1390] sm:$0xff]
    %v756 = vld [vmem:[#allocation3 + $0x1398] sm:$0xff]
    %v757 = vld [vmem:[#allocation3 + $0x13a0] sm:$0xff]
    %v758 = vld [vmem:[#allocation3 + $0x13a8] sm:$0xff]
    %v759 = vld [vmem:[#allocation3 + $0x13b0] sm:$0xff]
    %v760 = vld [vmem:[#allocation3 + $0x13b8] sm:$0xff]
    %v761 = vld [vmem:[#allocation3 + $0x13c0] sm:$0xff]
    %v762 = vld [vmem:[#allocation3 + $0x13c8] sm:$0xff]
    %v763 = vld [vmem:[#allocation3 + $0x13d0] sm:$0xff]
    %v764 = vld [vmem:[#allocation3 + $0x13d8] sm:$0xff]
    %v765 = vld [vmem:[#allocation3 + $0x13e0] sm:$0xff]
    %v766 = vld [vmem:[#allocation3 + $0x13e8] sm:$0xff]
    %v767 = vld [vmem:[#allocation3 + $0x13f0] sm:$0xff]
    %v768 = vld [vmem:[#allocation3 + $0x13f8] sm:$0xff]
    %v769 = vld [vmem:[#allocation3 + $0x1400] sm:$0xff]
    %v770 = vld [vmem:[#allocation3 + $0x1408] sm:$0xff]
    %v771 = vld [vmem:[#allocation3 + $0x1410] sm:$0xff]
    %v772 = vld [vmem:[#allocation3 + $0x1418] sm:$0xff]
    %v773 = vld [vmem:[#allocation3 + $0x1420] sm:$0xff]
    %v774 = vld [vmem:[#allocation3 + $0x1428] sm:$0xff]
    %v775 = vld [vmem:[#allocation3 + $0x1430] sm:$0xff]
    %v776 = vld [vmem:[#allocation3 + $0x1438] sm:$0xff]
    %v777 = vld [vmem:[#allocation3 + $0x1440] sm:$0xff]
    %v778 = vld [vmem:[#allocation3 + $0x1448] sm:$0xff]
    %v779 = vld [vmem:[#allocation3 + $0x1450] sm:$0xff]
    %v780 = vld [vmem:[#allocation3 + $0x1458] sm:$0xff]
    %v781 = vld [vmem:[#allocation3 + $0x1460] sm:$0xff]
    %v782 = vld [vmem:[#allocation3 + $0x1468] sm:$0xff]
    %v783 = vld [vmem:[#allocation3 + $0x1470] sm:$0xff]
    %v784 = vld [vmem:[#allocation3 + $0x1478] sm:$0xff]
    %v785 = vld [vmem:[#allocation3 + $0x1480] sm:$0xff]
    %v786 = vld [vmem:[#allocation3 + $0x1488] sm:$0xff]
    %v787 = vld [vmem:[#allocation3 + $0x1490] sm:$0xff]
    %v788 = vld [vmem:[#allocation3 + $0x1498] sm:$0xff]
    %v789 = vld [vmem:[#allocation3 + $0x14a0] sm:$0xff]
    %v790 = vld [vmem:[#allocation3 + $0x14a8] sm:$0xff]
    %v791 = vld [vmem:[#allocation3 + $0x14b0] sm:$0xff]
    %v792 = vld [vmem:[#allocation3 + $0x14b8] sm:$0xff]
    %v793 = vld [vmem:[#allocation3 + $0x14c0] sm:$0xff]
    %v794 = vld [vmem:[#allocation3 + $0x14c8] sm:$0xff]
    %v795 = vld [vmem:[#allocation3 + $0x14d0] sm:$0xff]
    %v796 = vld [vmem:[#allocation3 + $0x14d8] sm:$0xff]
    %v797 = vld [vmem:[#allocation3 + $0x14e0] sm:$0xff]
    %v798 = vld [vmem:[#allocation3 + $0x14e8] sm:$0xff]
    %v799 = vld [vmem:[#allocation3 + $0x14f0] sm:$0xff]
    %v800 = vld [vmem:[#allocation3 + $0x14f8] sm:$0xff]
    %v801 = vld [vmem:[#allocation3 + $0x1500] sm:$0xff]
    %v802 = vld [vmem:[#allocation3 + $0x1508] sm:$0xff]
    %v803 = vld [vmem:[#allocation3 + $0x1510] sm:$0xff]
    %v804 = vld [vmem:[#allocation3 + $0x1518] sm:$0xff]
    %v805 = vld [vmem:[#allocation3 + $0x1520] sm:$0xff]
    %v806 = vld [vmem:[#allocation3 + $0x1528] sm:$0xff]
    %v807 = vld [vmem:[#allocation3 + $0x1530] sm:$0xff]
    %v808 = vld [vmem:[#allocation3 + $0x1538] sm:$0xff]
    %v809 = vld [vmem:[#allocation3 + $0x1540] sm:$0xff]
    %v810 = vld [vmem:[#allocation3 + $0x1548] sm:$0xff]
    %v811 = vld [vmem:[#allocation3 + $0x1550] sm:$0xff]
    %v812 = vld [vmem:[#allocation3 + $0x1558] sm:$0xff]
    %v813 = vld [vmem:[#allocation3 + $0x1560] sm:$0xff]
    %v814 = vld [vmem:[#allocation3 + $0x1568] sm:$0xff]
    %v815 = vld [vmem:[#allocation3 + $0x1570] sm:$0xff]
    %v816 = vld [vmem:[#allocation3 + $0x1578] sm:$0xff]
    %v817 = vld [vmem:[#allocation3 + $0x1580] sm:$0xff]
    %v818 = vld [vmem:[#allocation3 + $0x1588] sm:$0xff]
    %v819 = vld [vmem:[#allocation3 + $0x1590] sm:$0xff]
    %v820 = vld [vmem:[#allocation3 + $0x1598] sm:$0xff]
    %v821 = vld [vmem:[#allocation3 + $0x15a0] sm:$0xff]
    %v822 = vld [vmem:[#allocation3 + $0x15a8] sm:$0xff]
    %v823 = vld [vmem:[#allocation3 + $0x15b0] sm:$0xff]
    %v824 = vld [vmem:[#allocation3 + $0x15b8] sm:$0xff]
    %v825 = vld [vmem:[#allocation3 + $0x15c0] sm:$0xff]
    %v826 = vld [vmem:[#allocation3 + $0x15c8] sm:$0xff]
    %v827 = vld [vmem:[#allocation3 + $0x15d0] sm:$0xff]
    %v828 = vld [vmem:[#allocation3 + $0x15d8] sm:$0xff]
    %v829 = vld [vmem:[#allocation3 + $0x15e0] sm:$0xff]
    %v830 = vld [vmem:[#allocation3 + $0x15e8] sm:$0xff]
    %v831 = vld [vmem:[#allocation3 + $0x15f0] sm:$0xff]
    %v832 = vld [vmem:[#allocation3 + $0x15f8] sm:$0xff]
    %v833 = vld [vmem:[#allocation3 + $0x1600] sm:$0xff]
    %v834 = vld [vmem:[#allocation3 + $0x1608] sm:$0xff]
    %v835 = vld [vmem:[#allocation3 + $0x1610] sm:$0xff]
    %v836 = vld [vmem:[#allocation3 + $0x1618] sm:$0xff]
    %v837 = vld [vmem:[#allocation3 + $0x1620] sm:$0xff]
    %v838 = vld [vmem:[#allocation3 + $0x1628] sm:$0xff]
    %v839 = vld [vmem:[#allocation3 + $0x1630] sm:$0xff]
    %v840 = vld [vmem:[#allocation3 + $0x1638] sm:$0xff]
    %v841 = vld [vmem:[#allocation3 + $0x1640] sm:$0xff]
    %v842 = vld [vmem:[#allocation3 + $0x1648] sm:$0xff]
    %v843 = vld [vmem:[#allocation3 + $0x1650] sm:$0xff]
    %v844 = vld [vmem:[#allocation3 + $0x1658] sm:$0xff]
    %v845 = vld [vmem:[#allocation3 + $0x1660] sm:$0xff]
    %v846 = vld [vmem:[#allocation3 + $0x1668] sm:$0xff]
    %v847 = vld [vmem:[#allocation3 + $0x1670] sm:$0xff]
    %v848 = vld [vmem:[#allocation3 + $0x1678] sm:$0xff]
    %v849 = vld [vmem:[#allocation3 + $0x1680] sm:$0xff]
    %v850 = vld [vmem:[#allocation3 + $0x1688] sm:$0xff]
    %v851 = vld [vmem:[#allocation3 + $0x1690] sm:$0xff]
    %v852 = vld [vmem:[#allocation3 + $0x1698] sm:$0xff]
    %v853 = vld [vmem:[#allocation3 + $0x16a0] sm:$0xff]
    %v854 = vld [vmem:[#allocation3 + $0x16a8] sm:$0xff]
    %v855 = vld [vmem:[#allocation3 + $0x16b0] sm:$0xff]
    %v856 = vld [vmem:[#allocation3 + $0x16b8] sm:$0xff]
    %v857 = vld [vmem:[#allocation3 + $0x16c0] sm:$0xff]
    %v858 = vld [vmem:[#allocation3 + $0x16c8] sm:$0xff]
    %v859 = vld [vmem:[#allocation3 + $0x16d0] sm:$0xff]
    %v860 = vld [vmem:[#allocation3 + $0x16d8] sm:$0xff]
    %v861 = vld [vmem:[#allocation3 + $0x16e0] sm:$0xff]
    %v862 = vld [vmem:[#allocation3 + $0x16e8] sm:$0xff]
    %v863 = vld [vmem:[#allocation3 + $0x16f0] sm:$0xff]
    %v864 = vld [vmem:[#allocation3 + $0x16f8] sm:$0xff]
    %v865 = vld [vmem:[#allocation3 + $0x1700] sm:$0xff]
    %v866 = vld [vmem:[#allocation3 + $0x1708] sm:$0xff]
    %v867 = vld [vmem:[#allocation3 + $0x1710] sm:$0xff]
    %v868 = vld [vmem:[#allocation3 + $0x1718] sm:$0xff]
    %v869 = vld [vmem:[#allocation3 + $0x1720] sm:$0xff]
    %v870 = vld [vmem:[#allocation3 + $0x1728] sm:$0xff]
    %v871 = vld [vmem:[#allocation3 + $0x1730] sm:$0xff]
    %v872 = vld [vmem:[#allocation3 + $0x1738] sm:$0xff]
    %v873 = vld [vmem:[#allocation3 + $0x1740] sm:$0xff]
    %v874 = vld [vmem:[#allocation3 + $0x1748] sm:$0xff]
    %v875 = vld [vmem:[#allocation3 + $0x1750] sm:$0xff]
    %v876 = vld [vmem:[#allocation3 + $0x1758] sm:$0xff]
    %v877 = vld [vmem:[#allocation3 + $0x1760] sm:$0xff]
    %v878 = vld [vmem:[#allocation3 + $0x1768] sm:$0xff]
    %v879 = vld [vmem:[#allocation3 + $0x1770] sm:$0xff]
    %v880 = vld [vmem:[#allocation3 + $0x1778] sm:$0xff]
    %v881 = vld [vmem:[#allocation3 + $0x1780] sm:$0xff]
    %v882 = vld [vmem:[#allocation3 + $0x1788] sm:$0xff]
    %v883 = vld [vmem:[#allocation3 + $0x1790] sm:$0xff]
    %v884 = vld [vmem:[#allocation3 + $0x1798] sm:$0xff]
    %v885 = vld [vmem:[#allocation3 + $0x17a0] sm:$0xff]
    %v886 = vld [vmem:[#allocation3 + $0x17a8] sm:$0xff]
    %v887 = vld [vmem:[#allocation3 + $0x17b0] sm:$0xff]
    %v888 = vld [vmem:[#allocation3 + $0x17b8] sm:$0xff]
    %v889 = vld [vmem:[#allocation3 + $0x17c0] sm:$0xff]
    %v890 = vld [vmem:[#allocation3 + $0x17c8] sm:$0xff]
    %v891 = vld [vmem:[#allocation3 + $0x17d0] sm:$0xff]
    %v892 = vld [vmem:[#allocation3 + $0x17d8] sm:$0xff]
    %v893 = vld [vmem:[#allocation3 + $0x17e0] sm:$0xff]
    %v894 = vld [vmem:[#allocation3 + $0x17e8] sm:$0xff]
    %v895 = vld [vmem:[#allocation3 + $0x17f0] sm:$0xff]
    %v896 = vld [vmem:[#allocation3 + $0x17f8] sm:$0xff]
    %v897 = vld [vmem:[#allocation3 + $0x1800] sm:$0xff]
    %v898 = vld [vmem:[#allocation3 + $0x1808] sm:$0xff]
    %v899 = vld [vmem:[#allocation3 + $0x1810] sm:$0xff]
    %v900 = vld [vmem:[#allocation3 + $0x1818] sm:$0xff]
    %v901 = vld [vmem:[#allocation3 + $0x1820] sm:$0xff]
    %v902 = vld [vmem:[#allocation3 + $0x1828] sm:$0xff]
    %v903 = vld [vmem:[#allocation3 + $0x1830] sm:$0xff]
    %v904 = vld [vmem:[#allocation3 + $0x1838] sm:$0xff]
    %v905 = vld [vmem:[#allocation3 + $0x1840] sm:$0xff]
    %v906 = vld [vmem:[#allocation3 + $0x1848] sm:$0xff]
    %v907 = vld [vmem:[#allocation3 + $0x1850] sm:$0xff]
    %v908 = vld [vmem:[#allocation3 + $0x1858] sm:$0xff]
    %v909 = vld [vmem:[#allocation3 + $0x1860] sm:$0xff]
    %v910 = vld [vmem:[#allocation3 + $0x1868] sm:$0xff]
    %v911 = vld [vmem:[#allocation3 + $0x1870] sm:$0xff]
    %v912 = vld [vmem:[#allocation3 + $0x1878] sm:$0xff]
    %v913 = vld [vmem:[#allocation3 + $0x1880] sm:$0xff]
    %v914 = vld [vmem:[#allocation3 + $0x1888] sm:$0xff]
    %v915 = vld [vmem:[#allocation3 + $0x1890] sm:$0xff]
    %v916 = vld [vmem:[#allocation3 + $0x1898] sm:$0xff]
    %v917 = vld [vmem:[#allocation3 + $0x18a0] sm:$0xff]
    %v918 = vld [vmem:[#allocation3 + $0x18a8] sm:$0xff]
    %v919 = vld [vmem:[#allocation3 + $0x18b0] sm:$0xff]
    %v920 = vld [vmem:[#allocation3 + $0x18b8] sm:$0xff]
    %v921 = vld [vmem:[#allocation3 + $0x18c0] sm:$0xff]
    %v922 = vld [vmem:[#allocation3 + $0x18c8] sm:$0xff]
    %v923 = vld [vmem:[#allocation3 + $0x18d0] sm:$0xff]
    %v924 = vld [vmem:[#allocation3 + $0x18d8] sm:$0xff]
    %v925 = vld [vmem:[#allocation3 + $0x18e0] sm:$0xff]
    %v926 = vld [vmem:[#allocation3 + $0x18e8] sm:$0xff]
    %v927 = vld [vmem:[#allocation3 + $0x18f0] sm:$0xff]
    %v928 = vld [vmem:[#allocation3 + $0x18f8] sm:$0xff]
    %v929 = vld [vmem:[#allocation3 + $0x1900] sm:$0xff]
    %v930 = vld [vmem:[#allocation3 + $0x1908] sm:$0xff]
    %v931 = vld [vmem:[#allocation3 + $0x1910] sm:$0xff]
    %v932 = vld [vmem:[#allocation3 + $0x1918] sm:$0xff]
    %v933 = vld [vmem:[#allocation3 + $0x1920] sm:$0xff]
    %v934 = vld [vmem:[#allocation3 + $0x1928] sm:$0xff]
    %v935 = vld [vmem:[#allocation3 + $0x1930] sm:$0xff]
    %v936 = vld [vmem:[#allocation3 + $0x1938] sm:$0xff]
    %v937 = vld [vmem:[#allocation3 + $0x1940] sm:$0xff]
    %v938 = vld [vmem:[#allocation3 + $0x1948] sm:$0xff]
    %v939 = vld [vmem:[#allocation3 + $0x1950] sm:$0xff]
    %v940 = vld [vmem:[#allocation3 + $0x1958] sm:$0xff]
    %v941 = vld [vmem:[#allocation3 + $0x1960] sm:$0xff]
    %v942 = vld [vmem:[#allocation3 + $0x1968] sm:$0xff]
    %v943 = vld [vmem:[#allocation3 + $0x1970] sm:$0xff]
    %v944 = vld [vmem:[#allocation3 + $0x1978] sm:$0xff]
    %v945 = vld [vmem:[#allocation3 + $0x1980] sm:$0xff]
    %v946 = vld [vmem:[#allocation3 + $0x1988] sm:$0xff]
    %v947 = vld [vmem:[#allocation3 + $0x1990] sm:$0xff]
    %v948 = vld [vmem:[#allocation3 + $0x1998] sm:$0xff]
    %v949 = vld [vmem:[#allocation3 + $0x19a0] sm:$0xff]
    %v950 = vld [vmem:[#allocation3 + $0x19a8] sm:$0xff]
    %v951 = vld [vmem:[#allocation3 + $0x19b0] sm:$0xff]
    %v952 = vld [vmem:[#allocation3 + $0x19b8] sm:$0xff]
    %v953 = vld [vmem:[#allocation3 + $0x19c0] sm:$0xff]
    %v954 = vld [vmem:[#allocation3 + $0x19c8] sm:$0xff]
    %v955 = vld [vmem:[#allocation3 + $0x19d0] sm:$0xff]
    %v956 = vld [vmem:[#allocation3 + $0x19d8] sm:$0xff]
    %v957 = vld [vmem:[#allocation3 + $0x19e0] sm:$0xff]
    %v958 = vld [vmem:[#allocation3 + $0x19e8] sm:$0xff]
    %v959 = vld [vmem:[#allocation3 + $0x19f0] sm:$0xff]
    %v960 = vld [vmem:[#allocation3 + $0x19f8] sm:$0xff]
    %v961 = vld [vmem:[#allocation3 + $0x1a00] sm:$0xff]
    %v962 = vld [vmem:[#allocation3 + $0x1a08] sm:$0xff]
    %v963 = vld [vmem:[#allocation3 + $0x1a10] sm:$0xff]
    %v964 = vld [vmem:[#allocation3 + $0x1a18] sm:$0xff]
    %v965 = vld [vmem:[#allocation3 + $0x1a20] sm:$0xff]
    %v966 = vld [vmem:[#allocation3 + $0x1a28] sm:$0xff]
    %v967 = vld [vmem:[#allocation3 + $0x1a30] sm:$0xff]
    %v968 = vld [vmem:[#allocation3 + $0x1a38] sm:$0xff]
    %v969 = vld [vmem:[#allocation3 + $0x1a40] sm:$0xff]
    %v970 = vld [vmem:[#allocation3 + $0x1a48] sm:$0xff]
    %v971 = vld [vmem:[#allocation3 + $0x1a50] sm:$0xff]
    %v972 = vld [vmem:[#allocation3 + $0x1a58] sm:$0xff]
    %v973 = vld [vmem:[#allocation3 + $0x1a60] sm:$0xff]
    %v974 = vld [vmem:[#allocation3 + $0x1a68] sm:$0xff]
    %v975 = vld [vmem:[#allocation3 + $0x1a70] sm:$0xff]
    %v976 = vld [vmem:[#allocation3 + $0x1a78] sm:$0xff]
    %v977 = vld [vmem:[#allocation3 + $0x1a80] sm:$0xff]
    %v978 = vld [vmem:[#allocation3 + $0x1a88] sm:$0xff]
    %v979 = vld [vmem:[#allocation3 + $0x1a90] sm:$0xff]
    %v980 = vld [vmem:[#allocation3 + $0x1a98] sm:$0xff]
    %v981 = vld [vmem:[#allocation3 + $0x1aa0] sm:$0xff]
    %v982 = vld [vmem:[#allocation3 + $0x1aa8] sm:$0xff]
    %v983 = vld [vmem:[#allocation3 + $0x1ab0] sm:$0xff]
    %v984 = vld [vmem:[#allocation3 + $0x1ab8] sm:$0xff]
    %v985 = vld [vmem:[#allocation3 + $0x1ac0] sm:$0xff]
    %v986 = vld [vmem:[#allocation3 + $0x1ac8] sm:$0xff]
    %v987 = vld [vmem:[#allocation3 + $0x1ad0] sm:$0xff]
    %v988 = vld [vmem:[#allocation3 + $0x1ad8] sm:$0xff]
    %v989 = vld [vmem:[#allocation3 + $0x1ae0] sm:$0xff]
    %v990 = vld [vmem:[#allocation3 + $0x1ae8] sm:$0xff]
    %v991 = vld [vmem:[#allocation3 + $0x1af0] sm:$0xff]
    %v992 = vld [vmem:[#allocation3 + $0x1af8] sm:$0xff]
    %v993 = vld [vmem:[#allocation3 + $0x1b00] sm:$0xff]
    %v994 = vld [vmem:[#allocation3 + $0x1b08] sm:$0xff]
    %v995 = vld [vmem:[#allocation3 + $0x1b10] sm:$0xff]
    %v996 = vld [vmem:[#allocation3 + $0x1b18] sm:$0xff]
    %v997 = vld [vmem:[#allocation3 + $0x1b20] sm:$0xff]
    %v998 = vld [vmem:[#allocation3 + $0x1b28] sm:$0xff]
    %v999 = vld [vmem:[#allocation3 + $0x1b30] sm:$0xff]
    %v1000 = vld [vmem:[#allocation3 + $0x1b38] sm:$0xff]
    %v1001 = vld [vmem:[#allocation3 + $0x1b40] sm:$0xff]
    %v1002 = vld [vmem:[#allocation3 + $0x1b48] sm:$0xff]
    %v1003 = vld [vmem:[#allocation3 + $0x1b50] sm:$0xff]
    %v1004 = vld [vmem:[#allocation3 + $0x1b58] sm:$0xff]
    %v1005 = vld [vmem:[#allocation3 + $0x1b60] sm:$0xff]
    %v1006 = vld [vmem:[#allocation3 + $0x1b68] sm:$0xff]
    %v1007 = vld [vmem:[#allocation3 + $0x1b70] sm:$0xff]
    %v1008 = vld [vmem:[#allocation3 + $0x1b78] sm:$0xff]
    %v1009 = vld [vmem:[#allocation3 + $0x1b80] sm:$0xff]
    %v1010 = vld [vmem:[#allocation3 + $0x1b88] sm:$0xff]
    %v1011 = vld [vmem:[#allocation3 + $0x1b90] sm:$0xff]
    %v1012 = vld [vmem:[#allocation3 + $0x1b98] sm:$0xff]
    %v1013 = vld [vmem:[#allocation3 + $0x1ba0] sm:$0xff]
    %v1014 = vld [vmem:[#allocation3 + $0x1ba8] sm:$0xff]
    %v1015 = vld [vmem:[#allocation3 + $0x1bb0] sm:$0xff]
    %v1016 = vld [vmem:[#allocation3 + $0x1bb8] sm:$0xff]
    %v1017 = vld [vmem:[#allocation3 + $0x1bc0] sm:$0xff]
    %v1018 = vld [vmem:[#allocation3 + $0x1bc8] sm:$0xff]
    %v1019 = vld [vmem:[#allocation3 + $0x1bd0] sm:$0xff]
    %v1020 = vld [vmem:[#allocation3 + $0x1bd8] sm:$0xff]
    %v1021 = vld [vmem:[#allocation3 + $0x1be0] sm:$0xff]
    %v1022 = vld [vmem:[#allocation3 + $0x1be8] sm:$0xff]
    %v1023 = vld [vmem:[#allocation3 + $0x1bf0] sm:$0xff]
    %v1024 = vld [vmem:[#allocation3 + $0x1bf8] sm:$0xff]
    %v1025 = vld [vmem:[#allocation3 + $0x1c00] sm:$0xff]
    %v1026 = vld [vmem:[#allocation3 + $0x1c08] sm:$0xff]
    %v1027 = vld [vmem:[#allocation3 + $0x1c10] sm:$0xff]
    %v1028 = vld [vmem:[#allocation3 + $0x1c18] sm:$0xff]
    %v1029 = vld [vmem:[#allocation3 + $0x1c20] sm:$0xff]
    %v1030 = vld [vmem:[#allocation3 + $0x1c28] sm:$0xff]
    %v1031 = vld [vmem:[#allocation3 + $0x1c30] sm:$0xff]
    %v1032 = vld [vmem:[#allocation3 + $0x1c38] sm:$0xff]
    %v1033 = vld [vmem:[#allocation3 + $0x1c40] sm:$0xff]
    %v1034 = vld [vmem:[#allocation3 + $0x1c48] sm:$0xff]
    %v1035 = vld [vmem:[#allocation3 + $0x1c50] sm:$0xff]
    %v1036 = vld [vmem:[#allocation3 + $0x1c58] sm:$0xff]
    %v1037 = vld [vmem:[#allocation3 + $0x1c60] sm:$0xff]
    %v1038 = vld [vmem:[#allocation3 + $0x1c68] sm:$0xff]
    %v1039 = vld [vmem:[#allocation3 + $0x1c70] sm:$0xff]
    %v1040 = vld [vmem:[#allocation3 + $0x1c78] sm:$0xff]
    %v1041 = vld [vmem:[#allocation3 + $0x1c80] sm:$0xff]
    %v1042 = vld [vmem:[#allocation3 + $0x1c88] sm:$0xff]
    %v1043 = vld [vmem:[#allocation3 + $0x1c90] sm:$0xff]
    %v1044 = vld [vmem:[#allocation3 + $0x1c98] sm:$0xff]
    %v1045 = vld [vmem:[#allocation3 + $0x1ca0] sm:$0xff]
    %v1046 = vld [vmem:[#allocation3 + $0x1ca8] sm:$0xff]
    %v1047 = vld [vmem:[#allocation3 + $0x1cb0] sm:$0xff]
    %v1048 = vld [vmem:[#allocation3 + $0x1cb8] sm:$0xff]
    %v1049 = vld [vmem:[#allocation3 + $0x1cc0] sm:$0xff]
    %v1050 = vld [vmem:[#allocation3 + $0x1cc8] sm:$0xff]
    %v1051 = vld [vmem:[#allocation3 + $0x1cd0] sm:$0xff]
    %v1052 = vld [vmem:[#allocation3 + $0x1cd8] sm:$0xff]
    %v1053 = vld [vmem:[#allocation3 + $0x1ce0] sm:$0xff]
    %v1054 = vld [vmem:[#allocation3 + $0x1ce8] sm:$0xff]
    %v1055 = vld [vmem:[#allocation3 + $0x1cf0] sm:$0xff]
    %v1056 = vld [vmem:[#allocation3 + $0x1cf8] sm:$0xff]
    %v1057 = vld [vmem:[#allocation3 + $0x1d00] sm:$0xff]
    %v1058 = vld [vmem:[#allocation3 + $0x1d08] sm:$0xff]
    %v1059 = vld [vmem:[#allocation3 + $0x1d10] sm:$0xff]
    %v1060 = vld [vmem:[#allocation3 + $0x1d18] sm:$0xff]
    %v1061 = vld [vmem:[#allocation3 + $0x1d20] sm:$0xff]
    %v1062 = vld [vmem:[#allocation3 + $0x1d28] sm:$0xff]
    %v1063 = vld [vmem:[#allocation3 + $0x1d30] sm:$0xff]
    %v1064 = vld [vmem:[#allocation3 + $0x1d38] sm:$0xff]
    %v1065 = vld [vmem:[#allocation3 + $0x1d40] sm:$0xff]
    %v1066 = vld [vmem:[#allocation3 + $0x1d48] sm:$0xff]
    %v1067 = vld [vmem:[#allocation3 + $0x1d50] sm:$0xff]
    %v1068 = vld [vmem:[#allocation3 + $0x1d58] sm:$0xff]
    %v1069 = vld [vmem:[#allocation3 + $0x1d60] sm:$0xff]
    %v1070 = vld [vmem:[#allocation3 + $0x1d68] sm:$0xff]
    %v1071 = vld [vmem:[#allocation3 + $0x1d70] sm:$0xff]
    %v1072 = vld [vmem:[#allocation3 + $0x1d78] sm:$0xff]
    %v1073 = vld [vmem:[#allocation3 + $0x1d80] sm:$0xff]
    %v1074 = vld [vmem:[#allocation3 + $0x1d88] sm:$0xff]
    %v1075 = vld [vmem:[#allocation3 + $0x1d90] sm:$0xff]
    %v1076 = vld [vmem:[#allocation3 + $0x1d98] sm:$0xff]
    %v1077 = vld [vmem:[#allocation3 + $0x1da0] sm:$0xff]
    %v1078 = vld [vmem:[#allocation3 + $0x1da8] sm:$0xff]
    %v1079 = vld [vmem:[#allocation3 + $0x1db0] sm:$0xff]
    %v1080 = vld [vmem:[#allocation3 + $0x1db8] sm:$0xff]
    %v1081 = vld [vmem:[#allocation3 + $0x1dc0] sm:$0xff]
    %v1082 = vld [vmem:[#allocation3 + $0x1dc8] sm:$0xff]
    %v1083 = vld [vmem:[#allocation3 + $0x1dd0] sm:$0xff]
    %v1084 = vld [vmem:[#allocation3 + $0x1dd8] sm:$0xff]
    %v1085 = vld [vmem:[#allocation3 + $0x1de0] sm:$0xff]
    %v1086 = vld [vmem:[#allocation3 + $0x1de8] sm:$0xff]
    %v1087 = vld [vmem:[#allocation3 + $0x1df0] sm:$0xff]
    %v1088 = vld [vmem:[#allocation3 + $0x1df8] sm:$0xff]
    %v1089 = vld [vmem:[#allocation3 + $0x1e00] sm:$0xff]
    %v1090 = vld [vmem:[#allocation3 + $0x1e08] sm:$0xff]
    %v1091 = vld [vmem:[#allocation3 + $0x1e10] sm:$0xff]
    %v1092 = vld [vmem:[#allocation3 + $0x1e18] sm:$0xff]
    %v1093 = vld [vmem:[#allocation3 + $0x1e20] sm:$0xff]
    %v1094 = vld [vmem:[#allocation3 + $0x1e28] sm:$0xff]
    %v1095 = vld [vmem:[#allocation3 + $0x1e30] sm:$0xff]
    %v1096 = vld [vmem:[#allocation3 + $0x1e38] sm:$0xff]
    %v1097 = vld [vmem:[#allocation3 + $0x1e40] sm:$0xff]
    %v1098 = vld [vmem:[#allocation3 + $0x1e48] sm:$0xff]
    %v1099 = vld [vmem:[#allocation3 + $0x1e50] sm:$0xff]
    %v1100 = vld [vmem:[#allocation3 + $0x1e58] sm:$0xff]
    %v1101 = vld [vmem:[#allocation3 + $0x1e60] sm:$0xff]
    %v1102 = vld [vmem:[#allocation3 + $0x1e68] sm:$0xff]
    %v1103 = vld [vmem:[#allocation3 + $0x1e70] sm:$0xff]
    %v1104 = vld [vmem:[#allocation3 + $0x1e78] sm:$0xff]
    %v1105 = vld [vmem:[#allocation3 + $0x1e80] sm:$0xff]
    %v1106 = vld [vmem:[#allocation3 + $0x1e88] sm:$0xff]
    %v1107 = vld [vmem:[#allocation3 + $0x1e90] sm:$0xff]
    %v1108 = vld [vmem:[#allocation3 + $0x1e98] sm:$0xff]
    %v1109 = vld [vmem:[#allocation3 + $0x1ea0] sm:$0xff]
    %v1110 = vld [vmem:[#allocation3 + $0x1ea8] sm:$0xff]
    %v1111 = vld [vmem:[#allocation3 + $0x1eb0] sm:$0xff]
    %v1112 = vld [vmem:[#allocation3 + $0x1eb8] sm:$0xff]
    %v1113 = vld [vmem:[#allocation3 + $0x1ec0] sm:$0xff]
    %v1114 = vld [vmem:[#allocation3 + $0x1ec8] sm:$0xff]
    %v1115 = vld [vmem:[#allocation3 + $0x1ed0] sm:$0xff]
    %v1116 = vld [vmem:[#allocation3 + $0x1ed8] sm:$0xff]
    %v1117 = vld [vmem:[#allocation3 + $0x1ee0] sm:$0xff]
    %v1118 = vld [vmem:[#allocation3 + $0x1ee8] sm:$0xff]
    %v1119 = vld [vmem:[#allocation3 + $0x1ef0] sm:$0xff]
    %v1120 = vld [vmem:[#allocation3 + $0x1ef8] sm:$0xff]
    %v1121 = vld [vmem:[#allocation3 + $0x1f00] sm:$0xff]
    %v1122 = vld [vmem:[#allocation3 + $0x1f08] sm:$0xff]
    %v1123 = vld [vmem:[#allocation3 + $0x1f10] sm:$0xff]
    %v1124 = vld [vmem:[#allocation3 + $0x1f18] sm:$0xff]
    %v1125 = vld [vmem:[#allocation3 + $0x1f20] sm:$0xff]
    %v1126 = vld [vmem:[#allocation3 + $0x1f28] sm:$0xff]
    %v1127 = vld [vmem:[#allocation3 + $0x1f30] sm:$0xff]
    %v1128 = vld [vmem:[#allocation3 + $0x1f38] sm:$0xff]
    %v1129 = vld [vmem:[#allocation3 + $0x1f40] sm:$0xff]
    %v1130 = vld [vmem:[#allocation3 + $0x1f48] sm:$0xff]
    %v1131 = vld [vmem:[#allocation3 + $0x1f50] sm:$0xff]
    %v1132 = vld [vmem:[#allocation3 + $0x1f58] sm:$0xff]
    %v1133 = vld [vmem:[#allocation3 + $0x1f60] sm:$0xff]
    %v1134 = vld [vmem:[#allocation3 + $0x1f68] sm:$0xff]
    %v1135 = vld [vmem:[#allocation3 + $0x1f70] sm:$0xff]
    %v1136 = vld [vmem:[#allocation3 + $0x1f78] sm:$0xff]
    %v1137 = vld [vmem:[#allocation3 + $0x1f80] sm:$0xff]
    %v1138 = vld [vmem:[#allocation3 + $0x1f88] sm:$0xff]
    %v1139 = vld [vmem:[#allocation3 + $0x1f90] sm:$0xff]
    %v1140 = vld [vmem:[#allocation3 + $0x1f98] sm:$0xff]
    %v1141 = vld [vmem:[#allocation3 + $0x1fa0] sm:$0xff]
    %v1142 = vld [vmem:[#allocation3 + $0x1fa8] sm:$0xff]
    %v1143 = vld [vmem:[#allocation3 + $0x1fb0] sm:$0xff]
    %v1144 = vld [vmem:[#allocation3 + $0x1fb8] sm:$0xff]
    %v1145 = vld [vmem:[#allocation3 + $0x1fc0] sm:$0xff]
    %v1146 = vld [vmem:[#allocation3 + $0x1fc8] sm:$0xff]
    %v1147 = vld [vmem:[#allocation3 + $0x1fd0] sm:$0xff]
    %v1148 = vld [vmem:[#allocation3 + $0x1fd8] sm:$0xff]
    %v1149 = vld [vmem:[#allocation3 + $0x1fe0] sm:$0xff]
    %v1150 = vld [vmem:[#allocation3 + $0x1fe8] sm:$0xff]
    %v1151 = vld [vmem:[#allocation3 + $0x1ff0] sm:$0xff]
    %v1152 = vld [vmem:[#allocation3 + $0x1ff8] sm:$0xff]
    %v1153 = vld [vmem:[#allocation5] sm:$0xff]
    %v1155 = vlaneseq
    %v1156 = vshrl.u32 %v1155, 7
    %v1157 = vsub.s32 0, %v1156
    %v1158 = vrot.slane %v1153, %v1157
    %v1159 = vlaneseq
    %v1160 = vshrl.u32 %v1159, 7
    %v1161 = vsub.s32 1, %v1160
    %v1162 = vrot.slane %v1153, %v1161
    %v1163 = vlaneseq
    %v1164 = vshrl.u32 %v1163, 7
    %v1165 = vsub.s32 2, %v1164
    %v1166 = vrot.slane %v1153, %v1165
    %v1167 = vlaneseq
    %v1168 = vshrl.u32 %v1167, 7
    %v1169 = vsub.s32 3, %v1168
    %v1170 = vrot.slane %v1153, %v1169
    %v1171 = vlaneseq
    %v1172 = vshrl.u32 %v1171, 7
    %v1173 = vsub.s32 4, %v1172
    %v1174 = vrot.slane %v1153, %v1173
    %v1175 = vlaneseq
    %v1176 = vshrl.u32 %v1175, 7
    %v1177 = vsub.s32 5, %v1176
    %v1178 = vrot.slane %v1153, %v1177
    %v1179 = vlaneseq
    %v1180 = vshrl.u32 %v1179, 7
    %v1181 = vsub.s32 6, %v1180
    %v1182 = vrot.slane %v1153, %v1181
    %v1183 = vlaneseq
    %v1184 = vshrl.u32 %v1183, 7
    %v1185 = vsub.s32 7, %v1184
    %v1186 = vrot.slane %v1153, %v1185
    %v1197 = vcombine.high %v127, %v127
    %v1199 = vunpack.c.l.s4 1983009808
    %v1200 = vunpack.c.0.s8 %v1199
    %v1201 = vlaneseq
    %v1202 = vshrl.u32 %v1201, 7
    %v1203 = vsub.s32 %v1200, %v1202
    %v1204 = vrot.slane %v127, %v1203
    %v1206 = vunpack.c.l.s4 1983009808
    %v1207 = vunpack.c.0.s8 %v1206
    %v1208 = vlaneseq
    %v1209 = vshrl.u32 %v1208, 7
    %v1210 = vsub.s32 %v1207, %v1209
    %v1211 = vrot.slane %v1197, %v1210
    %v1212 = vcombine.high %v1204, %v1204
    %v1213 = vcombine.high %v1211, %v1211
    %v1214 = vcombine.high %v128, %v128
    %v1216 = vunpack.c.l.s4 1983009808
    %v1217 = vunpack.c.0.s8 %v1216
    %v1218 = vlaneseq
    %v1219 = vshrl.u32 %v1218, 7
    %v1220 = vsub.s32 %v1217, %v1219
    %v1221 = vrot.slane %v128, %v1220
    %v1223 = vunpack.c.l.s4 1983009808
    %v1224 = vunpack.c.0.s8 %v1223
    %v1225 = vlaneseq
    %v1226 = vshrl.u32 %v1225, 7
    %v1227 = vsub.s32 %v1224, %v1226
    %v1228 = vrot.slane %v1214, %v1227
    %v1229 = vcombine.high %v1221, %v1221
    %v1230 = vcombine.high %v1228, %v1228
    %1239 = vmatprep.subr.mxu0 %v130
    %1240 = vmatpush1.msra.mxu0 %v129
    %1241 = vmatprep.subr.mxu0 %v138
    %1242 = vmatpush1.msra.mxu0 %v137
    %1243 = vmatprep.subr.mxu0 %v146
    %1244 = vmatpush1.msra.mxu0 %v145
    %1245 = vmatprep.subr.mxu0 %v154
    %1246 = vmatpush1.msra.mxu0 %v153
    %1247 = vmatprep.subr.mxu0 %v162
    %1248 = vmatpush1.msra.mxu0 %v161
    %1249 = vmatprep.subr.mxu0 %v170
    %1250 = vmatpush1.msra.mxu0 %v169
    %1251 = vmatprep.subr.mxu0 %v178
    %1252 = vmatpush1.msra.mxu0 %v177
    %1253 = vmatprep.subr.mxu0 %v186
    %1254 = vmatpush1.msra.mxu0 %v185
    %1255 = vmatprep.subr.mxu0 %v194
    %1256 = vmatpush1.msra.mxu0 %v193
    %1257 = vmatprep.subr.mxu0 %v202
    %1258 = vmatpush1.msra.mxu0 %v201
    %1259 = vmatprep.subr.mxu0 %v210
    %1260 = vmatpush1.msra.mxu0 %v209
    %1261 = vmatprep.subr.mxu0 %v218
    %1262 = vmatpush1.msra.mxu0 %v217
    %1263 = vmatprep.subr.mxu0 %v226
    %1264 = vmatpush1.msra.mxu0 %v225
    %1265 = vmatprep.subr.mxu0 %v234
    %1266 = vmatpush1.msra.mxu0 %v233
    %1267 = vmatprep.subr.mxu0 %v242
    %1268 = vmatpush1.msra.mxu0 %v241
    %1269 = vmatprep.subr.mxu0 %v250
    %1270 = vmatpush1.msra.mxu0 %v249
    %1271 = vmatprep.subr.mxu0 %v258
    %1272 = vmatpush1.msra.mxu0 %v257
    %1273 = vmatprep.subr.mxu0 %v266
    %1274 = vmatpush1.msra.mxu0 %v265
    %1275 = vmatprep.subr.mxu0 %v274
    %1276 = vmatpush1.msra.mxu0 %v273
    %1277 = vmatprep.subr.mxu0 %v282
    %1278 = vmatpush1.msra.mxu0 %v281
    %1279 = vmatprep.subr.mxu0 %v290
    %1280 = vmatpush1.msra.mxu0 %v289
    %1281 = vmatprep.subr.mxu0 %v298
    %1282 = vmatpush1.msra.mxu0 %v297
    %1283 = vmatprep.subr.mxu0 %v306
    %1284 = vmatpush1.msra.mxu0 %v305
    %1285 = vmatprep.subr.mxu0 %v314
    %1286 = vmatpush1.msra.mxu0 %v313
    %1287 = vmatprep.subr.mxu0 %v322
    %1288 = vmatpush1.msra.mxu0 %v321
    %1289 = vmatprep.subr.mxu0 %v330
    %1290 = vmatpush1.msra.mxu0 %v329
    %1291 = vmatprep.subr.mxu0 %v338
    %1292 = vmatpush1.msra.mxu0 %v337
    %1293 = vmatprep.subr.mxu0 %v346
    %1294 = vmatpush1.msra.mxu0 %v345
    %1295 = vmatprep.subr.mxu0 %v354
    %1296 = vmatpush1.msra.mxu0 %v353
    %1297 = vmatprep.subr.mxu0 %v362
    %1298 = vmatpush1.msra.mxu0 %v361
    %1299 = vmatprep.subr.mxu0 %v370
    %1300 = vmatpush1.msra.mxu0 %v369
    %1301 = vmatprep.subr.mxu0 %v378
    %1302 = vmatpush1.msra.mxu0 %v377
    %1303 = vmatprep.mubr.f32.mxu0 %v1212
    %1304 = vmatmul.mubr.f32.gmra.mrb[0].mxu0 %v1204
    %v1305 = vpop.f32.mrb[0].mxu0
    %v1306 = vadd.f32 %v1158, %v1305
    %v1307 = vpop.f32.mrb[0].mxu0
    %v1308 = vadd.f32 %v1162, %v1307
    %1309 = vdwg.mxu0
    %1310 = vmatprep.subr.mxu0 %v386
    %1311 = vmatpush1.msra.mxu0 %v385
    %1312 = vmatprep.subr.mxu0 %v394
    %1313 = vmatpush1.msra.mxu0 %v393
    %1314 = vmatprep.subr.mxu0 %v402
    %1315 = vmatpush1.msra.mxu0 %v401
    %1316 = vmatprep.subr.mxu0 %v410
    %1317 = vmatpush1.msra.mxu0 %v409
    %1318 = vmatprep.subr.mxu0 %v418
    %1319 = vmatpush1.msra.mxu0 %v417
    %1320 = vmatprep.subr.mxu0 %v426
    %1321 = vmatpush1.msra.mxu0 %v425
    %1322 = vmatprep.subr.mxu0 %v434
    %1323 = vmatpush1.msra.mxu0 %v433
    %1324 = vmatprep.subr.mxu0 %v442
    %1325 = vmatpush1.msra.mxu0 %v441
    %1326 = vmatprep.subr.mxu0 %v450
    %1327 = vmatpush1.msra.mxu0 %v449
    %1328 = vmatprep.subr.mxu0 %v458
    %1329 = vmatpush1.msra.mxu0 %v457
    %1330 = vmatprep.subr.mxu0 %v466
    %1331 = vmatpush1.msra.mxu0 %v465
    %1332 = vmatprep.subr.mxu0 %v474
    %1333 = vmatpush1.msra.mxu0 %v473
    %1334 = vmatprep.subr.mxu0 %v482
    %1335 = vmatpush1.msra.mxu0 %v481
    %1336 = vmatprep.subr.mxu0 %v490
    %1337 = vmatpush1.msra.mxu0 %v489
    %1338 = vmatprep.subr.mxu0 %v498
    %1339 = vmatpush1.msra.mxu0 %v497
    %1340 = vmatprep.subr.mxu0 %v506
    %1341 = vmatpush1.msra.mxu0 %v505
    %1342 = vmatprep.subr.mxu0 %v514
    %1343 = vmatpush1.msra.mxu0 %v513
    %1344 = vmatprep.subr.mxu0 %v522
    %1345 = vmatpush1.msra.mxu0 %v521
    %1346 = vmatprep.subr.mxu0 %v530
    %1347 = vmatpush1.msra.mxu0 %v529
    %1348 = vmatprep.subr.mxu0 %v538
    %1349 = vmatpush1.msra.mxu0 %v537
    %1350 = vmatprep.subr.mxu0 %v546
    %1351 = vmatpush1.msra.mxu0 %v545
    %1352 = vmatprep.subr.mxu0 %v554
    %1353 = vmatpush1.msra.mxu0 %v553
    %1354 = vmatprep.subr.mxu0 %v562
    %1355 = vmatpush1.msra.mxu0 %v561
    %1356 = vmatprep.subr.mxu0 %v570
    %1357 = vmatpush1.msra.mxu0 %v569
    %1358 = vmatprep.subr.mxu0 %v578
    %1359 = vmatpush1.msra.mxu0 %v577
    %1360 = vmatprep.subr.mxu0 %v586
    %1361 = vmatpush1.msra.mxu0 %v585
    %1362 = vmatprep.subr.mxu0 %v594
    %1363 = vmatpush1.msra.mxu0 %v593
    %1364 = vmatprep.subr.mxu0 %v602
    %1365 = vmatpush1.msra.mxu0 %v601
    %1366 = vmatprep.subr.mxu0 %v610
    %1367 = vmatpush1.msra.mxu0 %v609
    %1368 = vmatprep.subr.mxu0 %v618
    %1369 = vmatpush1.msra.mxu0 %v617
    %1370 = vmatprep.subr.mxu0 %v626
    %1371 = vmatpush1.msra.mxu0 %v625
    %1372 = vmatprep.subr.mxu0 %v634
    %1373 = vmatpush1.msra.mxu0 %v633
    %1374 = vmatprep.mubr.f32.mxu0 %v1213
    %1375 = vmatmul.mubr.f32.gmra.mrb[0].mxu0 %v1211
    %v1376 = vpop.f32.mrb[0].mxu0
    %v1377 = vadd.f32 %v1306, %v1376
    %v1378 = vpop.f32.mrb[0].mxu0
    %v1379 = vadd.f32 %v1308, %v1378
    %1380 = vdwg.mxu0
    %1381 = vmatprep.subr.mxu0 %v642
    %1382 = vmatpush1.msra.mxu0 %v641
    %1383 = vmatprep.subr.mxu0 %v650
    %1384 = vmatpush1.msra.mxu0 %v649
    %1385 = vmatprep.subr.mxu0 %v658
    %1386 = vmatpush1.msra.mxu0 %v657
    %1387 = vmatprep.subr.mxu0 %v666
    %1388 = vmatpush1.msra.mxu0 %v665
    %1389 = vmatprep.subr.mxu0 %v674
    %1390 = vmatpush1.msra.mxu0 %v673
    %1391 = vmatprep.subr.mxu0 %v682
    %1392 = vmatpush1.msra.mxu0 %v681
    %1393 = vmatprep.subr.mxu0 %v690
    %1394 = vmatpush1.msra.mxu0 %v689
    %1395 = vmatprep.subr.mxu0 %v698
    %1396 = vmatpush1.msra.mxu0 %v697
    %1397 = vmatprep.subr.mxu0 %v706
    %1398 = vmatpush1.msra.mxu0 %v705
    %1399 = vmatprep.subr.mxu0 %v714
    %1400 = vmatpush1.msra.mxu0 %v713
    %1401 = vmatprep.subr.mxu0 %v722
    %1402 = vmatpush1.msra.mxu0 %v721
    %1403 = vmatprep.subr.mxu0 %v730
    %1404 = vmatpush1.msra.mxu0 %v729
    %1405 = vmatprep.subr.mxu0 %v738
    %1406 = vmatpush1.msra.mxu0 %v737
    %1407 = vmatprep.subr.mxu0 %v746
    %1408 = vmatpush1.msra.mxu0 %v745
    %1409 = vmatprep.subr.mxu0 %v754
    %1410 = vmatpush1.msra.mxu0 %v753
    %1411 = vmatprep.subr.mxu0 %v762
    %1412 = vmatpush1.msra.mxu0 %v761
    %1413 = vmatprep.subr.mxu0 %v770
    %1414 = vmatpush1.msra.mxu0 %v769
    %1415 = vmatprep.subr.mxu0 %v778
    %1416 = vmatpush1.msra.mxu0 %v777
    %1417 = vmatprep.subr.mxu0 %v786
    %1418 = vmatpush1.msra.mxu0 %v785
    %1419 = vmatprep.subr.mxu0 %v794
    %1420 = vmatpush1.msra.mxu0 %v793
    %1421 = vmatprep.subr.mxu0 %v802
    %1422 = vmatpush1.msra.mxu0 %v801
    %1423 = vmatprep.subr.mxu0 %v810
    %1424 = vmatpush1.msra.mxu0 %v809
    %1425 = vmatprep.subr.mxu0 %v818
    %1426 = vmatpush1.msra.mxu0 %v817
    %1427 = vmatprep.subr.mxu0 %v826
    %1428 = vmatpush1.msra.mxu0 %v825
    %1429 = vmatprep.subr.mxu0 %v834
    %1430 = vmatpush1.msra.mxu0 %v833
    %1431 = vmatprep.subr.mxu0 %v842
    %1432 = vmatpush1.msra.mxu0 %v841
    %1433 = vmatprep.subr.mxu0 %v850
    %1434 = vmatpush1.msra.mxu0 %v849
    %1435 = vmatprep.subr.mxu0 %v858
    %1436 = vmatpush1.msra.mxu0 %v857
    %1437 = vmatprep.subr.mxu0 %v866
    %1438 = vmatpush1.msra.mxu0 %v865
    %1439 = vmatprep.subr.mxu0 %v874
    %1440 = vmatpush1.msra.mxu0 %v873
    %1441 = vmatprep.subr.mxu0 %v882
    %1442 = vmatpush1.msra.mxu0 %v881
    %1443 = vmatprep.subr.mxu0 %v890
    %1444 = vmatpush1.msra.mxu0 %v889
    %1445 = vmatprep.mubr.f32.mxu0 %v1229
    %1446 = vmatmul.mubr.f32.gmra.mrb[0].mxu0 %v1221
    %v1447 = vpop.f32.mrb[0].mxu0
    %v1448 = vadd.f32 %v1377, %v1447
    %v1449 = vpop.f32.mrb[0].mxu0
    %v1450 = vadd.f32 %v1379, %v1449
    %1451 = vdwg.mxu0
    %1452 = vmatprep.subr.mxu0 %v898
    %1453 = vmatpush1.msra.mxu0 %v897
    %1454 = vmatprep.subr.mxu0 %v906
    %1455 = vmatpush1.msra.mxu0 %v905
    %1456 = vmatprep.subr.mxu0 %v914
    %1457 = vmatpush1.msra.mxu0 %v913
    %1458 = vmatprep.subr.mxu0 %v922
    %1459 = vmatpush1.msra.mxu0 %v921
    %1460 = vmatprep.subr.mxu0 %v930
    %1461 = vmatpush1.msra.mxu0 %v929
    %1462 = vmatprep.subr.mxu0 %v938
    %1463 = vmatpush1.msra.mxu0 %v937
    %1464 = vmatprep.subr.mxu0 %v946
    %1465 = vmatpush1.msra.mxu0 %v945
    %1466 = vmatprep.subr.mxu0 %v954
    %1467 = vmatpush1.msra.mxu0 %v953
    %1468 = vmatprep.subr.mxu0 %v962
    %1469 = vmatpush1.msra.mxu0 %v961
    %1470 = vmatprep.subr.mxu0 %v970
    %1471 = vmatpush1.msra.mxu0 %v969
    %1472 = vmatprep.subr.mxu0 %v978
    %1473 = vmatpush1.msra.mxu0 %v977
    %1474 = vmatprep.subr.mxu0 %v986
    %1475 = vmatpush1.msra.mxu0 %v985
    %1476 = vmatprep.subr.mxu0 %v994
    %1477 = vmatpush1.msra.mxu0 %v993
    %1478 = vmatprep.subr.mxu0 %v1002
    %1479 = vmatpush1.msra.mxu0 %v1001
    %1480 = vmatprep.subr.mxu0 %v1010
    %1481 = vmatpush1.msra.mxu0 %v1009
    %1482 = vmatprep.subr.mxu0 %v1018
    %1483 = vmatpush1.msra.mxu0 %v1017
    %1484 = vmatprep.subr.mxu0 %v1026
    %1485 = vmatpush1.msra.mxu0 %v1025
    %1486 = vmatprep.subr.mxu0 %v1034
    %1487 = vmatpush1.msra.mxu0 %v1033
    %1488 = vmatprep.subr.mxu0 %v1042
    %1489 = vmatpush1.msra.mxu0 %v1041
    %1490 = vmatprep.subr.mxu0 %v1050
    %1491 = vmatpush1.msra.mxu0 %v1049
    %1492 = vmatprep.subr.mxu0 %v1058
    %1493 = vmatpush1.msra.mxu0 %v1057
    %1494 = vmatprep.subr.mxu0 %v1066
    %1495 = vmatpush1.msra.mxu0 %v1065
    %1496 = vmatprep.subr.mxu0 %v1074
    %1497 = vmatpush1.msra.mxu0 %v1073
    %1498 = vmatprep.subr.mxu0 %v1082
    %1499 = vmatpush1.msra.mxu0 %v1081
    %1500 = vmatprep.subr.mxu0 %v1090
    %1501 = vmatpush1.msra.mxu0 %v1089
    %1502 = vmatprep.subr.mxu0 %v1098
    %1503 = vmatpush1.msra.mxu0 %v1097
    %1504 = vmatprep.subr.mxu0 %v1106
    %1505 = vmatpush1.msra.mxu0 %v1105
    %1506 = vmatprep.subr.mxu0 %v1114
    %1507 = vmatpush1.msra.mxu0 %v1113
    %1508 = vmatprep.subr.mxu0 %v1122
    %1509 = vmatpush1.msra.mxu0 %v1121
    %1510 = vmatprep.subr.mxu0 %v1130
    %1511 = vmatpush1.msra.mxu0 %v1129
    %1512 = vmatprep.subr.mxu0 %v1138
    %1513 = vmatpush1.msra.mxu0 %v1137
    %1514 = vmatprep.subr.mxu0 %v1146
    %1515 = vmatpush1.msra.mxu0 %v1145
    %1516 = vmatprep.mubr.f32.mxu0 %v1230
    %1517 = vmatmul.mubr.f32.gmra.mrb[0].mxu0 %v1228
    %v1518 = vpop.f32.mrb[0].mxu0
    %v1519 = vadd.f32 %v1448, %v1518
    %v1520 = vpop.f32.mrb[0].mxu0
    %v1521 = vadd.f32 %v1450, %v1520
    %1522 = vdwg.mxu0
    %1523 = vmatprep.subr.mxu0 %v132
    %1524 = vmatpush1.msra.mxu0 %v131
    %1525 = vmatprep.subr.mxu0 %v140
    %1526 = vmatpush1.msra.mxu0 %v139
    %1527 = vmatprep.subr.mxu0 %v148
    %1528 = vmatpush1.msra.mxu0 %v147
    %1529 = vmatprep.subr.mxu0 %v156
    %1530 = vmatpush1.msra.mxu0 %v155
    %1531 = vmatprep.subr.mxu0 %v164
    %1532 = vmatpush1.msra.mxu0 %v163
    %1533 = vmatprep.subr.mxu0 %v172
    %1534 = vmatpush1.msra.mxu0 %v171
    %1535 = vmatprep.subr.mxu0 %v180
    %1536 = vmatpush1.msra.mxu0 %v179
    %1537 = vmatprep.subr.mxu0 %v188
    %1538 = vmatpush1.msra.mxu0 %v187
    %1539 = vmatprep.subr.mxu0 %v196
    %1540 = vmatpush1.msra.mxu0 %v195
    %1541 = vmatprep.subr.mxu0 %v204
    %1542 = vmatpush1.msra.mxu0 %v203
    %1543 = vmatprep.subr.mxu0 %v212
    %1544 = vmatpush1.msra.mxu0 %v211
    %1545 = vmatprep.subr.mxu0 %v220
    %1546 = vmatpush1.msra.mxu0 %v219
    %1547 = vmatprep.subr.mxu0 %v228
    %1548 = vmatpush1.msra.mxu0 %v227
    %1549 = vmatprep.subr.mxu0 %v236
    %1550 = vmatpush1.msra.mxu0 %v235
    %1551 = vmatprep.subr.mxu0 %v244
    %1552 = vmatpush1.msra.mxu0 %v243
    %1553 = vmatprep.subr.mxu0 %v252
    %1554 = vmatpush1.msra.mxu0 %v251
    %1555 = vmatprep.subr.mxu0 %v260
    %1556 = vmatpush1.msra.mxu0 %v259
    %1557 = vmatprep.subr.mxu0 %v268
    %1558 = vmatpush1.msra.mxu0 %v267
    %1559 = vmatprep.subr.mxu0 %v276
    %1560 = vmatpush1.msra.mxu0 %v275
    %1561 = vmatprep.subr.mxu0 %v284
    %1562 = vmatpush1.msra.mxu0 %v283
    %1563 = vmatprep.subr.mxu0 %v292
    %1564 = vmatpush1.msra.mxu0 %v291
    %1565 = vmatprep.subr.mxu0 %v300
    %1566 = vmatpush1.msra.mxu0 %v299
    %1567 = vmatprep.subr.mxu0 %v308
    %1568 = vmatpush1.msra.mxu0 %v307
    %1569 = vmatprep.subr.mxu0 %v316
    %1570 = vmatpush1.msra.mxu0 %v315
    %1571 = vmatprep.subr.mxu0 %v324
    %1572 = vmatpush1.msra.mxu0 %v323
    %1573 = vmatprep.subr.mxu0 %v332
    %1574 = vmatpush1.msra.mxu0 %v331
    %1575 = vmatprep.subr.mxu0 %v340
    %1576 = vmatpush1.msra.mxu0 %v339
    %1577 = vmatprep.subr.mxu0 %v348
    %1578 = vmatpush1.msra.mxu0 %v347
    %1579 = vmatprep.subr.mxu0 %v356
    %1580 = vmatpush1.msra.mxu0 %v355
    %1581 = vmatprep.subr.mxu0 %v364
    %1582 = vmatpush1.msra.mxu0 %v363
    %1583 = vmatprep.subr.mxu0 %v372
    %1584 = vmatpush1.msra.mxu0 %v371
    %1585 = vmatprep.subr.mxu0 %v380
    %1586 = vmatpush1.msra.mxu0 %v379
    %1587 = vmatprep.mubr.f32.mxu0 %v1212
    %1588 = vmatmul.mubr.f32.gmra.mrb[0].mxu0 %v1204
    %v1589 = vpop.f32.mrb[0].mxu0
    %v1590 = vadd.f32 %v1166, %v1589
    %v1591 = vpop.f32.mrb[0].mxu0
    %v1592 = vadd.f32 %v1170, %v1591
    %1593 = vdwg.mxu0
    %1594 = vmatprep.subr.mxu0 %v388
    %1595 = vmatpush1.msra.mxu0 %v387
    %1596 = vmatprep.subr.mxu0 %v396
    %1597 = vmatpush1.msra.mxu0 %v395
    %1598 = vmatprep.subr.mxu0 %v404
    %1599 = vmatpush1.msra.mxu0 %v403
    %1600 = vmatprep.subr.mxu0 %v412
    %1601 = vmatpush1.msra.mxu0 %v411
    %1602 = vmatprep.subr.mxu0 %v420
    %1603 = vmatpush1.msra.mxu0 %v419
    %1604 = vmatprep.subr.mxu0 %v428
    %1605 = vmatpush1.msra.mxu0 %v427
    %1606 = vmatprep.subr.mxu0 %v436
    %1607 = vmatpush1.msra.mxu0 %v435
    %1608 = vmatprep.subr.mxu0 %v444
    %1609 = vmatpush1.msra.mxu0 %v443
    %1610 = vmatprep.subr.mxu0 %v452
    %1611 = vmatpush1.msra.mxu0 %v451
    %1612 = vmatprep.subr.mxu0 %v460
    %1613 = vmatpush1.msra.mxu0 %v459
    %1614 = vmatprep.subr.mxu0 %v468
    %1615 = vmatpush1.msra.mxu0 %v467
    %1616 = vmatprep.subr.mxu0 %v476
    %1617 = vmatpush1.msra.mxu0 %v475
    %1618 = vmatprep.subr.mxu0 %v484
    %1619 = vmatpush1.msra.mxu0 %v483
    %1620 = vmatprep.subr.mxu0 %v492
    %1621 = vmatpush1.msra.mxu0 %v491
    %1622 = vmatprep.subr.mxu0 %v500
    %1623 = vmatpush1.msra.mxu0 %v499
    %1624 = vmatprep.subr.mxu0 %v508
    %1625 = vmatpush1.msra.mxu0 %v507
    %1626 = vmatprep.subr.mxu0 %v516
    %1627 = vmatpush1.msra.mxu0 %v515
    %1628 = vmatprep.subr.mxu0 %v524
    %1629 = vmatpush1.msra.mxu0 %v523
    %1630 = vmatprep.subr.mxu0 %v532
    %1631 = vmatpush1.msra.mxu0 %v531
    %1632 = vmatprep.subr.mxu0 %v540
    %1633 = vmatpush1.msra.mxu0 %v539
    %1634 = vmatprep.subr.mxu0 %v548
    %1635 = vmatpush1.msra.mxu0 %v547
    %1636 = vmatprep.subr.mxu0 %v556
    %1637 = vmatpush1.msra.mxu0 %v555
    %1638 = vmatprep.subr.mxu0 %v564
    %1639 = vmatpush1.msra.mxu0 %v563
    %1640 = vmatprep.subr.mxu0 %v572
    %1641 = vmatpush1.msra.mxu0 %v571
    %1642 = vmatprep.subr.mxu0 %v580
    %1643 = vmatpush1.msra.mxu0 %v579
    %1644 = vmatprep.subr.mxu0 %v588
    %1645 = vmatpush1.msra.mxu0 %v587
    %1646 = vmatprep.subr.mxu0 %v596
    %1647 = vmatpush1.msra.mxu0 %v595
    %1648 = vmatprep.subr.mxu0 %v604
    %1649 = vmatpush1.msra.mxu0 %v603
    %1650 = vmatprep.subr.mxu0 %v612
    %1651 = vmatpush1.msra.mxu0 %v611
    %1652 = vmatprep.subr.mxu0 %v620
    %1653 = vmatpush1.msra.mxu0 %v619
    %1654 = vmatprep.subr.mxu0 %v628
    %1655 = vmatpush1.msra.mxu0 %v627
    %1656 = vmatprep.subr.mxu0 %v636
    %1657 = vmatpush1.msra.mxu0 %v635
    %1658 = vmatprep.mubr.f32.mxu0 %v1213
    %1659 = vmatmul.mubr.f32.gmra.mrb[0].mxu0 %v1211
    %v1660 = vpop.f32.mrb[0].mxu0
    %v1661 = vadd.f32 %v1590, %v1660
    %v1662 = vpop.f32.mrb[0].mxu0
    %v1663 = vadd.f32 %v1592, %v1662
    %1664 = vdwg.mxu0
    %1665 = vmatprep.subr.mxu0 %v644
    %1666 = vmatpush1.msra.mxu0 %v643
    %1667 = vmatprep.subr.mxu0 %v652
    %1668 = vmatpush1.msra.mxu0 %v651
    %1669 = vmatprep.subr.mxu0 %v660
    %1670 = vmatpush1.msra.mxu0 %v659
    %1671 = vmatprep.subr.mxu0 %v668
    %1672 = vmatpush1.msra.mxu0 %v667
    %1673 = vmatprep.subr.mxu0 %v676
    %1674 = vmatpush1.msra.mxu0 %v675
    %1675 = vmatprep.subr.mxu0 %v684
    %1676 = vmatpush1.msra.mxu0 %v683
    %1677 = vmatprep.subr.mxu0 %v692
    %1678 = vmatpush1.msra.mxu0 %v691
    %1679 = vmatprep.subr.mxu0 %v700
    %1680 = vmatpush1.msra.mxu0 %v699
    %1681 = vmatprep.subr.mxu0 %v708
    %1682 = vmatpush1.msra.mxu0 %v707
    %1683 = vmatprep.subr.mxu0 %v716
    %1684 = vmatpush1.msra.mxu0 %v715
    %1685 = vmatprep.subr.mxu0 %v724
    %1686 = vmatpush1.msra.mxu0 %v723
    %1687 = vmatprep.subr.mxu0 %v732
    %1688 = vmatpush1.msra.mxu0 %v731
    %1689 = vmatprep.subr.mxu0 %v740
    %1690 = vmatpush1.msra.mxu0 %v739
    %1691 = vmatprep.subr.mxu0 %v748
    %1692 = vmatpush1.msra.mxu0 %v747
    %1693 = vmatprep.subr.mxu0 %v756
    %1694 = vmatpush1.msra.mxu0 %v755
    %1695 = vmatprep.subr.mxu0 %v764
    %1696 = vmatpush1.msra.mxu0 %v763
    %1697 = vmatprep.subr.mxu0 %v772
    %1698 = vmatpush1.msra.mxu0 %v771
    %1699 = vmatprep.subr.mxu0 %v780
    %1700 = vmatpush1.msra.mxu0 %v779
    %1701 = vmatprep.subr.mxu0 %v788
    %1702 = vmatpush1.msra.mxu0 %v787
    %1703 = vmatprep.subr.mxu0 %v796
    %1704 = vmatpush1.msra.mxu0 %v795
    %1705 = vmatprep.subr.mxu0 %v804
    %1706 = vmatpush1.msra.mxu0 %v803
    %1707 = vmatprep.subr.mxu0 %v812
    %1708 = vmatpush1.msra.mxu0 %v811
    %1709 = vmatprep.subr.mxu0 %v820
    %1710 = vmatpush1.msra.mxu0 %v819
    %1711 = vmatprep.subr.mxu0 %v828
    %1712 = vmatpush1.msra.mxu0 %v827
    %1713 = vmatprep.subr.mxu0 %v836
    %1714 = vmatpush1.msra.mxu0 %v835
    %1715 = vmatprep.subr.mxu0 %v844
    %1716 = vmatpush1.msra.mxu0 %v843
    %1717 = vmatprep.subr.mxu0 %v852
    %1718 = vmatpush1.msra.mxu0 %v851
    %1719 = vmatprep.subr.mxu0 %v860
    %1720 = vmatpush1.msra.mxu0 %v859
    %1721 = vmatprep.subr.mxu0 %v868
    %1722 = vmatpush1.msra.mxu0 %v867
    %1723 = vmatprep.subr.mxu0 %v876
    %1724 = vmatpush1.msra.mxu0 %v875
    %1725 = vmatprep.subr.mxu0 %v884
    %1726 = vmatpush1.msra.mxu0 %v883
    %1727 = vmatprep.subr.mxu0 %v892
    %1728 = vmatpush1.msra.mxu0 %v891
    %1729 = vmatprep.mubr.f32.mxu0 %v1229
    %1730 = vmatmul.mubr.f32.gmra.mrb[0].mxu0 %v1221
    %v1731 = vpop.f32.mrb[0].mxu0
    %v1732 = vadd.f32 %v1661, %v1731
    %v1733 = vpop.f32.mrb[0].mxu0
    %v1734 = vadd.f32 %v1663, %v1733
    %1735 = vdwg.mxu0
    %1736 = vmatprep.subr.mxu0 %v900
    %1737 = vmatpush1.msra.mxu0 %v899
    %1738 = vmatprep.subr.mxu0 %v908
    %1739 = vmatpush1.msra.mxu0 %v907
    %1740 = vmatprep.subr.mxu0 %v916
    %1741 = vmatpush1.msra.mxu0 %v915
    %1742 = vmatprep.subr.mxu0 %v924
    %1743 = vmatpush1.msra.mxu0 %v923
    %1744 = vmatprep.subr.mxu0 %v932
    %1745 = vmatpush1.msra.mxu0 %v931
    %1746 = vmatprep.subr.mxu0 %v940
    %1747 = vmatpush1.msra.mxu0 %v939
    %1748 = vmatprep.subr.mxu0 %v948
    %1749 = vmatpush1.msra.mxu0 %v947
    %1750 = vmatprep.subr.mxu0 %v956
    %1751 = vmatpush1.msra.mxu0 %v955
    %1752 = vmatprep.subr.mxu0 %v964
    %1753 = vmatpush1.msra.mxu0 %v963
    %1754 = vmatprep.subr.mxu0 %v972
    %1755 = vmatpush1.msra.mxu0 %v971
    %1756 = vmatprep.subr.mxu0 %v980
    %1757 = vmatpush1.msra.mxu0 %v979
    %1758 = vmatprep.subr.mxu0 %v988
    %1759 = vmatpush1.msra.mxu0 %v987
    %1760 = vmatprep.subr.mxu0 %v996
    %1761 = vmatpush1.msra.mxu0 %v995
    %1762 = vmatprep.subr.mxu0 %v1004
    %1763 = vmatpush1.msra.mxu0 %v1003
    %1764 = vmatprep.subr.mxu0 %v1012
    %1765 = vmatpush1.msra.mxu0 %v1011
    %1766 = vmatprep.subr.mxu0 %v1020
    %1767 = vmatpush1.msra.mxu0 %v1019
    %1768 = vmatprep.subr.mxu0 %v1028
    %1769 = vmatpush1.msra.mxu0 %v1027
    %1770 = vmatprep.subr.mxu0 %v1036
    %1771 = vmatpush1.msra.mxu0 %v1035
    %1772 = vmatprep.subr.mxu0 %v1044
    %1773 = vmatpush1.msra.mxu0 %v1043
    %1774 = vmatprep.subr.mxu0 %v1052
    %1775 = vmatpush1.msra.mxu0 %v1051
    %1776 = vmatprep.subr.mxu0 %v1060
    %1777 = vmatpush1.msra.mxu0 %v1059
    %1778 = vmatprep.subr.mxu0 %v1068
    %1779 = vmatpush1.msra.mxu0 %v1067
    %1780 = vmatprep.subr.mxu0 %v1076
    %1781 = vmatpush1.msra.mxu0 %v1075
    %1782 = vmatprep.subr.mxu0 %v1084
    %1783 = vmatpush1.msra.mxu0 %v1083
    %1784 = vmatprep.subr.mxu0 %v1092
    %1785 = vmatpush1.msra.mxu0 %v1091
    %1786 = vmatprep.subr.mxu0 %v1100
    %1787 = vmatpush1.msra.mxu0 %v1099
    %1788 = vmatprep.subr.mxu0 %v1108
    %1789 = vmatpush1.msra.mxu0 %v1107
    %1790 = vmatprep.subr.mxu0 %v1116
    %1791 = vmatpush1.msra.mxu0 %v1115
    %1792 = vmatprep.subr.mxu0 %v1124
    %1793 = vmatpush1.msra.mxu0 %v1123
    %1794 = vmatprep.subr.mxu0 %v1132
    %1795 = vmatpush1.msra.mxu0 %v1131
    %1796 = vmatprep.subr.mxu0 %v1140
    %1797 = vmatpush1.msra.mxu0 %v1139
    %1798 = vmatprep.subr.mxu0 %v1148
    %1799 = vmatpush1.msra.mxu0 %v1147
    %1800 = vmatprep.mubr.f32.mxu0 %v1230
    %1801 = vmatmul.mubr.f32.gmra.mrb[0].mxu0 %v1228
    %v1802 = vpop.f32.mrb[0].mxu0
    %v1803 = vadd.f32 %v1732, %v1802
    %v1804 = vpop.f32.mrb[0].mxu0
    %v1805 = vadd.f32 %v1734, %v1804
    %1806 = vdwg.mxu0
    %1807 = vmatprep.subr.mxu0 %v134
    %1808 = vmatpush1.msra.mxu0 %v133
    %1809 = vmatprep.subr.mxu0 %v142
    %1810 = vmatpush1.msra.mxu0 %v141
    %1811 = vmatprep.subr.mxu0 %v150
    %1812 = vmatpush1.msra.mxu0 %v149
    %1813 = vmatprep.subr.mxu0 %v158
    %1814 = vmatpush1.msra.mxu0 %v157
    %1815 = vmatprep.subr.mxu0 %v166
    %1816 = vmatpush1.msra.mxu0 %v165
    %1817 = vmatprep.subr.mxu0 %v174
    %1818 = vmatpush1.msra.mxu0 %v173
    %1819 = vmatprep.subr.mxu0 %v182
    %1820 = vmatpush1.msra.mxu0 %v181
    %1821 = vmatprep.subr.mxu0 %v190
    %1822 = vmatpush1.msra.mxu0 %v189
    %1823 = vmatprep.subr.mxu0 %v198
    %1824 = vmatpush1.msra.mxu0 %v197
    %1825 = vmatprep.subr.mxu0 %v206
    %1826 = vmatpush1.msra.mxu0 %v205
    %1827 = vmatprep.subr.mxu0 %v214
    %1828 = vmatpush1.msra.mxu0 %v213
    %1829 = vmatprep.subr.mxu0 %v222
    %1830 = vmatpush1.msra.mxu0 %v221
    %1831 = vmatprep.subr.mxu0 %v230
    %1832 = vmatpush1.msra.mxu0 %v229
    %1833 = vmatprep.subr.mxu0 %v238
    %1834 = vmatpush1.msra.mxu0 %v237
    %1835 = vmatprep.subr.mxu0 %v246
    %1836 = vmatpush1.msra.mxu0 %v245
    %1837 = vmatprep.subr.mxu0 %v254
    %1838 = vmatpush1.msra.mxu0 %v253
    %1839 = vmatprep.subr.mxu0 %v262
    %1840 = vmatpush1.msra.mxu0 %v261
    %1841 = vmatprep.subr.mxu0 %v270
    %1842 = vmatpush1.msra.mxu0 %v269
    %1843 = vmatprep.subr.mxu0 %v278
    %1844 = vmatpush1.msra.mxu0 %v277
    %1845 = vmatprep.subr.mxu0 %v286
    %1846 = vmatpush1.msra.mxu0 %v285
    %1847 = vmatprep.subr.mxu0 %v294
    %1848 = vmatpush1.msra.mxu0 %v293
    %1849 = vmatprep.subr.mxu0 %v302
    %1850 = vmatpush1.msra.mxu0 %v301
    %1851 = vmatprep.subr.mxu0 %v310
    %1852 = vmatpush1.msra.mxu0 %v309
    %1853 = vmatprep.subr.mxu0 %v318
    %1854 = vmatpush1.msra.mxu0 %v317
    %1855 = vmatprep.subr.mxu0 %v326
    %1856 = vmatpush1.msra.mxu0 %v325
    %1857 = vmatprep.subr.mxu0 %v334
    %1858 = vmatpush1.msra.mxu0 %v333
    %1859 = vmatprep.subr.mxu0 %v342
    %1860 = vmatpush1.msra.mxu0 %v341
    %1861 = vmatprep.subr.mxu0 %v350
    %1862 = vmatpush1.msra.mxu0 %v349
    %1863 = vmatprep.subr.mxu0 %v358
    %1864 = vmatpush1.msra.mxu0 %v357
    %1865 = vmatprep.subr.mxu0 %v366
    %1866 = vmatpush1.msra.mxu0 %v365
    %1867 = vmatprep.subr.mxu0 %v374
    %1868 = vmatpush1.msra.mxu0 %v373
    %1869 = vmatprep.subr.mxu0 %v382
    %1870 = vmatpush1.msra.mxu0 %v381
    %1871 = vmatprep.mubr.f32.mxu0 %v1212
    %1872 = vmatmul.mubr.f32.gmra.mrb[0].mxu0 %v1204
    %v1873 = vpop.f32.mrb[0].mxu0
    %v1874 = vadd.f32 %v1174, %v1873
    %v1875 = vpop.f32.mrb[0].mxu0
    %v1876 = vadd.f32 %v1178, %v1875
    %1877 = vdwg.mxu0
    %1878 = vmatprep.subr.mxu0 %v390
    %1879 = vmatpush1.msra.mxu0 %v389
    %1880 = vmatprep.subr.mxu0 %v398
    %1881 = vmatpush1.msra.mxu0 %v397
    %1882 = vmatprep.subr.mxu0 %v406
    %1883 = vmatpush1.msra.mxu0 %v405
    %1884 = vmatprep.subr.mxu0 %v414
    %1885 = vmatpush1.msra.mxu0 %v413
    %1886 = vmatprep.subr.mxu0 %v422
    %1887 = vmatpush1.msra.mxu0 %v421
    %1888 = vmatprep.subr.mxu0 %v430
    %1889 = vmatpush1.msra.mxu0 %v429
    %1890 = vmatprep.subr.mxu0 %v438
    %1891 = vmatpush1.msra.mxu0 %v437
    %1892 = vmatprep.subr.mxu0 %v446
    %1893 = vmatpush1.msra.mxu0 %v445
    %1894 = vmatprep.subr.mxu0 %v454
    %1895 = vmatpush1.msra.mxu0 %v453
    %1896 = vmatprep.subr.mxu0 %v462
    %1897 = vmatpush1.msra.mxu0 %v461
    %1898 = vmatprep.subr.mxu0 %v470
    %1899 = vmatpush1.msra.mxu0 %v469
    %1900 = vmatprep.subr.mxu0 %v478
    %1901 = vmatpush1.msra.mxu0 %v477
    %1902 = vmatprep.subr.mxu0 %v486
    %1903 = vmatpush1.msra.mxu0 %v485
    %1904 = vmatprep.subr.mxu0 %v494
    %1905 = vmatpush1.msra.mxu0 %v493
    %1906 = vmatprep.subr.mxu0 %v502
    %1907 = vmatpush1.msra.mxu0 %v501
    %1908 = vmatprep.subr.mxu0 %v510
    %1909 = vmatpush1.msra.mxu0 %v509
    %1910 = vmatprep.subr.mxu0 %v518
    %1911 = vmatpush1.msra.mxu0 %v517
    %1912 = vmatprep.subr.mxu0 %v526
    %1913 = vmatpush1.msra.mxu0 %v525
    %1914 = vmatprep.subr.mxu0 %v534
    %1915 = vmatpush1.msra.mxu0 %v533
    %1916 = vmatprep.subr.mxu0 %v542
    %1917 = vmatpush1.msra.mxu0 %v541
    %1918 = vmatprep.subr.mxu0 %v550
    %1919 = vmatpush1.msra.mxu0 %v549
    %1920 = vmatprep.subr.mxu0 %v558
    %1921 = vmatpush1.msra.mxu0 %v557
    %1922 = vmatprep.subr.mxu0 %v566
    %1923 = vmatpush1.msra.mxu0 %v565
    %1924 = vmatprep.subr.mxu0 %v574
    %1925 = vmatpush1.msra.mxu0 %v573
    %1926 = vmatprep.subr.mxu0 %v582
    %1927 = vmatpush1.msra.mxu0 %v581
    %1928 = vmatprep.subr.mxu0 %v590
    %1929 = vmatpush1.msra.mxu0 %v589
    %1930 = vmatprep.subr.mxu0 %v598
    %1931 = vmatpush1.msra.mxu0 %v597
    %1932 = vmatprep.subr.mxu0 %v606
    %1933 = vmatpush1.msra.mxu0 %v605
    %1934 = vmatprep.subr.mxu0 %v614
    %1935 = vmatpush1.msra.mxu0 %v613
    %1936 = vmatprep.subr.mxu0 %v622
    %1937 = vmatpush1.msra.mxu0 %v621
    %1938 = vmatprep.subr.mxu0 %v630
    %1939 = vmatpush1.msra.mxu0 %v629
    %1940 = vmatprep.subr.mxu0 %v638
    %1941 = vmatpush1.msra.mxu0 %v637
    %1942 = vmatprep.mubr.f32.mxu0 %v1213
    %1943 = vmatmul.mubr.f32.gmra.mrb[0].mxu0 %v1211
    %v1944 = vpop.f32.mrb[0].mxu0
    %v1945 = vadd.f32 %v1874, %v1944
    %v1946 = vpop.f32.mrb[0].mxu0
    %v1947 = vadd.f32 %v1876, %v1946
    %1948 = vdwg.mxu0
    %1949 = vmatprep.subr.mxu0 %v646
    %1950 = vmatpush1.msra.mxu0 %v645
    %1951 = vmatprep.subr.mxu0 %v654
    %1952 = vmatpush1.msra.mxu0 %v653
    %1953 = vmatprep.subr.mxu0 %v662
    %1954 = vmatpush1.msra.mxu0 %v661
    %1955 = vmatprep.subr.mxu0 %v670
    %1956 = vmatpush1.msra.mxu0 %v669
    %1957 = vmatprep.subr.mxu0 %v678
    %1958 = vmatpush1.msra.mxu0 %v677
    %1959 = vmatprep.subr.mxu0 %v686
    %1960 = vmatpush1.msra.mxu0 %v685
    %1961 = vmatprep.subr.mxu0 %v694
    %1962 = vmatpush1.msra.mxu0 %v693
    %1963 = vmatprep.subr.mxu0 %v702
    %1964 = vmatpush1.msra.mxu0 %v701
    %1965 = vmatprep.subr.mxu0 %v710
    %1966 = vmatpush1.msra.mxu0 %v709
    %1967 = vmatprep.subr.mxu0 %v718
    %1968 = vmatpush1.msra.mxu0 %v717
    %1969 = vmatprep.subr.mxu0 %v726
    %1970 = vmatpush1.msra.mxu0 %v725
    %1971 = vmatprep.subr.mxu0 %v734
    %1972 = vmatpush1.msra.mxu0 %v733
    %1973 = vmatprep.subr.mxu0 %v742
    %1974 = vmatpush1.msra.mxu0 %v741
    %1975 = vmatprep.subr.mxu0 %v750
    %1976 = vmatpush1.msra.mxu0 %v749
    %1977 = vmatprep.subr.mxu0 %v758
    %1978 = vmatpush1.msra.mxu0 %v757
    %1979 = vmatprep.subr.mxu0 %v766
    %1980 = vmatpush1.msra.mxu0 %v765
    %1981 = vmatprep.subr.mxu0 %v774
    %1982 = vmatpush1.msra.mxu0 %v773
    %1983 = vmatprep.subr.mxu0 %v782
    %1984 = vmatpush1.msra.mxu0 %v781
    %1985 = vmatprep.subr.mxu0 %v790
    %1986 = vmatpush1.msra.mxu0 %v789
    %1987 = vmatprep.subr.mxu0 %v798
    %1988 = vmatpush1.msra.mxu0 %v797
    %1989 = vmatprep.subr.mxu0 %v806
    %1990 = vmatpush1.msra.mxu0 %v805
    %1991 = vmatprep.subr.mxu0 %v814
    %1992 = vmatpush1.msra.mxu0 %v813
    %1993 = vmatprep.subr.mxu0 %v822
    %1994 = vmatpush1.msra.mxu0 %v821
    %1995 = vmatprep.subr.mxu0 %v830
    %1996 = vmatpush1.msra.mxu0 %v829
    %1997 = vmatprep.subr.mxu0 %v838
    %1998 = vmatpush1.msra.mxu0 %v837
    %1999 = vmatprep.subr.mxu0 %v846
    %2000 = vmatpush1.msra.mxu0 %v845
    %2001 = vmatprep.subr.mxu0 %v854
    %2002 = vmatpush1.msra.mxu0 %v853
    %2003 = vmatprep.subr.mxu0 %v862
    %2004 = vmatpush1.msra.mxu0 %v861
    %2005 = vmatprep.subr.mxu0 %v870
    %2006 = vmatpush1.msra.mxu0 %v869
    %2007 = vmatprep.subr.mxu0 %v878
    %2008 = vmatpush1.msra.mxu0 %v877
    %2009 = vmatprep.subr.mxu0 %v886
    %2010 = vmatpush1.msra.mxu0 %v885
    %2011 = vmatprep.subr.mxu0 %v894
    %2012 = vmatpush1.msra.mxu0 %v893
    %2013 = vmatprep.mubr.f32.mxu0 %v1229
    %2014 = vmatmul.mubr.f32.gmra.mrb[0].mxu0 %v1221
    %v2015 = vpop.f32.mrb[0].mxu0
    %v2016 = vadd.f32 %v1945, %v2015
    %v2017 = vpop.f32.mrb[0].mxu0
    %v2018 = vadd.f32 %v1947, %v2017
    %2019 = vdwg.mxu0
    %2020 = vmatprep.subr.mxu0 %v902
    %2021 = vmatpush1.msra.mxu0 %v901
    %2022 = vmatprep.subr.mxu0 %v910
    %2023 = vmatpush1.msra.mxu0 %v909
    %2024 = vmatprep.subr.mxu0 %v918
    %2025 = vmatpush1.msra.mxu0 %v917
    %2026 = vmatprep.subr.mxu0 %v926
    %2027 = vmatpush1.msra.mxu0 %v925
    %2028 = vmatprep.subr.mxu0 %v934
    %2029 = vmatpush1.msra.mxu0 %v933
    %2030 = vmatprep.subr.mxu0 %v942
    %2031 = vmatpush1.msra.mxu0 %v941
    %2032 = vmatprep.subr.mxu0 %v950
    %2033 = vmatpush1.msra.mxu0 %v949
    %2034 = vmatprep.subr.mxu0 %v958
    %2035 = vmatpush1.msra.mxu0 %v957
    %2036 = vmatprep.subr.mxu0 %v966
    %2037 = vmatpush1.msra.mxu0 %v965
    %2038 = vmatprep.subr.mxu0 %v974
    %2039 = vmatpush1.msra.mxu0 %v973
    %2040 = vmatprep.subr.mxu0 %v982
    %2041 = vmatpush1.msra.mxu0 %v981
    %2042 = vmatprep.subr.mxu0 %v990
    %2043 = vmatpush1.msra.mxu0 %v989
    %2044 = vmatprep.subr.mxu0 %v998
    %2045 = vmatpush1.msra.mxu0 %v997
    %2046 = vmatprep.subr.mxu0 %v1006
    %2047 = vmatpush1.msra.mxu0 %v1005
    %2048 = vmatprep.subr.mxu0 %v1014
    %2049 = vmatpush1.msra.mxu0 %v1013
    %2050 = vmatprep.subr.mxu0 %v1022
    %2051 = vmatpush1.msra.mxu0 %v1021
    %2052 = vmatprep.subr.mxu0 %v1030
    %2053 = vmatpush1.msra.mxu0 %v1029
    %2054 = vmatprep.subr.mxu0 %v1038
    %2055 = vmatpush1.msra.mxu0 %v1037
    %2056 = vmatprep.subr.mxu0 %v1046
    %2057 = vmatpush1.msra.mxu0 %v1045
    %2058 = vmatprep.subr.mxu0 %v1054
    %2059 = vmatpush1.msra.mxu0 %v1053
    %2060 = vmatprep.subr.mxu0 %v1062
    %2061 = vmatpush1.msra.mxu0 %v1061
    %2062 = vmatprep.subr.mxu0 %v1070
    %2063 = vmatpush1.msra.mxu0 %v1069
    %2064 = vmatprep.subr.mxu0 %v1078
    %2065 = vmatpush1.msra.mxu0 %v1077
    %2066 = vmatprep.subr.mxu0 %v1086
    %2067 = vmatpush1.msra.mxu0 %v1085
    %2068 = vmatprep.subr.mxu0 %v1094
    %2069 = vmatpush1.msra.mxu0 %v1093
    %2070 = vmatprep.subr.mxu0 %v1102
    %2071 = vmatpush1.msra.mxu0 %v1101
    %2072 = vmatprep.subr.mxu0 %v1110
    %2073 = vmatpush1.msra.mxu0 %v1109
    %2074 = vmatprep.subr.mxu0 %v1118
    %2075 = vmatpush1.msra.mxu0 %v1117
    %2076 = vmatprep.subr.mxu0 %v1126
    %2077 = vmatpush1.msra.mxu0 %v1125
    %2078 = vmatprep.subr.mxu0 %v1134
    %2079 = vmatpush1.msra.mxu0 %v1133
    %2080 = vmatprep.subr.mxu0 %v1142
    %2081 = vmatpush1.msra.mxu0 %v1141
    %2082 = vmatprep.subr.mxu0 %v1150
    %2083 = vmatpush1.msra.mxu0 %v1149
    %2084 = vmatprep.mubr.f32.mxu0 %v1230
    %2085 = vmatmul.mubr.f32.gmra.mrb[0].mxu0 %v1228
    %v2086 = vpop.f32.mrb[0].mxu0
    %v2087 = vadd.f32 %v2016, %v2086
    %v2088 = vpop.f32.mrb[0].mxu0
    %v2089 = vadd.f32 %v2018, %v2088
    %2090 = vdwg.mxu0
    %2091 = vmatprep.subr.mxu0 %v136
    %2092 = vmatpush1.msra.mxu0 %v135
    %2093 = vmatprep.subr.mxu0 %v144
    %2094 = vmatpush1.msra.mxu0 %v143
    %2095 = vmatprep.subr.mxu0 %v152
    %2096 = vmatpush1.msra.mxu0 %v151
    %2097 = vmatprep.subr.mxu0 %v160
    %2098 = vmatpush1.msra.mxu0 %v159
    %2099 = vmatprep.subr.mxu0 %v168
    %2100 = vmatpush1.msra.mxu0 %v167
    %2101 = vmatprep.subr.mxu0 %v176
    %2102 = vmatpush1.msra.mxu0 %v175
    %2103 = vmatprep.subr.mxu0 %v184
    %2104 = vmatpush1.msra.mxu0 %v183
    %2105 = vmatprep.subr.mxu0 %v192
    %2106 = vmatpush1.msra.mxu0 %v191
    %2107 = vmatprep.subr.mxu0 %v200
    %2108 = vmatpush1.msra.mxu0 %v199
    %2109 = vmatprep.subr.mxu0 %v208
    %2110 = vmatpush1.msra.mxu0 %v207
    %2111 = vmatprep.subr.mxu0 %v216
    %2112 = vmatpush1.msra.mxu0 %v215
    %2113 = vmatprep.subr.mxu0 %v224
    %2114 = vmatpush1.msra.mxu0 %v223
    %2115 = vmatprep.subr.mxu0 %v232
    %2116 = vmatpush1.msra.mxu0 %v231
    %2117 = vmatprep.subr.mxu0 %v240
    %2118 = vmatpush1.msra.mxu0 %v239
    %2119 = vmatprep.subr.mxu0 %v248
    %2120 = vmatpush1.msra.mxu0 %v247
    %2121 = vmatprep.subr.mxu0 %v256
    %2122 = vmatpush1.msra.mxu0 %v255
    %2123 = vmatprep.subr.mxu0 %v264
    %2124 = vmatpush1.msra.mxu0 %v263
    %2125 = vmatprep.subr.mxu0 %v272
    %2126 = vmatpush1.msra.mxu0 %v271
    %2127 = vmatprep.subr.mxu0 %v280
    %2128 = vmatpush1.msra.mxu0 %v279
    %2129 = vmatprep.subr.mxu0 %v288
    %2130 = vmatpush1.msra.mxu0 %v287
    %2131 = vmatprep.subr.mxu0 %v296
    %2132 = vmatpush1.msra.mxu0 %v295
    %2133 = vmatprep.subr.mxu0 %v304
    %2134 = vmatpush1.msra.mxu0 %v303
    %2135 = vmatprep.subr.mxu0 %v312
    %2136 = vmatpush1.msra.mxu0 %v311
    %2137 = vmatprep.subr.mxu0 %v320
    %2138 = vmatpush1.msra.mxu0 %v319
    %2139 = vmatprep.subr.mxu0 %v328
    %2140 = vmatpush1.msra.mxu0 %v327
    %2141 = vmatprep.subr.mxu0 %v336
    %2142 = vmatpush1.msra.mxu0 %v335
    %2143 = vmatprep.subr.mxu0 %v344
    %2144 = vmatpush1.msra.mxu0 %v343
    %2145 = vmatprep.subr.mxu0 %v352
    %2146 = vmatpush1.msra.mxu0 %v351
    %2147 = vmatprep.subr.mxu0 %v360
    %2148 = vmatpush1.msra.mxu0 %v359
    %2149 = vmatprep.subr.mxu0 %v368
    %2150 = vmatpush1.msra.mxu0 %v367
    %2151 = vmatprep.subr.mxu0 %v376
    %2152 = vmatpush1.msra.mxu0 %v375
    %2153 = vmatprep.subr.mxu0 %v384
    %2154 = vmatpush1.msra.mxu0 %v383
    %2155 = vmatprep.mubr.f32.mxu0 %v1212
    %2156 = vmatmul.mubr.f32.gmra.mrb[0].mxu0 %v1204
    %v2157 = vpop.f32.mrb[0].mxu0
    %v2158 = vadd.f32 %v1182, %v2157
    %v2159 = vpop.f32.mrb[0].mxu0
    %v2160 = vadd.f32 %v1186, %v2159
    %2161 = vdwg.mxu0
    %2162 = vmatprep.subr.mxu0 %v392
    %2163 = vmatpush1.msra.mxu0 %v391
    %2164 = vmatprep.subr.mxu0 %v400
    %2165 = vmatpush1.msra.mxu0 %v399
    %2166 = vmatprep.subr.mxu0 %v408
    %2167 = vmatpush1.msra.mxu0 %v407
    %2168 = vmatprep.subr.mxu0 %v416
    %2169 = vmatpush1.msra.mxu0 %v415
    %2170 = vmatprep.subr.mxu0 %v424
    %2171 = vmatpush1.msra.mxu0 %v423
    %2172 = vmatprep.subr.mxu0 %v432
    %2173 = vmatpush1.msra.mxu0 %v431
    %2174 = vmatprep.subr.mxu0 %v440
    %2175 = vmatpush1.msra.mxu0 %v439
    %2176 = vmatprep.subr.mxu0 %v448
    %2177 = vmatpush1.msra.mxu0 %v447
    %2178 = vmatprep.subr.mxu0 %v456
    %2179 = vmatpush1.msra.mxu0 %v455
    %2180 = vmatprep.subr.mxu0 %v464
    %2181 = vmatpush1.msra.mxu0 %v463
    %2182 = vmatprep.subr.mxu0 %v472
    %2183 = vmatpush1.msra.mxu0 %v471
    %2184 = vmatprep.subr.mxu0 %v480
    %2185 = vmatpush1.msra.mxu0 %v479
    %2186 = vmatprep.subr.mxu0 %v488
    %2187 = vmatpush1.msra.mxu0 %v487
    %2188 = vmatprep.subr.mxu0 %v496
    %2189 = vmatpush1.msra.mxu0 %v495
    %2190 = vmatprep.subr.mxu0 %v504
    %2191 = vmatpush1.msra.mxu0 %v503
    %2192 = vmatprep.subr.mxu0 %v512
    %2193 = vmatpush1.msra.mxu0 %v511
    %2194 = vmatprep.subr.mxu0 %v520
    %2195 = vmatpush1.msra.mxu0 %v519
    %2196 = vmatprep.subr.mxu0 %v528
    %2197 = vmatpush1.msra.mxu0 %v527
    %2198 = vmatprep.subr.mxu0 %v536
    %2199 = vmatpush1.msra.mxu0 %v535
    %2200 = vmatprep.subr.mxu0 %v544
    %2201 = vmatpush1.msra.mxu0 %v543
    %2202 = vmatprep.subr.mxu0 %v552
    %2203 = vmatpush1.msra.mxu0 %v551
    %2204 = vmatprep.subr.mxu0 %v560
    %2205 = vmatpush1.msra.mxu0 %v559
    %2206 = vmatprep.subr.mxu0 %v568
    %2207 = vmatpush1.msra.mxu0 %v567
    %2208 = vmatprep.subr.mxu0 %v576
    %2209 = vmatpush1.msra.mxu0 %v575
    %2210 = vmatprep.subr.mxu0 %v584
    %2211 = vmatpush1.msra.mxu0 %v583
    %2212 = vmatprep.subr.mxu0 %v592
    %2213 = vmatpush1.msra.mxu0 %v591
    %2214 = vmatprep.subr.mxu0 %v600
    %2215 = vmatpush1.msra.mxu0 %v599
    %2216 = vmatprep.subr.mxu0 %v608
    %2217 = vmatpush1.msra.mxu0 %v607
    %2218 = vmatprep.subr.mxu0 %v616
    %2219 = vmatpush1.msra.mxu0 %v615
    %2220 = vmatprep.subr.mxu0 %v624
    %2221 = vmatpush1.msra.mxu0 %v623
    %2222 = vmatprep.subr.mxu0 %v632
    %2223 = vmatpush1.msra.mxu0 %v631
    %2224 = vmatprep.subr.mxu0 %v640
    %2225 = vmatpush1.msra.mxu0 %v639
    %2226 = vmatprep.mubr.f32.mxu0 %v1213
    %2227 = vmatmul.mubr.f32.gmra.mrb[0].mxu0 %v1211
    %v2228 = vpop.f32.mrb[0].mxu0
    %v2229 = vadd.f32 %v2158, %v2228
    %v2230 = vpop.f32.mrb[0].mxu0
    %v2231 = vadd.f32 %v2160, %v2230
    %2232 = vdwg.mxu0
    %2233 = vmatprep.subr.mxu0 %v648
    %2234 = vmatpush1.msra.mxu0 %v647
    %2235 = vmatprep.subr.mxu0 %v656
    %2236 = vmatpush1.msra.mxu0 %v655
    %2237 = vmatprep.subr.mxu0 %v664
    %2238 = vmatpush1.msra.mxu0 %v663
    %2239 = vmatprep.subr.mxu0 %v672
    %2240 = vmatpush1.msra.mxu0 %v671
    %2241 = vmatprep.subr.mxu0 %v680
    %2242 = vmatpush1.msra.mxu0 %v679
    %2243 = vmatprep.subr.mxu0 %v688
    %2244 = vmatpush1.msra.mxu0 %v687
    %2245 = vmatprep.subr.mxu0 %v696
    %2246 = vmatpush1.msra.mxu0 %v695
    %2247 = vmatprep.subr.mxu0 %v704
    %2248 = vmatpush1.msra.mxu0 %v703
    %2249 = vmatprep.subr.mxu0 %v712
    %2250 = vmatpush1.msra.mxu0 %v711
    %2251 = vmatprep.subr.mxu0 %v720
    %2252 = vmatpush1.msra.mxu0 %v719
    %2253 = vmatprep.subr.mxu0 %v728
    %2254 = vmatpush1.msra.mxu0 %v727
    %2255 = vmatprep.subr.mxu0 %v736
    %2256 = vmatpush1.msra.mxu0 %v735
    %2257 = vmatprep.subr.mxu0 %v744
    %2258 = vmatpush1.msra.mxu0 %v743
    %2259 = vmatprep.subr.mxu0 %v752
    %2260 = vmatpush1.msra.mxu0 %v751
    %2261 = vmatprep.subr.mxu0 %v760
    %2262 = vmatpush1.msra.mxu0 %v759
    %2263 = vmatprep.subr.mxu0 %v768
    %2264 = vmatpush1.msra.mxu0 %v767
    %2265 = vmatprep.subr.mxu0 %v776
    %2266 = vmatpush1.msra.mxu0 %v775
    %2267 = vmatprep.subr.mxu0 %v784
    %2268 = vmatpush1.msra.mxu0 %v783
    %2269 = vmatprep.subr.mxu0 %v792
    %2270 = vmatpush1.msra.mxu0 %v791
    %2271 = vmatprep.subr.mxu0 %v800
    %2272 = vmatpush1.msra.mxu0 %v799
    %2273 = vmatprep.subr.mxu0 %v808
    %2274 = vmatpush1.msra.mxu0 %v807
    %2275 = vmatprep.subr.mxu0 %v816
    %2276 = vmatpush1.msra.mxu0 %v815
    %2277 = vmatprep.subr.mxu0 %v824
    %2278 = vmatpush1.msra.mxu0 %v823
    %2279 = vmatprep.subr.mxu0 %v832
    %2280 = vmatpush1.msra.mxu0 %v831
    %2281 = vmatprep.subr.mxu0 %v840
    %2282 = vmatpush1.msra.mxu0 %v839
    %2283 = vmatprep.subr.mxu0 %v848
    %2284 = vmatpush1.msra.mxu0 %v847
    %2285 = vmatprep.subr.mxu0 %v856
    %2286 = vmatpush1.msra.mxu0 %v855
    %2287 = vmatprep.subr.mxu0 %v864
    %2288 = vmatpush1.msra.mxu0 %v863
    %2289 = vmatprep.subr.mxu0 %v872
    %2290 = vmatpush1.msra.mxu0 %v871
    %2291 = vmatprep.subr.mxu0 %v880
    %2292 = vmatpush1.msra.mxu0 %v879
    %2293 = vmatprep.subr.mxu0 %v888
    %2294 = vmatpush1.msra.mxu0 %v887
    %2295 = vmatprep.subr.mxu0 %v896
    %2296 = vmatpush1.msra.mxu0 %v895
    %2297 = vmatprep.mubr.f32.mxu0 %v1229
    %2298 = vmatmul.mubr.f32.gmra.mrb[0].mxu0 %v1221
    %v2299 = vpop.f32.mrb[0].mxu0
    %v2300 = vadd.f32 %v2229, %v2299
    %v2301 = vpop.f32.mrb[0].mxu0
    %v2302 = vadd.f32 %v2231, %v2301
    %2303 = vdwg.mxu0
    %2304 = vmatprep.subr.mxu0 %v904
    %2305 = vmatpush1.msra.mxu0 %v903
    %2306 = vmatprep.subr.mxu0 %v912
    %2307 = vmatpush1.msra.mxu0 %v911
    %2308 = vmatprep.subr.mxu0 %v920
    %2309 = vmatpush1.msra.mxu0 %v919
    %2310 = vmatprep.subr.mxu0 %v928
    %2311 = vmatpush1.msra.mxu0 %v927
    %2312 = vmatprep.subr.mxu0 %v936
    %2313 = vmatpush1.msra.mxu0 %v935
    %2314 = vmatprep.subr.mxu0 %v944
    %2315 = vmatpush1.msra.mxu0 %v943
    %2316 = vmatprep.subr.mxu0 %v952
    %2317 = vmatpush1.msra.mxu0 %v951
    %2318 = vmatprep.subr.mxu0 %v960
    %2319 = vmatpush1.msra.mxu0 %v959
    %2320 = vmatprep.subr.mxu0 %v968
    %2321 = vmatpush1.msra.mxu0 %v967
    %2322 = vmatprep.subr.mxu0 %v976
    %2323 = vmatpush1.msra.mxu0 %v975
    %2324 = vmatprep.subr.mxu0 %v984
    %2325 = vmatpush1.msra.mxu0 %v983
    %2326 = vmatprep.subr.mxu0 %v992
    %2327 = vmatpush1.msra.mxu0 %v991
    %2328 = vmatprep.subr.mxu0 %v1000
    %2329 = vmatpush1.msra.mxu0 %v999
    %2330 = vmatprep.subr.mxu0 %v1008
    %2331 = vmatpush1.msra.mxu0 %v1007
    %2332 = vmatprep.subr.mxu0 %v1016
    %2333 = vmatpush1.msra.mxu0 %v1015
    %2334 = vmatprep.subr.mxu0 %v1024
    %2335 = vmatpush1.msra.mxu0 %v1023
    %2336 = vmatprep.subr.mxu0 %v1032
    %2337 = vmatpush1.msra.mxu0 %v1031
    %2338 = vmatprep.subr.mxu0 %v1040
    %2339 = vmatpush1.msra.mxu0 %v1039
    %2340 = vmatprep.subr.mxu0 %v1048
    %2341 = vmatpush1.msra.mxu0 %v1047
    %2342 = vmatprep.subr.mxu0 %v1056
    %2343 = vmatpush1.msra.mxu0 %v1055
    %2344 = vmatprep.subr.mxu0 %v1064
    %2345 = vmatpush1.msra.mxu0 %v1063
    %2346 = vmatprep.subr.mxu0 %v1072
    %2347 = vmatpush1.msra.mxu0 %v1071
    %2348 = vmatprep.subr.mxu0 %v1080
    %2349 = vmatpush1.msra.mxu0 %v1079
    %2350 = vmatprep.subr.mxu0 %v1088
    %2351 = vmatpush1.msra.mxu0 %v1087
    %2352 = vmatprep.subr.mxu0 %v1096
    %2353 = vmatpush1.msra.mxu0 %v1095
    %2354 = vmatprep.subr.mxu0 %v1104
    %2355 = vmatpush1.msra.mxu0 %v1103
    %2356 = vmatprep.subr.mxu0 %v1112
    %2357 = vmatpush1.msra.mxu0 %v1111
    %2358 = vmatprep.subr.mxu0 %v1120
    %2359 = vmatpush1.msra.mxu0 %v1119
    %2360 = vmatprep.subr.mxu0 %v1128
    %2361 = vmatpush1.msra.mxu0 %v1127
    %2362 = vmatprep.subr.mxu0 %v1136
    %2363 = vmatpush1.msra.mxu0 %v1135
    %2364 = vmatprep.subr.mxu0 %v1144
    %2365 = vmatpush1.msra.mxu0 %v1143
    %2366 = vmatprep.subr.mxu0 %v1152
    %2367 = vmatpush1.msra.mxu0 %v1151
    %2368 = vmatprep.mubr.f32.mxu0 %v1230
    %2369 = vmatmul.mubr.f32.gmra.mrb[0].mxu0 %v1228
    %v2370 = vpop.f32.mrb[0].mxu0
    %v2371 = vadd.f32 %v2300, %v2370
    %v2372 = vpop.f32.mrb[0].mxu0
    %v2373 = vadd.f32 %v2302, %v2372
    %2374 = vdwg.mxu0
    %vm2375 = vcmp.ge.f32.partialorder %v1519, 0.0
    %vm2376 = vcmp.ge.f32.partialorder %v1521, 0.0
    %vm2377 = vcmp.ge.f32.partialorder %v1803, 0.0
    %vm2378 = vcmp.ge.f32.partialorder %v1805, 0.0
    %vm2379 = vcmp.ge.f32.partialorder %v2087, 0.0
    %vm2380 = vcmp.ge.f32.partialorder %v2089, 0.0
    %vm2381 = vcmp.ge.f32.partialorder %v2371, 0.0
    %vm2382 = vcmp.ge.f32.partialorder %v2373, 0.0
    %v2383 = vmul.f32 %v1519, 0.2
    %v2384 = vmul.f32 %v1521, 0.2
    %v2385 = vmul.f32 %v1803, 0.2
    %v2386 = vmul.f32 %v1805, 0.2
    %v2387 = vmul.f32 %v2087, 0.2
    %v2388 = vmul.f32 %v2089, 0.2
    %v2389 = vmul.f32 %v2371, 0.2
    %v2390 = vmul.f32 %v2373, 0.2
    %v2391 = vsel %vm2375, %v1519, %v2383
    %v2392 = vsel %vm2376, %v1521, %v2384
    %v2393 = vsel %vm2377, %v1803, %v2385
    %v2394 = vsel %vm2378, %v1805, %v2386
    %v2395 = vsel %vm2379, %v2087, %v2387
    %v2396 = vsel %vm2380, %v2089, %v2388
    %v2397 = vsel %vm2381, %v2371, %v2389
    %v2398 = vsel %vm2382, %v2373, %v2390
    %v2399 = vld [vmem:[#allocation7] sm:$0xff]
    %v2400 = vld [vmem:[#allocation7 + $0x8] sm:$0xff]
    %v2401 = vld [vmem:[#allocation7 + $0x10] sm:$0xff]
    %v2402 = vld [vmem:[#allocation7 + $0x18] sm:$0xff]
    %v2403 = vld [vmem:[#allocation7 + $0x20] sm:$0xff]
    %v2404 = vld [vmem:[#allocation7 + $0x28] sm:$0xff]
    %v2405 = vld [vmem:[#allocation7 + $0x30] sm:$0xff]
    %v2406 = vld [vmem:[#allocation7 + $0x38] sm:$0xff]
    %v2407 = vld [vmem:[#allocation7 + $0x40] sm:$0xff]
    %v2408 = vld [vmem:[#allocation7 + $0x48] sm:$0xff]
    %v2409 = vld [vmem:[#allocation7 + $0x50] sm:$0xff]
    %v2410 = vld [vmem:[#allocation7 + $0x58] sm:$0xff]
    %v2411 = vld [vmem:[#allocation7 + $0x60] sm:$0xff]
    %v2412 = vld [vmem:[#allocation7 + $0x68] sm:$0xff]
    %v2413 = vld [vmem:[#allocation7 + $0x70] sm:$0xff]
    %v2414 = vld [vmem:[#allocation7 + $0x78] sm:$0xff]
    %v2415 = vld [vmem:[#allocation7 + $0x80] sm:$0xff]
    %v2416 = vld [vmem:[#allocation7 + $0x88] sm:$0xff]
    %v2417 = vld [vmem:[#allocation7 + $0x90] sm:$0xff]
    %v2418 = vld [vmem:[#allocation7 + $0x98] sm:$0xff]
    %v2419 = vld [vmem:[#allocation7 + $0xa0] sm:$0xff]
    %v2420 = vld [vmem:[#allocation7 + $0xa8] sm:$0xff]
    %v2421 = vld [vmem:[#allocation7 + $0xb0] sm:$0xff]
    %v2422 = vld [vmem:[#allocation7 + $0xb8] sm:$0xff]
    %v2423 = vld [vmem:[#allocation7 + $0xc0] sm:$0xff]
    %v2424 = vld [vmem:[#allocation7 + $0xc8] sm:$0xff]
    %v2425 = vld [vmem:[#allocation7 + $0xd0] sm:$0xff]
    %v2426 = vld [vmem:[#allocation7 + $0xd8] sm:$0xff]
    %v2427 = vld [vmem:[#allocation7 + $0xe0] sm:$0xff]
    %v2428 = vld [vmem:[#allocation7 + $0xe8] sm:$0xff]
    %v2429 = vld [vmem:[#allocation7 + $0xf0] sm:$0xff]
    %v2430 = vld [vmem:[#allocation7 + $0xf8] sm:$0xff]
    %v2431 = vld [vmem:[#allocation7 + $0x100] sm:$0xff]
    %v2432 = vld [vmem:[#allocation7 + $0x108] sm:$0xff]
    %v2433 = vld [vmem:[#allocation7 + $0x110] sm:$0xff]
    %v2434 = vld [vmem:[#allocation7 + $0x118] sm:$0xff]
    %v2435 = vld [vmem:[#allocation7 + $0x120] sm:$0xff]
    %v2436 = vld [vmem:[#allocation7 + $0x128] sm:$0xff]
    %v2437 = vld [vmem:[#allocation7 + $0x130] sm:$0xff]
    %v2438 = vld [vmem:[#allocation7 + $0x138] sm:$0xff]
    %v2439 = vld [vmem:[#allocation7 + $0x140] sm:$0xff]
    %v2440 = vld [vmem:[#allocation7 + $0x148] sm:$0xff]
    %v2441 = vld [vmem:[#allocation7 + $0x150] sm:$0xff]
    %v2442 = vld [vmem:[#allocation7 + $0x158] sm:$0xff]
    %v2443 = vld [vmem:[#allocation7 + $0x160] sm:$0xff]
    %v2444 = vld [vmem:[#allocation7 + $0x168] sm:$0xff]
    %v2445 = vld [vmem:[#allocation7 + $0x170] sm:$0xff]
    %v2446 = vld [vmem:[#allocation7 + $0x178] sm:$0xff]
    %v2447 = vld [vmem:[#allocation7 + $0x180] sm:$0xff]
    %v2448 = vld [vmem:[#allocation7 + $0x188] sm:$0xff]
    %v2449 = vld [vmem:[#allocation7 + $0x190] sm:$0xff]
    %v2450 = vld [vmem:[#allocation7 + $0x198] sm:$0xff]
    %v2451 = vld [vmem:[#allocation7 + $0x1a0] sm:$0xff]
    %v2452 = vld [vmem:[#allocation7 + $0x1a8] sm:$0xff]
    %v2453 = vld [vmem:[#allocation7 + $0x1b0] sm:$0xff]
    %v2454 = vld [vmem:[#allocation7 + $0x1b8] sm:$0xff]
    %v2455 = vld [vmem:[#allocation7 + $0x1c0] sm:$0xff]
    %v2456 = vld [vmem:[#allocation7 + $0x1c8] sm:$0xff]
    %v2457 = vld [vmem:[#allocation7 + $0x1d0] sm:$0xff]
    %v2458 = vld [vmem:[#allocation7 + $0x1d8] sm:$0xff]
    %v2459 = vld [vmem:[#allocation7 + $0x1e0] sm:$0xff]
    %v2460 = vld [vmem:[#allocation7 + $0x1e8] sm:$0xff]
    %v2461 = vld [vmem:[#allocation7 + $0x1f0] sm:$0xff]
    %v2462 = vld [vmem:[#allocation7 + $0x1f8] sm:$0xff]
    %v2463 = vld [vmem:[#allocation7 + $0x200] sm:$0xff]
    %v2464 = vld [vmem:[#allocation7 + $0x208] sm:$0xff]
    %v2465 = vld [vmem:[#allocation7 + $0x210] sm:$0xff]
    %v2466 = vld [vmem:[#allocation7 + $0x218] sm:$0xff]
    %v2467 = vld [vmem:[#allocation7 + $0x220] sm:$0xff]
    %v2468 = vld [vmem:[#allocation7 + $0x228] sm:$0xff]
    %v2469 = vld [vmem:[#allocation7 + $0x230] sm:$0xff]
    %v2470 = vld [vmem:[#allocation7 + $0x238] sm:$0xff]
    %v2471 = vld [vmem:[#allocation7 + $0x240] sm:$0xff]
    %v2472 = vld [vmem:[#allocation7 + $0x248] sm:$0xff]
    %v2473 = vld [vmem:[#allocation7 + $0x250] sm:$0xff]
    %v2474 = vld [vmem:[#allocation7 + $0x258] sm:$0xff]
    %v2475 = vld [vmem:[#allocation7 + $0x260] sm:$0xff]
    %v2476 = vld [vmem:[#allocation7 + $0x268] sm:$0xff]
    %v2477 = vld [vmem:[#allocation7 + $0x270] sm:$0xff]
    %v2478 = vld [vmem:[#allocation7 + $0x278] sm:$0xff]
    %v2479 = vld [vmem:[#allocation7 + $0x280] sm:$0xff]
    %v2480 = vld [vmem:[#allocation7 + $0x288] sm:$0xff]
    %v2481 = vld [vmem:[#allocation7 + $0x290] sm:$0xff]
    %v2482 = vld [vmem:[#allocation7 + $0x298] sm:$0xff]
    %v2483 = vld [vmem:[#allocation7 + $0x2a0] sm:$0xff]
    %v2484 = vld [vmem:[#allocation7 + $0x2a8] sm:$0xff]
    %v2485 = vld [vmem:[#allocation7 + $0x2b0] sm:$0xff]
    %v2486 = vld [vmem:[#allocation7 + $0x2b8] sm:$0xff]
    %v2487 = vld [vmem:[#allocation7 + $0x2c0] sm:$0xff]
    %v2488 = vld [vmem:[#allocation7 + $0x2c8] sm:$0xff]
    %v2489 = vld [vmem:[#allocation7 + $0x2d0] sm:$0xff]
    %v2490 = vld [vmem:[#allocation7 + $0x2d8] sm:$0xff]
    %v2491 = vld [vmem:[#allocation7 + $0x2e0] sm:$0xff]
    %v2492 = vld [vmem:[#allocation7 + $0x2e8] sm:$0xff]
    %v2493 = vld [vmem:[#allocation7 + $0x2f0] sm:$0xff]
    %v2494 = vld [vmem:[#allocation7 + $0x2f8] sm:$0xff]
    %v2495 = vld [vmem:[#allocation7 + $0x300] sm:$0xff]
    %v2496 = vld [vmem:[#allocation7 + $0x308] sm:$0xff]
    %v2497 = vld [vmem:[#allocation7 + $0x310] sm:$0xff]
    %v2498 = vld [vmem:[#allocation7 + $0x318] sm:$0xff]
    %v2499 = vld [vmem:[#allocation7 + $0x320] sm:$0xff]
    %v2500 = vld [vmem:[#allocation7 + $0x328] sm:$0xff]
    %v2501 = vld [vmem:[#allocation7 + $0x330] sm:$0xff]
    %v2502 = vld [vmem:[#allocation7 + $0x338] sm:$0xff]
    %v2503 = vld [vmem:[#allocation7 + $0x340] sm:$0xff]
    %v2504 = vld [vmem:[#allocation7 + $0x348] sm:$0xff]
    %v2505 = vld [vmem:[#allocation7 + $0x350] sm:$0xff]
    %v2506 = vld [vmem:[#allocation7 + $0x358] sm:$0xff]
    %v2507 = vld [vmem:[#allocation7 + $0x360] sm:$0xff]
    %v2508 = vld [vmem:[#allocation7 + $0x368] sm:$0xff]
    %v2509 = vld [vmem:[#allocation7 + $0x370] sm:$0xff]
    %v2510 = vld [vmem:[#allocation7 + $0x378] sm:$0xff]
    %v2511 = vld [vmem:[#allocation7 + $0x380] sm:$0xff]
    %v2512 = vld [vmem:[#allocation7 + $0x388] sm:$0xff]
    %v2513 = vld [vmem:[#allocation7 + $0x390] sm:$0xff]
    %v2514 = vld [vmem:[#allocation7 + $0x398] sm:$0xff]
    %v2515 = vld [vmem:[#allocation7 + $0x3a0] sm:$0xff]
    %v2516 = vld [vmem:[#allocation7 + $0x3a8] sm:$0xff]
    %v2517 = vld [vmem:[#allocation7 + $0x3b0] sm:$0xff]
    %v2518 = vld [vmem:[#allocation7 + $0x3b8] sm:$0xff]
    %v2519 = vld [vmem:[#allocation7 + $0x3c0] sm:$0xff]
    %v2520 = vld [vmem:[#allocation7 + $0x3c8] sm:$0xff]
    %v2521 = vld [vmem:[#allocation7 + $0x3d0] sm:$0xff]
    %v2522 = vld [vmem:[#allocation7 + $0x3d8] sm:$0xff]
    %v2523 = vld [vmem:[#allocation7 + $0x3e0] sm:$0xff]
    %v2524 = vld [vmem:[#allocation7 + $0x3e8] sm:$0xff]
    %v2525 = vld [vmem:[#allocation7 + $0x3f0] sm:$0xff]
    %v2526 = vld [vmem:[#allocation7 + $0x3f8] sm:$0xff]
    %v2527 = vld [vmem:[#allocation7 + $0x400] sm:$0xff]
    %v2528 = vld [vmem:[#allocation7 + $0x408] sm:$0xff]
    %v2529 = vld [vmem:[#allocation7 + $0x410] sm:$0xff]
    %v2530 = vld [vmem:[#allocation7 + $0x418] sm:$0xff]
    %v2531 = vld [vmem:[#allocation7 + $0x420] sm:$0xff]
    %v2532 = vld [vmem:[#allocation7 + $0x428] sm:$0xff]
    %v2533 = vld [vmem:[#allocation7 + $0x430] sm:$0xff]
    %v2534 = vld [vmem:[#allocation7 + $0x438] sm:$0xff]
    %v2535 = vld [vmem:[#allocation7 + $0x440] sm:$0xff]
    %v2536 = vld [vmem:[#allocation7 + $0x448] sm:$0xff]
    %v2537 = vld [vmem:[#allocation7 + $0x450] sm:$0xff]
    %v2538 = vld [vmem:[#allocation7 + $0x458] sm:$0xff]
    %v2539 = vld [vmem:[#allocation7 + $0x460] sm:$0xff]
    %v2540 = vld [vmem:[#allocation7 + $0x468] sm:$0xff]
    %v2541 = vld [vmem:[#allocation7 + $0x470] sm:$0xff]
    %v2542 = vld [vmem:[#allocation7 + $0x478] sm:$0xff]
    %v2543 = vld [vmem:[#allocation7 + $0x480] sm:$0xff]
    %v2544 = vld [vmem:[#allocation7 + $0x488] sm:$0xff]
    %v2545 = vld [vmem:[#allocation7 + $0x490] sm:$0xff]
    %v2546 = vld [vmem:[#allocation7 + $0x498] sm:$0xff]
    %v2547 = vld [vmem:[#allocation7 + $0x4a0] sm:$0xff]
    %v2548 = vld [vmem:[#allocation7 + $0x4a8] sm:$0xff]
    %v2549 = vld [vmem:[#allocation7 + $0x4b0] sm:$0xff]
    %v2550 = vld [vmem:[#allocation7 + $0x4b8] sm:$0xff]
    %v2551 = vld [vmem:[#allocation7 + $0x4c0] sm:$0xff]
    %v2552 = vld [vmem:[#allocation7 + $0x4c8] sm:$0xff]
    %v2553 = vld [vmem:[#allocation7 + $0x4d0] sm:$0xff]
    %v2554 = vld [vmem:[#allocation7 + $0x4d8] sm:$0xff]
    %v2555 = vld [vmem:[#allocation7 + $0x4e0] sm:$0xff]
    %v2556 = vld [vmem:[#allocation7 + $0x4e8] sm:$0xff]
    %v2557 = vld [vmem:[#allocation7 + $0x4f0] sm:$0xff]
    %v2558 = vld [vmem:[#allocation7 + $0x4f8] sm:$0xff]
    %v2559 = vld [vmem:[#allocation7 + $0x500] sm:$0xff]
    %v2560 = vld [vmem:[#allocation7 + $0x508] sm:$0xff]
    %v2561 = vld [vmem:[#allocation7 + $0x510] sm:$0xff]
    %v2562 = vld [vmem:[#allocation7 + $0x518] sm:$0xff]
    %v2563 = vld [vmem:[#allocation7 + $0x520] sm:$0xff]
    %v2564 = vld [vmem:[#allocation7 + $0x528] sm:$0xff]
    %v2565 = vld [vmem:[#allocation7 + $0x530] sm:$0xff]
    %v2566 = vld [vmem:[#allocation7 + $0x538] sm:$0xff]
    %v2567 = vld [vmem:[#allocation7 + $0x540] sm:$0xff]
    %v2568 = vld [vmem:[#allocation7 + $0x548] sm:$0xff]
    %v2569 = vld [vmem:[#allocation7 + $0x550] sm:$0xff]
    %v2570 = vld [vmem:[#allocation7 + $0x558] sm:$0xff]
    %v2571 = vld [vmem:[#allocation7 + $0x560] sm:$0xff]
    %v2572 = vld [vmem:[#allocation7 + $0x568] sm:$0xff]
    %v2573 = vld [vmem:[#allocation7 + $0x570] sm:$0xff]
    %v2574 = vld [vmem:[#allocation7 + $0x578] sm:$0xff]
    %v2575 = vld [vmem:[#allocation7 + $0x580] sm:$0xff]
    %v2576 = vld [vmem:[#allocation7 + $0x588] sm:$0xff]
    %v2577 = vld [vmem:[#allocation7 + $0x590] sm:$0xff]
    %v2578 = vld [vmem:[#allocation7 + $0x598] sm:$0xff]
    %v2579 = vld [vmem:[#allocation7 + $0x5a0] sm:$0xff]
    %v2580 = vld [vmem:[#allocation7 + $0x5a8] sm:$0xff]
    %v2581 = vld [vmem:[#allocation7 + $0x5b0] sm:$0xff]
    %v2582 = vld [vmem:[#allocation7 + $0x5b8] sm:$0xff]
    %v2583 = vld [vmem:[#allocation7 + $0x5c0] sm:$0xff]
    %v2584 = vld [vmem:[#allocation7 + $0x5c8] sm:$0xff]
    %v2585 = vld [vmem:[#allocation7 + $0x5d0] sm:$0xff]
    %v2586 = vld [vmem:[#allocation7 + $0x5d8] sm:$0xff]
    %v2587 = vld [vmem:[#allocation7 + $0x5e0] sm:$0xff]
    %v2588 = vld [vmem:[#allocation7 + $0x5e8] sm:$0xff]
    %v2589 = vld [vmem:[#allocation7 + $0x5f0] sm:$0xff]
    %v2590 = vld [vmem:[#allocation7 + $0x5f8] sm:$0xff]
    %v2591 = vld [vmem:[#allocation7 + $0x600] sm:$0xff]
    %v2592 = vld [vmem:[#allocation7 + $0x608] sm:$0xff]
    %v2593 = vld [vmem:[#allocation7 + $0x610] sm:$0xff]
    %v2594 = vld [vmem:[#allocation7 + $0x618] sm:$0xff]
    %v2595 = vld [vmem:[#allocation7 + $0x620] sm:$0xff]
    %v2596 = vld [vmem:[#allocation7 + $0x628] sm:$0xff]
    %v2597 = vld [vmem:[#allocation7 + $0x630] sm:$0xff]
    %v2598 = vld [vmem:[#allocation7 + $0x638] sm:$0xff]
    %v2599 = vld [vmem:[#allocation7 + $0x640] sm:$0xff]
    %v2600 = vld [vmem:[#allocation7 + $0x648] sm:$0xff]
    %v2601 = vld [vmem:[#allocation7 + $0x650] sm:$0xff]
    %v2602 = vld [vmem:[#allocation7 + $0x658] sm:$0xff]
    %v2603 = vld [vmem:[#allocation7 + $0x660] sm:$0xff]
    %v2604 = vld [vmem:[#allocation7 + $0x668] sm:$0xff]
    %v2605 = vld [vmem:[#allocation7 + $0x670] sm:$0xff]
    %v2606 = vld [vmem:[#allocation7 + $0x678] sm:$0xff]
    %v2607 = vld [vmem:[#allocation7 + $0x680] sm:$0xff]
    %v2608 = vld [vmem:[#allocation7 + $0x688] sm:$0xff]
    %v2609 = vld [vmem:[#allocation7 + $0x690] sm:$0xff]
    %v2610 = vld [vmem:[#allocation7 + $0x698] sm:$0xff]
    %v2611 = vld [vmem:[#allocation7 + $0x6a0] sm:$0xff]
    %v2612 = vld [vmem:[#allocation7 + $0x6a8] sm:$0xff]
    %v2613 = vld [vmem:[#allocation7 + $0x6b0] sm:$0xff]
    %v2614 = vld [vmem:[#allocation7 + $0x6b8] sm:$0xff]
    %v2615 = vld [vmem:[#allocation7 + $0x6c0] sm:$0xff]
    %v2616 = vld [vmem:[#allocation7 + $0x6c8] sm:$0xff]
    %v2617 = vld [vmem:[#allocation7 + $0x6d0] sm:$0xff]
    %v2618 = vld [vmem:[#allocation7 + $0x6d8] sm:$0xff]
    %v2619 = vld [vmem:[#allocation7 + $0x6e0] sm:$0xff]
    %v2620 = vld [vmem:[#allocation7 + $0x6e8] sm:$0xff]
    %v2621 = vld [vmem:[#allocation7 + $0x6f0] sm:$0xff]
    %v2622 = vld [vmem:[#allocation7 + $0x6f8] sm:$0xff]
    %v2623 = vld [vmem:[#allocation7 + $0x700] sm:$0xff]
    %v2624 = vld [vmem:[#allocation7 + $0x708] sm:$0xff]
    %v2625 = vld [vmem:[#allocation7 + $0x710] sm:$0xff]
    %v2626 = vld [vmem:[#allocation7 + $0x718] sm:$0xff]
    %v2627 = vld [vmem:[#allocation7 + $0x720] sm:$0xff]
    %v2628 = vld [vmem:[#allocation7 + $0x728] sm:$0xff]
    %v2629 = vld [vmem:[#allocation7 + $0x730] sm:$0xff]
    %v2630 = vld [vmem:[#allocation7 + $0x738] sm:$0xff]
    %v2631 = vld [vmem:[#allocation7 + $0x740] sm:$0xff]
    %v2632 = vld [vmem:[#allocation7 + $0x748] sm:$0xff]
    %v2633 = vld [vmem:[#allocation7 + $0x750] sm:$0xff]
    %v2634 = vld [vmem:[#allocation7 + $0x758] sm:$0xff]
    %v2635 = vld [vmem:[#allocation7 + $0x760] sm:$0xff]
    %v2636 = vld [vmem:[#allocation7 + $0x768] sm:$0xff]
    %v2637 = vld [vmem:[#allocation7 + $0x770] sm:$0xff]
    %v2638 = vld [vmem:[#allocation7 + $0x778] sm:$0xff]
    %v2639 = vld [vmem:[#allocation7 + $0x780] sm:$0xff]
    %v2640 = vld [vmem:[#allocation7 + $0x788] sm:$0xff]
    %v2641 = vld [vmem:[#allocation7 + $0x790] sm:$0xff]
    %v2642 = vld [vmem:[#allocation7 + $0x798] sm:$0xff]
    %v2643 = vld [vmem:[#allocation7 + $0x7a0] sm:$0xff]
    %v2644 = vld [vmem:[#allocation7 + $0x7a8] sm:$0xff]
    %v2645 = vld [vmem:[#allocation7 + $0x7b0] sm:$0xff]
    %v2646 = vld [vmem:[#allocation7 + $0x7b8] sm:$0xff]
    %v2647 = vld [vmem:[#allocation7 + $0x7c0] sm:$0xff]
    %v2648 = vld [vmem:[#allocation7 + $0x7c8] sm:$0xff]
    %v2649 = vld [vmem:[#allocation7 + $0x7d0] sm:$0xff]
    %v2650 = vld [vmem:[#allocation7 + $0x7d8] sm:$0xff]
    %v2651 = vld [vmem:[#allocation7 + $0x7e0] sm:$0xff]
    %v2652 = vld [vmem:[#allocation7 + $0x7e8] sm:$0xff]
    %v2653 = vld [vmem:[#allocation7 + $0x7f0] sm:$0xff]
    %v2654 = vld [vmem:[#allocation7 + $0x7f8] sm:$0xff]
    %v2655 = vld [vmem:[#allocation7 + $0x800] sm:$0xff]
    %v2656 = vld [vmem:[#allocation7 + $0x808] sm:$0xff]
    %v2657 = vld [vmem:[#allocation7 + $0x810] sm:$0xff]
    %v2658 = vld [vmem:[#allocation7 + $0x818] sm:$0xff]
    %v2659 = vld [vmem:[#allocation7 + $0x820] sm:$0xff]
    %v2660 = vld [vmem:[#allocation7 + $0x828] sm:$0xff]
    %v2661 = vld [vmem:[#allocation7 + $0x830] sm:$0xff]
    %v2662 = vld [vmem:[#allocation7 + $0x838] sm:$0xff]
    %v2663 = vld [vmem:[#allocation7 + $0x840] sm:$0xff]
    %v2664 = vld [vmem:[#allocation7 + $0x848] sm:$0xff]
    %v2665 = vld [vmem:[#allocation7 + $0x850] sm:$0xff]
    %v2666 = vld [vmem:[#allocation7 + $0x858] sm:$0xff]
    %v2667 = vld [vmem:[#allocation7 + $0x860] sm:$0xff]
    %v2668 = vld [vmem:[#allocation7 + $0x868] sm:$0xff]
    %v2669 = vld [vmem:[#allocation7 + $0x870] sm:$0xff]
    %v2670 = vld [vmem:[#allocation7 + $0x878] sm:$0xff]
    %v2671 = vld [vmem:[#allocation7 + $0x880] sm:$0xff]
    %v2672 = vld [vmem:[#allocation7 + $0x888] sm:$0xff]
    %v2673 = vld [vmem:[#allocation7 + $0x890] sm:$0xff]
    %v2674 = vld [vmem:[#allocation7 + $0x898] sm:$0xff]
    %v2675 = vld [vmem:[#allocation7 + $0x8a0] sm:$0xff]
    %v2676 = vld [vmem:[#allocation7 + $0x8a8] sm:$0xff]
    %v2677 = vld [vmem:[#allocation7 + $0x8b0] sm:$0xff]
    %v2678 = vld [vmem:[#allocation7 + $0x8b8] sm:$0xff]
    %v2679 = vld [vmem:[#allocation7 + $0x8c0] sm:$0xff]
    %v2680 = vld [vmem:[#allocation7 + $0x8c8] sm:$0xff]
    %v2681 = vld [vmem:[#allocation7 + $0x8d0] sm:$0xff]
    %v2682 = vld [vmem:[#allocation7 + $0x8d8] sm:$0xff]
    %v2683 = vld [vmem:[#allocation7 + $0x8e0] sm:$0xff]
    %v2684 = vld [vmem:[#allocation7 + $0x8e8] sm:$0xff]
    %v2685 = vld [vmem:[#allocation7 + $0x8f0] sm:$0xff]
    %v2686 = vld [vmem:[#allocation7 + $0x8f8] sm:$0xff]
    %v2687 = vld [vmem:[#allocation7 + $0x900] sm:$0xff]
    %v2688 = vld [vmem:[#allocation7 + $0x908] sm:$0xff]
    %v2689 = vld [vmem:[#allocation7 + $0x910] sm:$0xff]
    %v2690 = vld [vmem:[#allocation7 + $0x918] sm:$0xff]
    %v2691 = vld [vmem:[#allocation7 + $0x920] sm:$0xff]
    %v2692 = vld [vmem:[#allocation7 + $0x928] sm:$0xff]
    %v2693 = vld [vmem:[#allocation7 + $0x930] sm:$0xff]
    %v2694 = vld [vmem:[#allocation7 + $0x938] sm:$0xff]
    %v2695 = vld [vmem:[#allocation7 + $0x940] sm:$0xff]
    %v2696 = vld [vmem:[#allocation7 + $0x948] sm:$0xff]
    %v2697 = vld [vmem:[#allocation7 + $0x950] sm:$0xff]
    %v2698 = vld [vmem:[#allocation7 + $0x958] sm:$0xff]
    %v2699 = vld [vmem:[#allocation7 + $0x960] sm:$0xff]
    %v2700 = vld [vmem:[#allocation7 + $0x968] sm:$0xff]
    %v2701 = vld [vmem:[#allocation7 + $0x970] sm:$0xff]
    %v2702 = vld [vmem:[#allocation7 + $0x978] sm:$0xff]
    %v2703 = vld [vmem:[#allocation7 + $0x980] sm:$0xff]
    %v2704 = vld [vmem:[#allocation7 + $0x988] sm:$0xff]
    %v2705 = vld [vmem:[#allocation7 + $0x990] sm:$0xff]
    %v2706 = vld [vmem:[#allocation7 + $0x998] sm:$0xff]
    %v2707 = vld [vmem:[#allocation7 + $0x9a0] sm:$0xff]
    %v2708 = vld [vmem:[#allocation7 + $0x9a8] sm:$0xff]
    %v2709 = vld [vmem:[#allocation7 + $0x9b0] sm:$0xff]
    %v2710 = vld [vmem:[#allocation7 + $0x9b8] sm:$0xff]
    %v2711 = vld [vmem:[#allocation7 + $0x9c0] sm:$0xff]
    %v2712 = vld [vmem:[#allocation7 + $0x9c8] sm:$0xff]
    %v2713 = vld [vmem:[#allocation7 + $0x9d0] sm:$0xff]
    %v2714 = vld [vmem:[#allocation7 + $0x9d8] sm:$0xff]
    %v2715 = vld [vmem:[#allocation7 + $0x9e0] sm:$0xff]
    %v2716 = vld [vmem:[#allocation7 + $0x9e8] sm:$0xff]
    %v2717 = vld [vmem:[#allocation7 + $0x9f0] sm:$0xff]
    %v2718 = vld [vmem:[#allocation7 + $0x9f8] sm:$0xff]
    %v2719 = vld [vmem:[#allocation7 + $0xa00] sm:$0xff]
    %v2720 = vld [vmem:[#allocation7 + $0xa08] sm:$0xff]
    %v2721 = vld [vmem:[#allocation7 + $0xa10] sm:$0xff]
    %v2722 = vld [vmem:[#allocation7 + $0xa18] sm:$0xff]
    %v2723 = vld [vmem:[#allocation7 + $0xa20] sm:$0xff]
    %v2724 = vld [vmem:[#allocation7 + $0xa28] sm:$0xff]
    %v2725 = vld [vmem:[#allocation7 + $0xa30] sm:$0xff]
    %v2726 = vld [vmem:[#allocation7 + $0xa38] sm:$0xff]
    %v2727 = vld [vmem:[#allocation7 + $0xa40] sm:$0xff]
    %v2728 = vld [vmem:[#allocation7 + $0xa48] sm:$0xff]
    %v2729 = vld [vmem:[#allocation7 + $0xa50] sm:$0xff]
    %v2730 = vld [vmem:[#allocation7 + $0xa58] sm:$0xff]
    %v2731 = vld [vmem:[#allocation7 + $0xa60] sm:$0xff]
    %v2732 = vld [vmem:[#allocation7 + $0xa68] sm:$0xff]
    %v2733 = vld [vmem:[#allocation7 + $0xa70] sm:$0xff]
    %v2734 = vld [vmem:[#allocation7 + $0xa78] sm:$0xff]
    %v2735 = vld [vmem:[#allocation7 + $0xa80] sm:$0xff]
    %v2736 = vld [vmem:[#allocation7 + $0xa88] sm:$0xff]
    %v2737 = vld [vmem:[#allocation7 + $0xa90] sm:$0xff]
    %v2738 = vld [vmem:[#allocation7 + $0xa98] sm:$0xff]
    %v2739 = vld [vmem:[#allocation7 + $0xaa0] sm:$0xff]
    %v2740 = vld [vmem:[#allocation7 + $0xaa8] sm:$0xff]
    %v2741 = vld [vmem:[#allocation7 + $0xab0] sm:$0xff]
    %v2742 = vld [vmem:[#allocation7 + $0xab8] sm:$0xff]
    %v2743 = vld [vmem:[#allocation7 + $0xac0] sm:$0xff]
    %v2744 = vld [vmem:[#allocation7 + $0xac8] sm:$0xff]
    %v2745 = vld [vmem:[#allocation7 + $0xad0] sm:$0xff]
    %v2746 = vld [vmem:[#allocation7 + $0xad8] sm:$0xff]
    %v2747 = vld [vmem:[#allocation7 + $0xae0] sm:$0xff]
    %v2748 = vld [vmem:[#allocation7 + $0xae8] sm:$0xff]
    %v2749 = vld [vmem:[#allocation7 + $0xaf0] sm:$0xff]
    %v2750 = vld [vmem:[#allocation7 + $0xaf8] sm:$0xff]
    %v2751 = vld [vmem:[#allocation7 + $0xb00] sm:$0xff]
    %v2752 = vld [vmem:[#allocation7 + $0xb08] sm:$0xff]
    %v2753 = vld [vmem:[#allocation7 + $0xb10] sm:$0xff]
    %v2754 = vld [vmem:[#allocation7 + $0xb18] sm:$0xff]
    %v2755 = vld [vmem:[#allocation7 + $0xb20] sm:$0xff]
    %v2756 = vld [vmem:[#allocation7 + $0xb28] sm:$0xff]
    %v2757 = vld [vmem:[#allocation7 + $0xb30] sm:$0xff]
    %v2758 = vld [vmem:[#allocation7 + $0xb38] sm:$0xff]
    %v2759 = vld [vmem:[#allocation7 + $0xb40] sm:$0xff]
    %v2760 = vld [vmem:[#allocation7 + $0xb48] sm:$0xff]
    %v2761 = vld [vmem:[#allocation7 + $0xb50] sm:$0xff]
    %v2762 = vld [vmem:[#allocation7 + $0xb58] sm:$0xff]
    %v2763 = vld [vmem:[#allocation7 + $0xb60] sm:$0xff]
    %v2764 = vld [vmem:[#allocation7 + $0xb68] sm:$0xff]
    %v2765 = vld [vmem:[#allocation7 + $0xb70] sm:$0xff]
    %v2766 = vld [vmem:[#allocation7 + $0xb78] sm:$0xff]
    %v2767 = vld [vmem:[#allocation7 + $0xb80] sm:$0xff]
    %v2768 = vld [vmem:[#allocation7 + $0xb88] sm:$0xff]
    %v2769 = vld [vmem:[#allocation7 + $0xb90] sm:$0xff]
    %v2770 = vld [vmem:[#allocation7 + $0xb98] sm:$0xff]
    %v2771 = vld [vmem:[#allocation7 + $0xba0] sm:$0xff]
    %v2772 = vld [vmem:[#allocation7 + $0xba8] sm:$0xff]
    %v2773 = vld [vmem:[#allocation7 + $0xbb0] sm:$0xff]
    %v2774 = vld [vmem:[#allocation7 + $0xbb8] sm:$0xff]
    %v2775 = vld [vmem:[#allocation7 + $0xbc0] sm:$0xff]
    %v2776 = vld [vmem:[#allocation7 + $0xbc8] sm:$0xff]
    %v2777 = vld [vmem:[#allocation7 + $0xbd0] sm:$0xff]
    %v2778 = vld [vmem:[#allocation7 + $0xbd8] sm:$0xff]
    %v2779 = vld [vmem:[#allocation7 + $0xbe0] sm:$0xff]
    %v2780 = vld [vmem:[#allocation7 + $0xbe8] sm:$0xff]
    %v2781 = vld [vmem:[#allocation7 + $0xbf0] sm:$0xff]
    %v2782 = vld [vmem:[#allocation7 + $0xbf8] sm:$0xff]
    %v2783 = vld [vmem:[#allocation7 + $0xc00] sm:$0xff]
    %v2784 = vld [vmem:[#allocation7 + $0xc08] sm:$0xff]
    %v2785 = vld [vmem:[#allocation7 + $0xc10] sm:$0xff]
    %v2786 = vld [vmem:[#allocation7 + $0xc18] sm:$0xff]
    %v2787 = vld [vmem:[#allocation7 + $0xc20] sm:$0xff]
    %v2788 = vld [vmem:[#allocation7 + $0xc28] sm:$0xff]
    %v2789 = vld [vmem:[#allocation7 + $0xc30] sm:$0xff]
    %v2790 = vld [vmem:[#allocation7 + $0xc38] sm:$0xff]
    %v2791 = vld [vmem:[#allocation7 + $0xc40] sm:$0xff]
    %v2792 = vld [vmem:[#allocation7 + $0xc48] sm:$0xff]
    %v2793 = vld [vmem:[#allocation7 + $0xc50] sm:$0xff]
    %v2794 = vld [vmem:[#allocation7 + $0xc58] sm:$0xff]
    %v2795 = vld [vmem:[#allocation7 + $0xc60] sm:$0xff]
    %v2796 = vld [vmem:[#allocation7 + $0xc68] sm:$0xff]
    %v2797 = vld [vmem:[#allocation7 + $0xc70] sm:$0xff]
    %v2798 = vld [vmem:[#allocation7 + $0xc78] sm:$0xff]
    %v2799 = vld [vmem:[#allocation7 + $0xc80] sm:$0xff]
    %v2800 = vld [vmem:[#allocation7 + $0xc88] sm:$0xff]
    %v2801 = vld [vmem:[#allocation7 + $0xc90] sm:$0xff]
    %v2802 = vld [vmem:[#allocation7 + $0xc98] sm:$0xff]
    %v2803 = vld [vmem:[#allocation7 + $0xca0] sm:$0xff]
    %v2804 = vld [vmem:[#allocation7 + $0xca8] sm:$0xff]
    %v2805 = vld [vmem:[#allocation7 + $0xcb0] sm:$0xff]
    %v2806 = vld [vmem:[#allocation7 + $0xcb8] sm:$0xff]
    %v2807 = vld [vmem:[#allocation7 + $0xcc0] sm:$0xff]
    %v2808 = vld [vmem:[#allocation7 + $0xcc8] sm:$0xff]
    %v2809 = vld [vmem:[#allocation7 + $0xcd0] sm:$0xff]
    %v2810 = vld [vmem:[#allocation7 + $0xcd8] sm:$0xff]
    %v2811 = vld [vmem:[#allocation7 + $0xce0] sm:$0xff]
    %v2812 = vld [vmem:[#allocation7 + $0xce8] sm:$0xff]
    %v2813 = vld [vmem:[#allocation7 + $0xcf0] sm:$0xff]
    %v2814 = vld [vmem:[#allocation7 + $0xcf8] sm:$0xff]
    %v2815 = vld [vmem:[#allocation7 + $0xd00] sm:$0xff]
    %v2816 = vld [vmem:[#allocation7 + $0xd08] sm:$0xff]
    %v2817 = vld [vmem:[#allocation7 + $0xd10] sm:$0xff]
    %v2818 = vld [vmem:[#allocation7 + $0xd18] sm:$0xff]
    %v2819 = vld [vmem:[#allocation7 + $0xd20] sm:$0xff]
    %v2820 = vld [vmem:[#allocation7 + $0xd28] sm:$0xff]
    %v2821 = vld [vmem:[#allocation7 + $0xd30] sm:$0xff]
    %v2822 = vld [vmem:[#allocation7 + $0xd38] sm:$0xff]
    %v2823 = vld [vmem:[#allocation7 + $0xd40] sm:$0xff]
    %v2824 = vld [vmem:[#allocation7 + $0xd48] sm:$0xff]
    %v2825 = vld [vmem:[#allocation7 + $0xd50] sm:$0xff]
    %v2826 = vld [vmem:[#allocation7 + $0xd58] sm:$0xff]
    %v2827 = vld [vmem:[#allocation7 + $0xd60] sm:$0xff]
    %v2828 = vld [vmem:[#allocation7 + $0xd68] sm:$0xff]
    %v2829 = vld [vmem:[#allocation7 + $0xd70] sm:$0xff]
    %v2830 = vld [vmem:[#allocation7 + $0xd78] sm:$0xff]
    %v2831 = vld [vmem:[#allocation7 + $0xd80] sm:$0xff]
    %v2832 = vld [vmem:[#allocation7 + $0xd88] sm:$0xff]
    %v2833 = vld [vmem:[#allocation7 + $0xd90] sm:$0xff]
    %v2834 = vld [vmem:[#allocation7 + $0xd98] sm:$0xff]
    %v2835 = vld [vmem:[#allocation7 + $0xda0] sm:$0xff]
    %v2836 = vld [vmem:[#allocation7 + $0xda8] sm:$0xff]
    %v2837 = vld [vmem:[#allocation7 + $0xdb0] sm:$0xff]
    %v2838 = vld [vmem:[#allocation7 + $0xdb8] sm:$0xff]
    %v2839 = vld [vmem:[#allocation7 + $0xdc0] sm:$0xff]
    %v2840 = vld [vmem:[#allocation7 + $0xdc8] sm:$0xff]
    %v2841 = vld [vmem:[#allocation7 + $0xdd0] sm:$0xff]
    %v2842 = vld [vmem:[#allocation7 + $0xdd8] sm:$0xff]
    %v2843 = vld [vmem:[#allocation7 + $0xde0] sm:$0xff]
    %v2844 = vld [vmem:[#allocation7 + $0xde8] sm:$0xff]
    %v2845 = vld [vmem:[#allocation7 + $0xdf0] sm:$0xff]
    %v2846 = vld [vmem:[#allocation7 + $0xdf8] sm:$0xff]
    %v2847 = vld [vmem:[#allocation7 + $0xe00] sm:$0xff]
    %v2848 = vld [vmem:[#allocation7 + $0xe08] sm:$0xff]
    %v2849 = vld [vmem:[#allocation7 + $0xe10] sm:$0xff]
    %v2850 = vld [vmem:[#allocation7 + $0xe18] sm:$0xff]
    %v2851 = vld [vmem:[#allocation7 + $0xe20] sm:$0xff]
    %v2852 = vld [vmem:[#allocation7 + $0xe28] sm:$0xff]
    %v2853 = vld [vmem:[#allocation7 + $0xe30] sm:$0xff]
    %v2854 = vld [vmem:[#allocation7 + $0xe38] sm:$0xff]
    %v2855 = vld [vmem:[#allocation7 + $0xe40] sm:$0xff]
    %v2856 = vld [vmem:[#allocation7 + $0xe48] sm:$0xff]
    %v2857 = vld [vmem:[#allocation7 + $0xe50] sm:$0xff]
    %v2858 = vld [vmem:[#allocation7 + $0xe58] sm:$0xff]
    %v2859 = vld [vmem:[#allocation7 + $0xe60] sm:$0xff]
    %v2860 = vld [vmem:[#allocation7 + $0xe68] sm:$0xff]
    %v2861 = vld [vmem:[#allocation7 + $0xe70] sm:$0xff]
    %v2862 = vld [vmem:[#allocation7 + $0xe78] sm:$0xff]
    %v2863 = vld [vmem:[#allocation7 + $0xe80] sm:$0xff]
    %v2864 = vld [vmem:[#allocation7 + $0xe88] sm:$0xff]
    %v2865 = vld [vmem:[#allocation7 + $0xe90] sm:$0xff]
    %v2866 = vld [vmem:[#allocation7 + $0xe98] sm:$0xff]
    %v2867 = vld [vmem:[#allocation7 + $0xea0] sm:$0xff]
    %v2868 = vld [vmem:[#allocation7 + $0xea8] sm:$0xff]
    %v2869 = vld [vmem:[#allocation7 + $0xeb0] sm:$0xff]
    %v2870 = vld [vmem:[#allocation7 + $0xeb8] sm:$0xff]
    %v2871 = vld [vmem:[#allocation7 + $0xec0] sm:$0xff]
    %v2872 = vld [vmem:[#allocation7 + $0xec8] sm:$0xff]
    %v2873 = vld [vmem:[#allocation7 + $0xed0] sm:$0xff]
    %v2874 = vld [vmem:[#allocation7 + $0xed8] sm:$0xff]
    %v2875 = vld [vmem:[#allocation7 + $0xee0] sm:$0xff]
    %v2876 = vld [vmem:[#allocation7 + $0xee8] sm:$0xff]
    %v2877 = vld [vmem:[#allocation7 + $0xef0] sm:$0xff]
    %v2878 = vld [vmem:[#allocation7 + $0xef8] sm:$0xff]
    %v2879 = vld [vmem:[#allocation7 + $0xf00] sm:$0xff]
    %v2880 = vld [vmem:[#allocation7 + $0xf08] sm:$0xff]
    %v2881 = vld [vmem:[#allocation7 + $0xf10] sm:$0xff]
    %v2882 = vld [vmem:[#allocation7 + $0xf18] sm:$0xff]
    %v2883 = vld [vmem:[#allocation7 + $0xf20] sm:$0xff]
    %v2884 = vld [vmem:[#allocation7 + $0xf28] sm:$0xff]
    %v2885 = vld [vmem:[#allocation7 + $0xf30] sm:$0xff]
    %v2886 = vld [vmem:[#allocation7 + $0xf38] sm:$0xff]
    %v2887 = vld [vmem:[#allocation7 + $0xf40] sm:$0xff]
    %v2888 = vld [vmem:[#allocation7 + $0xf48] sm:$0xff]
    %v2889 = vld [vmem:[#allocation7 + $0xf50] sm:$0xff]
    %v2890 = vld [vmem:[#allocation7 + $0xf58] sm:$0xff]
    %v2891 = vld [vmem:[#allocation7 + $0xf60] sm:$0xff]
    %v2892 = vld [vmem:[#allocation7 + $0xf68] sm:$0xff]
    %v2893 = vld [vmem:[#allocation7 + $0xf70] sm:$0xff]
    %v2894 = vld [vmem:[#allocation7 + $0xf78] sm:$0xff]
    %v2895 = vld [vmem:[#allocation7 + $0xf80] sm:$0xff]
    %v2896 = vld [vmem:[#allocation7 + $0xf88] sm:$0xff]
    %v2897 = vld [vmem:[#allocation7 + $0xf90] sm:$0xff]
    %v2898 = vld [vmem:[#allocation7 + $0xf98] sm:$0xff]
    %v2899 = vld [vmem:[#allocation7 + $0xfa0] sm:$0xff]
    %v2900 = vld [vmem:[#allocation7 + $0xfa8] sm:$0xff]
    %v2901 = vld [vmem:[#allocation7 + $0xfb0] sm:$0xff]
    %v2902 = vld [vmem:[#allocation7 + $0xfb8] sm:$0xff]
    %v2903 = vld [vmem:[#allocation7 + $0xfc0] sm:$0xff]
    %v2904 = vld [vmem:[#allocation7 + $0xfc8] sm:$0xff]
    %v2905 = vld [vmem:[#allocation7 + $0xfd0] sm:$0xff]
    %v2906 = vld [vmem:[#allocation7 + $0xfd8] sm:$0xff]
    %v2907 = vld [vmem:[#allocation7 + $0xfe0] sm:$0xff]
    %v2908 = vld [vmem:[#allocation7 + $0xfe8] sm:$0xff]
    %v2909 = vld [vmem:[#allocation7 + $0xff0] sm:$0xff]
    %v2910 = vld [vmem:[#allocation7 + $0xff8] sm:$0xff]
    %v2911 = vld [vmem:[#allocation8] sm:$0xf]
    %v2913 = vlaneseq
    %v2914 = vshrl.u32 %v2913, 7
    %v2915 = vsub.s32 0, %v2914
    %v2916 = vrot.slane %v2911, %v2915
    %v2917 = vlaneseq
    %v2918 = vshrl.u32 %v2917, 7
    %v2919 = vsub.s32 1, %v2918
    %v2920 = vrot.slane %v2911, %v2919
    %v2921 = vlaneseq
    %v2922 = vshrl.u32 %v2921, 7
    %v2923 = vsub.s32 2, %v2922
    %v2924 = vrot.slane %v2911, %v2923
    %v2925 = vlaneseq
    %v2926 = vshrl.u32 %v2925, 7
    %v2927 = vsub.s32 3, %v2926
    %v2928 = vrot.slane %v2911, %v2927
    %2933 = vmatprep.subr.mxu0 %v2400
    %2934 = vmatpush1.msra.mxu0 %v2399
    %2935 = vmatprep.subr.mxu0 %v2404
    %2936 = vmatpush1.msra.mxu0 %v2403
    %2937 = vmatprep.subr.mxu0 %v2408
    %2938 = vmatpush1.msra.mxu0 %v2407
    %2939 = vmatprep.subr.mxu0 %v2412
    %2940 = vmatpush1.msra.mxu0 %v2411
    %2941 = vmatprep.subr.mxu0 %v2416
    %2942 = vmatpush1.msra.mxu0 %v2415
    %2943 = vmatprep.subr.mxu0 %v2420
    %2944 = vmatpush1.msra.mxu0 %v2419
    %2945 = vmatprep.subr.mxu0 %v2424
    %2946 = vmatpush1.msra.mxu0 %v2423
    %2947 = vmatprep.subr.mxu0 %v2428
    %2948 = vmatpush1.msra.mxu0 %v2427
    %2949 = vmatprep.subr.mxu0 %v2432
    %2950 = vmatpush1.msra.mxu0 %v2431
    %2951 = vmatprep.subr.mxu0 %v2436
    %2952 = vmatpush1.msra.mxu0 %v2435
    %2953 = vmatprep.subr.mxu0 %v2440
    %2954 = vmatpush1.msra.mxu0 %v2439
    %2955 = vmatprep.subr.mxu0 %v2444
    %2956 = vmatpush1.msra.mxu0 %v2443
    %2957 = vmatprep.subr.mxu0 %v2448
    %2958 = vmatpush1.msra.mxu0 %v2447
    %2959 = vmatprep.subr.mxu0 %v2452
    %2960 = vmatpush1.msra.mxu0 %v2451
    %2961 = vmatprep.subr.mxu0 %v2456
    %2962 = vmatpush1.msra.mxu0 %v2455
    %2963 = vmatprep.subr.mxu0 %v2460
    %2964 = vmatpush1.msra.mxu0 %v2459
    %2965 = vmatprep.subr.mxu0 %v2464
    %2966 = vmatpush1.msra.mxu0 %v2463
    %2967 = vmatprep.subr.mxu0 %v2468
    %2968 = vmatpush1.msra.mxu0 %v2467
    %2969 = vmatprep.subr.mxu0 %v2472
    %2970 = vmatpush1.msra.mxu0 %v2471
    %2971 = vmatprep.subr.mxu0 %v2476
    %2972 = vmatpush1.msra.mxu0 %v2475
    %2973 = vmatprep.subr.mxu0 %v2480
    %2974 = vmatpush1.msra.mxu0 %v2479
    %2975 = vmatprep.subr.mxu0 %v2484
    %2976 = vmatpush1.msra.mxu0 %v2483
    %2977 = vmatprep.subr.mxu0 %v2488
    %2978 = vmatpush1.msra.mxu0 %v2487
    %2979 = vmatprep.subr.mxu0 %v2492
    %2980 = vmatpush1.msra.mxu0 %v2491
    %2981 = vmatprep.subr.mxu0 %v2496
    %2982 = vmatpush1.msra.mxu0 %v2495
    %2983 = vmatprep.subr.mxu0 %v2500
    %2984 = vmatpush1.msra.mxu0 %v2499
    %2985 = vmatprep.subr.mxu0 %v2504
    %2986 = vmatpush1.msra.mxu0 %v2503
    %2987 = vmatprep.subr.mxu0 %v2508
    %2988 = vmatpush1.msra.mxu0 %v2507
    %2989 = vmatprep.subr.mxu0 %v2512
    %2990 = vmatpush1.msra.mxu0 %v2511
    %2991 = vmatprep.subr.mxu0 %v2516
    %2992 = vmatpush1.msra.mxu0 %v2515
    %2993 = vmatprep.subr.mxu0 %v2520
    %2994 = vmatpush1.msra.mxu0 %v2519
    %2995 = vmatprep.subr.mxu0 %v2524
    %2996 = vmatpush1.msra.mxu0 %v2523
    %2997 = vmatprep.mubr.f32.mxu0 %v2392
    %2998 = vmatmul.mubr.f32.gmra.mrb[0].mxu0 %v2391
    %v2999 = vpop.f32.mrb[0].mxu0
    %v3000 = vadd.f32 %v2916, %v2999
    %v3001 = vpop.f32.mrb[0].mxu0
    %v3002 = vadd.f32 %v2920, %v3001
    %3003 = vdwg.mxu0
    %3004 = vmatprep.subr.mxu0 %v2528
    %3005 = vmatpush1.msra.mxu0 %v2527
    %3006 = vmatprep.subr.mxu0 %v2532
    %3007 = vmatpush1.msra.mxu0 %v2531
    %3008 = vmatprep.subr.mxu0 %v2536
    %3009 = vmatpush1.msra.mxu0 %v2535
    %3010 = vmatprep.subr.mxu0 %v2540
    %3011 = vmatpush1.msra.mxu0 %v2539
    %3012 = vmatprep.subr.mxu0 %v2544
    %3013 = vmatpush1.msra.mxu0 %v2543
    %3014 = vmatprep.subr.mxu0 %v2548
    %3015 = vmatpush1.msra.mxu0 %v2547
    %3016 = vmatprep.subr.mxu0 %v2552
    %3017 = vmatpush1.msra.mxu0 %v2551
    %3018 = vmatprep.subr.mxu0 %v2556
    %3019 = vmatpush1.msra.mxu0 %v2555
    %3020 = vmatprep.subr.mxu0 %v2560
    %3021 = vmatpush1.msra.mxu0 %v2559
    %3022 = vmatprep.subr.mxu0 %v2564
    %3023 = vmatpush1.msra.mxu0 %v2563
    %3024 = vmatprep.subr.mxu0 %v2568
    %3025 = vmatpush1.msra.mxu0 %v2567
    %3026 = vmatprep.subr.mxu0 %v2572
    %3027 = vmatpush1.msra.mxu0 %v2571
    %3028 = vmatprep.subr.mxu0 %v2576
    %3029 = vmatpush1.msra.mxu0 %v2575
    %3030 = vmatprep.subr.mxu0 %v2580
    %3031 = vmatpush1.msra.mxu0 %v2579
    %3032 = vmatprep.subr.mxu0 %v2584
    %3033 = vmatpush1.msra.mxu0 %v2583
    %3034 = vmatprep.subr.mxu0 %v2588
    %3035 = vmatpush1.msra.mxu0 %v2587
    %3036 = vmatprep.subr.mxu0 %v2592
    %3037 = vmatpush1.msra.mxu0 %v2591
    %3038 = vmatprep.subr.mxu0 %v2596
    %3039 = vmatpush1.msra.mxu0 %v2595
    %3040 = vmatprep.subr.mxu0 %v2600
    %3041 = vmatpush1.msra.mxu0 %v2599
    %3042 = vmatprep.subr.mxu0 %v2604
    %3043 = vmatpush1.msra.mxu0 %v2603
    %3044 = vmatprep.subr.mxu0 %v2608
    %3045 = vmatpush1.msra.mxu0 %v2607
    %3046 = vmatprep.subr.mxu0 %v2612
    %3047 = vmatpush1.msra.mxu0 %v2611
    %3048 = vmatprep.subr.mxu0 %v2616
    %3049 = vmatpush1.msra.mxu0 %v2615
    %3050 = vmatprep.subr.mxu0 %v2620
    %3051 = vmatpush1.msra.mxu0 %v2619
    %3052 = vmatprep.subr.mxu0 %v2624
    %3053 = vmatpush1.msra.mxu0 %v2623
    %3054 = vmatprep.subr.mxu0 %v2628
    %3055 = vmatpush1.msra.mxu0 %v2627
    %3056 = vmatprep.subr.mxu0 %v2632
    %3057 = vmatpush1.msra.mxu0 %v2631
    %3058 = vmatprep.subr.mxu0 %v2636
    %3059 = vmatpush1.msra.mxu0 %v2635
    %3060 = vmatprep.subr.mxu0 %v2640
    %3061 = vmatpush1.msra.mxu0 %v2639
    %3062 = vmatprep.subr.mxu0 %v2644
    %3063 = vmatpush1.msra.mxu0 %v2643
    %3064 = vmatprep.subr.mxu0 %v2648
    %3065 = vmatpush1.msra.mxu0 %v2647
    %3066 = vmatprep.subr.mxu0 %v2652
    %3067 = vmatpush1.msra.mxu0 %v2651
    %3068 = vmatprep.mubr.f32.mxu0 %v2394
    %3069 = vmatmul.mubr.f32.gmra.mrb[0].mxu0 %v2393
    %v3070 = vpop.f32.mrb[0].mxu0
    %v3071 = vadd.f32 %v3000, %v3070
    %v3072 = vpop.f32.mrb[0].mxu0
    %v3073 = vadd.f32 %v3002, %v3072
    %3074 = vdwg.mxu0
    %3075 = vmatprep.subr.mxu0 %v2656
    %3076 = vmatpush1.msra.mxu0 %v2655
    %3077 = vmatprep.subr.mxu0 %v2660
    %3078 = vmatpush1.msra.mxu0 %v2659
    %3079 = vmatprep.subr.mxu0 %v2664
    %3080 = vmatpush1.msra.mxu0 %v2663
    %3081 = vmatprep.subr.mxu0 %v2668
    %3082 = vmatpush1.msra.mxu0 %v2667
    %3083 = vmatprep.subr.mxu0 %v2672
    %3084 = vmatpush1.msra.mxu0 %v2671
    %3085 = vmatprep.subr.mxu0 %v2676
    %3086 = vmatpush1.msra.mxu0 %v2675
    %3087 = vmatprep.subr.mxu0 %v2680
    %3088 = vmatpush1.msra.mxu0 %v2679
    %3089 = vmatprep.subr.mxu0 %v2684
    %3090 = vmatpush1.msra.mxu0 %v2683
    %3091 = vmatprep.subr.mxu0 %v2688
    %3092 = vmatpush1.msra.mxu0 %v2687
    %3093 = vmatprep.subr.mxu0 %v2692
    %3094 = vmatpush1.msra.mxu0 %v2691
    %3095 = vmatprep.subr.mxu0 %v2696
    %3096 = vmatpush1.msra.mxu0 %v2695
    %3097 = vmatprep.subr.mxu0 %v2700
    %3098 = vmatpush1.msra.mxu0 %v2699
    %3099 = vmatprep.subr.mxu0 %v2704
    %3100 = vmatpush1.msra.mxu0 %v2703
    %3101 = vmatprep.subr.mxu0 %v2708
    %3102 = vmatpush1.msra.mxu0 %v2707
    %3103 = vmatprep.subr.mxu0 %v2712
    %3104 = vmatpush1.msra.mxu0 %v2711
    %3105 = vmatprep.subr.mxu0 %v2716
    %3106 = vmatpush1.msra.mxu0 %v2715
    %3107 = vmatprep.subr.mxu0 %v2720
    %3108 = vmatpush1.msra.mxu0 %v2719
    %3109 = vmatprep.subr.mxu0 %v2724
    %3110 = vmatpush1.msra.mxu0 %v2723
    %3111 = vmatprep.subr.mxu0 %v2728
    %3112 = vmatpush1.msra.mxu0 %v2727
    %3113 = vmatprep.subr.mxu0 %v2732
    %3114 = vmatpush1.msra.mxu0 %v2731
    %3115 = vmatprep.subr.mxu0 %v2736
    %3116 = vmatpush1.msra.mxu0 %v2735
    %3117 = vmatprep.subr.mxu0 %v2740
    %3118 = vmatpush1.msra.mxu0 %v2739
    %3119 = vmatprep.subr.mxu0 %v2744
    %3120 = vmatpush1.msra.mxu0 %v2743
    %3121 = vmatprep.subr.mxu0 %v2748
    %3122 = vmatpush1.msra.mxu0 %v2747
    %3123 = vmatprep.subr.mxu0 %v2752
    %3124 = vmatpush1.msra.mxu0 %v2751
    %3125 = vmatprep.subr.mxu0 %v2756
    %3126 = vmatpush1.msra.mxu0 %v2755
    %3127 = vmatprep.subr.mxu0 %v2760
    %3128 = vmatpush1.msra.mxu0 %v2759
    %3129 = vmatprep.subr.mxu0 %v2764
    %3130 = vmatpush1.msra.mxu0 %v2763
    %3131 = vmatprep.subr.mxu0 %v2768
    %3132 = vmatpush1.msra.mxu0 %v2767
    %3133 = vmatprep.subr.mxu0 %v2772
    %3134 = vmatpush1.msra.mxu0 %v2771
    %3135 = vmatprep.subr.mxu0 %v2776
    %3136 = vmatpush1.msra.mxu0 %v2775
    %3137 = vmatprep.subr.mxu0 %v2780
    %3138 = vmatpush1.msra.mxu0 %v2779
    %3139 = vmatprep.mubr.f32.mxu0 %v2396
    %3140 = vmatmul.mubr.f32.gmra.mrb[0].mxu0 %v2395
    %v3141 = vpop.f32.mrb[0].mxu0
    %v3142 = vadd.f32 %v3071, %v3141
    %v3143 = vpop.f32.mrb[0].mxu0
    %v3144 = vadd.f32 %v3073, %v3143
    %3145 = vdwg.mxu0
    %3146 = vmatprep.subr.mxu0 %v2784
    %3147 = vmatpush1.msra.mxu0 %v2783
    %3148 = vmatprep.subr.mxu0 %v2788
    %3149 = vmatpush1.msra.mxu0 %v2787
    %3150 = vmatprep.subr.mxu0 %v2792
    %3151 = vmatpush1.msra.mxu0 %v2791
    %3152 = vmatprep.subr.mxu0 %v2796
    %3153 = vmatpush1.msra.mxu0 %v2795
    %3154 = vmatprep.subr.mxu0 %v2800
    %3155 = vmatpush1.msra.mxu0 %v2799
    %3156 = vmatprep.subr.mxu0 %v2804
    %3157 = vmatpush1.msra.mxu0 %v2803
    %3158 = vmatprep.subr.mxu0 %v2808
    %3159 = vmatpush1.msra.mxu0 %v2807
    %3160 = vmatprep.subr.mxu0 %v2812
    %3161 = vmatpush1.msra.mxu0 %v2811
    %3162 = vmatprep.subr.mxu0 %v2816
    %3163 = vmatpush1.msra.mxu0 %v2815
    %3164 = vmatprep.subr.mxu0 %v2820
    %3165 = vmatpush1.msra.mxu0 %v2819
    %3166 = vmatprep.subr.mxu0 %v2824
    %3167 = vmatpush1.msra.mxu0 %v2823
    %3168 = vmatprep.subr.mxu0 %v2828
    %3169 = vmatpush1.msra.mxu0 %v2827
    %3170 = vmatprep.subr.mxu0 %v2832
    %3171 = vmatpush1.msra.mxu0 %v2831
    %3172 = vmatprep.subr.mxu0 %v2836
    %3173 = vmatpush1.msra.mxu0 %v2835
    %3174 = vmatprep.subr.mxu0 %v2840
    %3175 = vmatpush1.msra.mxu0 %v2839
    %3176 = vmatprep.subr.mxu0 %v2844
    %3177 = vmatpush1.msra.mxu0 %v2843
    %3178 = vmatprep.subr.mxu0 %v2848
    %3179 = vmatpush1.msra.mxu0 %v2847
    %3180 = vmatprep.subr.mxu0 %v2852
    %3181 = vmatpush1.msra.mxu0 %v2851
    %3182 = vmatprep.subr.mxu0 %v2856
    %3183 = vmatpush1.msra.mxu0 %v2855
    %3184 = vmatprep.subr.mxu0 %v2860
    %3185 = vmatpush1.msra.mxu0 %v2859
    %3186 = vmatprep.subr.mxu0 %v2864
    %3187 = vmatpush1.msra.mxu0 %v2863
    %3188 = vmatprep.subr.mxu0 %v2868
    %3189 = vmatpush1.msra.mxu0 %v2867
    %3190 = vmatprep.subr.mxu0 %v2872
    %3191 = vmatpush1.msra.mxu0 %v2871
    %3192 = vmatprep.subr.mxu0 %v2876
    %3193 = vmatpush1.msra.mxu0 %v2875
    %3194 = vmatprep.subr.mxu0 %v2880
    %3195 = vmatpush1.msra.mxu0 %v2879
    %3196 = vmatprep.subr.mxu0 %v2884
    %3197 = vmatpush1.msra.mxu0 %v2883
    %3198 = vmatprep.subr.mxu0 %v2888
    %3199 = vmatpush1.msra.mxu0 %v2887
    %3200 = vmatprep.subr.mxu0 %v2892
    %3201 = vmatpush1.msra.mxu0 %v2891
    %3202 = vmatprep.subr.mxu0 %v2896
    %3203 = vmatpush1.msra.mxu0 %v2895
    %3204 = vmatprep.subr.mxu0 %v2900
    %3205 = vmatpush1.msra.mxu0 %v2899
    %3206 = vmatprep.subr.mxu0 %v2904
    %3207 = vmatpush1.msra.mxu0 %v2903
    %3208 = vmatprep.subr.mxu0 %v2908
    %3209 = vmatpush1.msra.mxu0 %v2907
    %3210 = vmatprep.mubr.f32.mxu0 %v2398
    %3211 = vmatmul.mubr.f32.gmra.mrb[0].mxu0 %v2397
    %v3212 = vpop.f32.mrb[0].mxu0
    %v3213 = vadd.f32 %v3142, %v3212
    %v3214 = vpop.f32.mrb[0].mxu0
    %v3215 = vadd.f32 %v3144, %v3214
    %3216 = vdwg.mxu0
    %3217 = vmatprep.subr.mxu0 %v2402
    %3218 = vmatpush1.msra.mxu0 %v2401
    %3219 = vmatprep.subr.mxu0 %v2406
    %3220 = vmatpush1.msra.mxu0 %v2405
    %3221 = vmatprep.subr.mxu0 %v2410
    %3222 = vmatpush1.msra.mxu0 %v2409
    %3223 = vmatprep.subr.mxu0 %v2414
    %3224 = vmatpush1.msra.mxu0 %v2413
    %3225 = vmatprep.subr.mxu0 %v2418
    %3226 = vmatpush1.msra.mxu0 %v2417
    %3227 = vmatprep.subr.mxu0 %v2422
    %3228 = vmatpush1.msra.mxu0 %v2421
    %3229 = vmatprep.subr.mxu0 %v2426
    %3230 = vmatpush1.msra.mxu0 %v2425
    %3231 = vmatprep.subr.mxu0 %v2430
    %3232 = vmatpush1.msra.mxu0 %v2429
    %3233 = vmatprep.subr.mxu0 %v2434
    %3234 = vmatpush1.msra.mxu0 %v2433
    %3235 = vmatprep.subr.mxu0 %v2438
    %3236 = vmatpush1.msra.mxu0 %v2437
    %3237 = vmatprep.subr.mxu0 %v2442
    %3238 = vmatpush1.msra.mxu0 %v2441
    %3239 = vmatprep.subr.mxu0 %v2446
    %3240 = vmatpush1.msra.mxu0 %v2445
    %3241 = vmatprep.subr.mxu0 %v2450
    %3242 = vmatpush1.msra.mxu0 %v2449
    %3243 = vmatprep.subr.mxu0 %v2454
    %3244 = vmatpush1.msra.mxu0 %v2453
    %3245 = vmatprep.subr.mxu0 %v2458
    %3246 = vmatpush1.msra.mxu0 %v2457
    %3247 = vmatprep.subr.mxu0 %v2462
    %3248 = vmatpush1.msra.mxu0 %v2461
    %3249 = vmatprep.subr.mxu0 %v2466
    %3250 = vmatpush1.msra.mxu0 %v2465
    %3251 = vmatprep.subr.mxu0 %v2470
    %3252 = vmatpush1.msra.mxu0 %v2469
    %3253 = vmatprep.subr.mxu0 %v2474
    %3254 = vmatpush1.msra.mxu0 %v2473
    %3255 = vmatprep.subr.mxu0 %v2478
    %3256 = vmatpush1.msra.mxu0 %v2477
    %3257 = vmatprep.subr.mxu0 %v2482
    %3258 = vmatpush1.msra.mxu0 %v2481
    %3259 = vmatprep.subr.mxu0 %v2486
    %3260 = vmatpush1.msra.mxu0 %v2485
    %3261 = vmatprep.subr.mxu0 %v2490
    %3262 = vmatpush1.msra.mxu0 %v2489
    %3263 = vmatprep.subr.mxu0 %v2494
    %3264 = vmatpush1.msra.mxu0 %v2493
    %3265 = vmatprep.subr.mxu0 %v2498
    %3266 = vmatpush1.msra.mxu0 %v2497
    %3267 = vmatprep.subr.mxu0 %v2502
    %3268 = vmatpush1.msra.mxu0 %v2501
    %3269 = vmatprep.subr.mxu0 %v2506
    %3270 = vmatpush1.msra.mxu0 %v2505
    %3271 = vmatprep.subr.mxu0 %v2510
    %3272 = vmatpush1.msra.mxu0 %v2509
    %3273 = vmatprep.subr.mxu0 %v2514
    %3274 = vmatpush1.msra.mxu0 %v2513
    %3275 = vmatprep.subr.mxu0 %v2518
    %3276 = vmatpush1.msra.mxu0 %v2517
    %3277 = vmatprep.subr.mxu0 %v2522
    %3278 = vmatpush1.msra.mxu0 %v2521
    %3279 = vmatprep.subr.mxu0 %v2526
    %3280 = vmatpush1.msra.mxu0 %v2525
    %3281 = vmatprep.mubr.f32.mxu0 %v2392
    %3282 = vmatmul.mubr.f32.gmra.mrb[0].mxu0 %v2391
    %v3283 = vpop.f32.mrb[0].mxu0
    %v3284 = vadd.f32 %v2924, %v3283
    %v3285 = vpop.f32.mrb[0].mxu0
    %v3286 = vadd.f32 %v2928, %v3285
    %3287 = vdwg.mxu0
    %3288 = vmatprep.subr.mxu0 %v2530
    %3289 = vmatpush1.msra.mxu0 %v2529
    %3290 = vmatprep.subr.mxu0 %v2534
    %3291 = vmatpush1.msra.mxu0 %v2533
    %3292 = vmatprep.subr.mxu0 %v2538
    %3293 = vmatpush1.msra.mxu0 %v2537
    %3294 = vmatprep.subr.mxu0 %v2542
    %3295 = vmatpush1.msra.mxu0 %v2541
    %3296 = vmatprep.subr.mxu0 %v2546
    %3297 = vmatpush1.msra.mxu0 %v2545
    %3298 = vmatprep.subr.mxu0 %v2550
    %3299 = vmatpush1.msra.mxu0 %v2549
    %3300 = vmatprep.subr.mxu0 %v2554
    %3301 = vmatpush1.msra.mxu0 %v2553
    %3302 = vmatprep.subr.mxu0 %v2558
    %3303 = vmatpush1.msra.mxu0 %v2557
    %3304 = vmatprep.subr.mxu0 %v2562
    %3305 = vmatpush1.msra.mxu0 %v2561
    %3306 = vmatprep.subr.mxu0 %v2566
    %3307 = vmatpush1.msra.mxu0 %v2565
    %3308 = vmatprep.subr.mxu0 %v2570
    %3309 = vmatpush1.msra.mxu0 %v2569
    %3310 = vmatprep.subr.mxu0 %v2574
    %3311 = vmatpush1.msra.mxu0 %v2573
    %3312 = vmatprep.subr.mxu0 %v2578
    %3313 = vmatpush1.msra.mxu0 %v2577
    %3314 = vmatprep.subr.mxu0 %v2582
    %3315 = vmatpush1.msra.mxu0 %v2581
    %3316 = vmatprep.subr.mxu0 %v2586
    %3317 = vmatpush1.msra.mxu0 %v2585
    %3318 = vmatprep.subr.mxu0 %v2590
    %3319 = vmatpush1.msra.mxu0 %v2589
    %3320 = vmatprep.subr.mxu0 %v2594
    %3321 = vmatpush1.msra.mxu0 %v2593
    %3322 = vmatprep.subr.mxu0 %v2598
    %3323 = vmatpush1.msra.mxu0 %v2597
    %3324 = vmatprep.subr.mxu0 %v2602
    %3325 = vmatpush1.msra.mxu0 %v2601
    %3326 = vmatprep.subr.mxu0 %v2606
    %3327 = vmatpush1.msra.mxu0 %v2605
    %3328 = vmatprep.subr.mxu0 %v2610
    %3329 = vmatpush1.msra.mxu0 %v2609
    %3330 = vmatprep.subr.mxu0 %v2614
    %3331 = vmatpush1.msra.mxu0 %v2613
    %3332 = vmatprep.subr.mxu0 %v2618
    %3333 = vmatpush1.msra.mxu0 %v2617
    %3334 = vmatprep.subr.mxu0 %v2622
    %3335 = vmatpush1.msra.mxu0 %v2621
    %3336 = vmatprep.subr.mxu0 %v2626
    %3337 = vmatpush1.msra.mxu0 %v2625
    %3338 = vmatprep.subr.mxu0 %v2630
    %3339 = vmatpush1.msra.mxu0 %v2629
    %3340 = vmatprep.subr.mxu0 %v2634
    %3341 = vmatpush1.msra.mxu0 %v2633
    %3342 = vmatprep.subr.mxu0 %v2638
    %3343 = vmatpush1.msra.mxu0 %v2637
    %3344 = vmatprep.subr.mxu0 %v2642
    %3345 = vmatpush1.msra.mxu0 %v2641
    %3346 = vmatprep.subr.mxu0 %v2646
    %3347 = vmatpush1.msra.mxu0 %v2645
    %3348 = vmatprep.subr.mxu0 %v2650
    %3349 = vmatpush1.msra.mxu0 %v2649
    %3350 = vmatprep.subr.mxu0 %v2654
    %3351 = vmatpush1.msra.mxu0 %v2653
    %3352 = vmatprep.mubr.f32.mxu0 %v2394
    %3353 = vmatmul.mubr.f32.gmra.mrb[0].mxu0 %v2393
    %v3354 = vpop.f32.mrb[0].mxu0
    %v3355 = vadd.f32 %v3284, %v3354
    %v3356 = vpop.f32.mrb[0].mxu0
    %v3357 = vadd.f32 %v3286, %v3356
    %3358 = vdwg.mxu0
    %3359 = vmatprep.subr.mxu0 %v2658
    %3360 = vmatpush1.msra.mxu0 %v2657
    %3361 = vmatprep.subr.mxu0 %v2662
    %3362 = vmatpush1.msra.mxu0 %v2661
    %3363 = vmatprep.subr.mxu0 %v2666
    %3364 = vmatpush1.msra.mxu0 %v2665
    %3365 = vmatprep.subr.mxu0 %v2670
    %3366 = vmatpush1.msra.mxu0 %v2669
    %3367 = vmatprep.subr.mxu0 %v2674
    %3368 = vmatpush1.msra.mxu0 %v2673
    %3369 = vmatprep.subr.mxu0 %v2678
    %3370 = vmatpush1.msra.mxu0 %v2677
    %3371 = vmatprep.subr.mxu0 %v2682
    %3372 = vmatpush1.msra.mxu0 %v2681
    %3373 = vmatprep.subr.mxu0 %v2686
    %3374 = vmatpush1.msra.mxu0 %v2685
    %3375 = vmatprep.subr.mxu0 %v2690
    %3376 = vmatpush1.msra.mxu0 %v2689
    %3377 = vmatprep.subr.mxu0 %v2694
    %3378 = vmatpush1.msra.mxu0 %v2693
    %3379 = vmatprep.subr.mxu0 %v2698
    %3380 = vmatpush1.msra.mxu0 %v2697
    %3381 = vmatprep.subr.mxu0 %v2702
    %3382 = vmatpush1.msra.mxu0 %v2701
    %3383 = vmatprep.subr.mxu0 %v2706
    %3384 = vmatpush1.msra.mxu0 %v2705
    %3385 = vmatprep.subr.mxu0 %v2710
    %3386 = vmatpush1.msra.mxu0 %v2709
    %3387 = vmatprep.subr.mxu0 %v2714
    %3388 = vmatpush1.msra.mxu0 %v2713
    %3389 = vmatprep.subr.mxu0 %v2718
    %3390 = vmatpush1.msra.mxu0 %v2717
    %3391 = vmatprep.subr.mxu0 %v2722
    %3392 = vmatpush1.msra.mxu0 %v2721
    %3393 = vmatprep.subr.mxu0 %v2726
    %3394 = vmatpush1.msra.mxu0 %v2725
    %3395 = vmatprep.subr.mxu0 %v2730
    %3396 = vmatpush1.msra.mxu0 %v2729
    %3397 = vmatprep.subr.mxu0 %v2734
    %3398 = vmatpush1.msra.mxu0 %v2733
    %3399 = vmatprep.subr.mxu0 %v2738
    %3400 = vmatpush1.msra.mxu0 %v2737
    %3401 = vmatprep.subr.mxu0 %v2742
    %3402 = vmatpush1.msra.mxu0 %v2741
    %3403 = vmatprep.subr.mxu0 %v2746
    %3404 = vmatpush1.msra.mxu0 %v2745
    %3405 = vmatprep.subr.mxu0 %v2750
    %3406 = vmatpush1.msra.mxu0 %v2749
    %3407 = vmatprep.subr.mxu0 %v2754
    %3408 = vmatpush1.msra.mxu0 %v2753
    %3409 = vmatprep.subr.mxu0 %v2758
    %3410 = vmatpush1.msra.mxu0 %v2757
    %3411 = vmatprep.subr.mxu0 %v2762
    %3412 = vmatpush1.msra.mxu0 %v2761
    %3413 = vmatprep.subr.mxu0 %v2766
    %3414 = vmatpush1.msra.mxu0 %v2765
    %3415 = vmatprep.subr.mxu0 %v2770
    %3416 = vmatpush1.msra.mxu0 %v2769
    %3417 = vmatprep.subr.mxu0 %v2774
    %3418 = vmatpush1.msra.mxu0 %v2773
    %3419 = vmatprep.subr.mxu0 %v2778
    %3420 = vmatpush1.msra.mxu0 %v2777
    %3421 = vmatprep.subr.mxu0 %v2782
    %3422 = vmatpush1.msra.mxu0 %v2781
    %3423 = vmatprep.mubr.f32.mxu0 %v2396
    %3424 = vmatmul.mubr.f32.gmra.mrb[0].mxu0 %v2395
    %v3425 = vpop.f32.mrb[0].mxu0
    %v3426 = vadd.f32 %v3355, %v3425
    %v3427 = vpop.f32.mrb[0].mxu0
    %v3428 = vadd.f32 %v3357, %v3427
    %3429 = vdwg.mxu0
    %3430 = vmatprep.subr.mxu0 %v2786
    %3431 = vmatpush1.msra.mxu0 %v2785
    %3432 = vmatprep.subr.mxu0 %v2790
    %3433 = vmatpush1.msra.mxu0 %v2789
    %3434 = vmatprep.subr.mxu0 %v2794
    %3435 = vmatpush1.msra.mxu0 %v2793
    %3436 = vmatprep.subr.mxu0 %v2798
    %3437 = vmatpush1.msra.mxu0 %v2797
    %3438 = vmatprep.subr.mxu0 %v2802
    %3439 = vmatpush1.msra.mxu0 %v2801
    %3440 = vmatprep.subr.mxu0 %v2806
    %3441 = vmatpush1.msra.mxu0 %v2805
    %3442 = vmatprep.subr.mxu0 %v2810
    %3443 = vmatpush1.msra.mxu0 %v2809
    %3444 = vmatprep.subr.mxu0 %v2814
    %3445 = vmatpush1.msra.mxu0 %v2813
    %3446 = vmatprep.subr.mxu0 %v2818
    %3447 = vmatpush1.msra.mxu0 %v2817
    %3448 = vmatprep.subr.mxu0 %v2822
    %3449 = vmatpush1.msra.mxu0 %v2821
    %3450 = vmatprep.subr.mxu0 %v2826
    %3451 = vmatpush1.msra.mxu0 %v2825
    %3452 = vmatprep.subr.mxu0 %v2830
    %3453 = vmatpush1.msra.mxu0 %v2829
    %3454 = vmatprep.subr.mxu0 %v2834
    %3455 = vmatpush1.msra.mxu0 %v2833
    %3456 = vmatprep.subr.mxu0 %v2838
    %3457 = vmatpush1.msra.mxu0 %v2837
    %3458 = vmatprep.subr.mxu0 %v2842
    %3459 = vmatpush1.msra.mxu0 %v2841
    %3460 = vmatprep.subr.mxu0 %v2846
    %3461 = vmatpush1.msra.mxu0 %v2845
    %3462 = vmatprep.subr.mxu0 %v2850
    %3463 = vmatpush1.msra.mxu0 %v2849
    %3464 = vmatprep.subr.mxu0 %v2854
    %3465 = vmatpush1.msra.mxu0 %v2853
    %3466 = vmatprep.subr.mxu0 %v2858
    %3467 = vmatpush1.msra.mxu0 %v2857
    %3468 = vmatprep.subr.mxu0 %v2862
    %3469 = vmatpush1.msra.mxu0 %v2861
    %3470 = vmatprep.subr.mxu0 %v2866
    %3471 = vmatpush1.msra.mxu0 %v2865
    %3472 = vmatprep.subr.mxu0 %v2870
    %3473 = vmatpush1.msra.mxu0 %v2869
    %3474 = vmatprep.subr.mxu0 %v2874
    %3475 = vmatpush1.msra.mxu0 %v2873
    %3476 = vmatprep.subr.mxu0 %v2878
    %3477 = vmatpush1.msra.mxu0 %v2877
    %3478 = vmatprep.subr.mxu0 %v2882
    %3479 = vmatpush1.msra.mxu0 %v2881
    %3480 = vmatprep.subr.mxu0 %v2886
    %3481 = vmatpush1.msra.mxu0 %v2885
    %3482 = vmatprep.subr.mxu0 %v2890
    %3483 = vmatpush1.msra.mxu0 %v2889
    %3484 = vmatprep.subr.mxu0 %v2894
    %3485 = vmatpush1.msra.mxu0 %v2893
    %3486 = vmatprep.subr.mxu0 %v2898
    %3487 = vmatpush1.msra.mxu0 %v2897
    %3488 = vmatprep.subr.mxu0 %v2902
    %3489 = vmatpush1.msra.mxu0 %v2901
    %3490 = vmatprep.subr.mxu0 %v2906
    %3491 = vmatpush1.msra.mxu0 %v2905
    %3492 = vmatprep.subr.mxu0 %v2910
    %3493 = vmatpush1.msra.mxu0 %v2909
    %3494 = vmatprep.mubr.f32.mxu0 %v2398
    %3495 = vmatmul.mubr.f32.gmra.mrb[0].mxu0 %v2397
    %v3496 = vpop.f32.mrb[0].mxu0
    %v3497 = vadd.f32 %v3426, %v3496
    %v3498 = vpop.f32.mrb[0].mxu0
    %v3499 = vadd.f32 %v3428, %v3498
    %3500 = vdwg.mxu0
    %vm3501 = vcmp.ge.f32.partialorder %v3213, 0.0
    %vm3502 = vcmp.ge.f32.partialorder %v3215, 0.0
    %vm3503 = vcmp.ge.f32.partialorder %v3497, 0.0
    %vm3504 = vcmp.ge.f32.partialorder %v3499, 0.0
    %v3505 = vmul.f32 %v3213, 0.2
    %v3506 = vmul.f32 %v3215, 0.2
    %v3507 = vmul.f32 %v3497, 0.2
    %v3508 = vmul.f32 %v3499, 0.2
    %v3509 = vsel %vm3501, %v3213, %v3505
    %v3510 = vsel %vm3502, %v3215, %v3506
    %v3511 = vsel %vm3503, %v3497, %v3507
    %v3512 = vsel %vm3504, %v3499, %v3508
    %v3513 = vld [vmem:[#allocation10] sm:$0xff]
    %v3514 = vld [vmem:[#allocation10 + $0x8] sm:$0xff]
    %v3515 = vld [vmem:[#allocation10 + $0x10] sm:$0xff]
    %v3516 = vld [vmem:[#allocation10 + $0x18] sm:$0xff]
    %v3517 = vld [vmem:[#allocation10 + $0x20] sm:$0xff]
    %v3518 = vld [vmem:[#allocation10 + $0x28] sm:$0xff]
    %v3519 = vld [vmem:[#allocation10 + $0x30] sm:$0xff]
    %v3520 = vld [vmem:[#allocation10 + $0x38] sm:$0xff]
    %v3521 = vld [vmem:[#allocation10 + $0x40] sm:$0xff]
    %v3522 = vld [vmem:[#allocation10 + $0x48] sm:$0xff]
    %v3523 = vld [vmem:[#allocation10 + $0x50] sm:$0xff]
    %v3524 = vld [vmem:[#allocation10 + $0x58] sm:$0xff]
    %v3525 = vld [vmem:[#allocation10 + $0x60] sm:$0xff]
    %v3526 = vld [vmem:[#allocation10 + $0x68] sm:$0xff]
    %v3527 = vld [vmem:[#allocation10 + $0x70] sm:$0xff]
    %v3528 = vld [vmem:[#allocation10 + $0x78] sm:$0xff]
    %v3529 = vld [vmem:[#allocation10 + $0x80] sm:$0xff]
    %v3530 = vld [vmem:[#allocation10 + $0x88] sm:$0xff]
    %v3531 = vld [vmem:[#allocation10 + $0x90] sm:$0xff]
    %v3532 = vld [vmem:[#allocation10 + $0x98] sm:$0xff]
    %v3533 = vld [vmem:[#allocation10 + $0xa0] sm:$0xff]
    %v3534 = vld [vmem:[#allocation10 + $0xa8] sm:$0xff]
    %v3535 = vld [vmem:[#allocation10 + $0xb0] sm:$0xff]
    %v3536 = vld [vmem:[#allocation10 + $0xb8] sm:$0xff]
    %v3537 = vld [vmem:[#allocation10 + $0xc0] sm:$0xff]
    %v3538 = vld [vmem:[#allocation10 + $0xc8] sm:$0xff]
    %v3539 = vld [vmem:[#allocation10 + $0xd0] sm:$0xff]
    %v3540 = vld [vmem:[#allocation10 + $0xd8] sm:$0xff]
    %v3541 = vld [vmem:[#allocation10 + $0xe0] sm:$0xff]
    %v3542 = vld [vmem:[#allocation10 + $0xe8] sm:$0xff]
    %v3543 = vld [vmem:[#allocation10 + $0xf0] sm:$0xff]
    %v3544 = vld [vmem:[#allocation10 + $0xf8] sm:$0xff]
    %v3545 = vld [vmem:[#allocation10 + $0x100] sm:$0xff]
    %v3546 = vld [vmem:[#allocation10 + $0x108] sm:$0xff]
    %v3547 = vld [vmem:[#allocation10 + $0x110] sm:$0xff]
    %v3548 = vld [vmem:[#allocation10 + $0x118] sm:$0xff]
    %v3549 = vld [vmem:[#allocation10 + $0x120] sm:$0xff]
    %v3550 = vld [vmem:[#allocation10 + $0x128] sm:$0xff]
    %v3551 = vld [vmem:[#allocation10 + $0x130] sm:$0xff]
    %v3552 = vld [vmem:[#allocation10 + $0x138] sm:$0xff]
    %v3553 = vld [vmem:[#allocation10 + $0x140] sm:$0xff]
    %v3554 = vld [vmem:[#allocation10 + $0x148] sm:$0xff]
    %v3555 = vld [vmem:[#allocation10 + $0x150] sm:$0xff]
    %v3556 = vld [vmem:[#allocation10 + $0x158] sm:$0xff]
    %v3557 = vld [vmem:[#allocation10 + $0x160] sm:$0xff]
    %v3558 = vld [vmem:[#allocation10 + $0x168] sm:$0xff]
    %v3559 = vld [vmem:[#allocation10 + $0x170] sm:$0xff]
    %v3560 = vld [vmem:[#allocation10 + $0x178] sm:$0xff]
    %v3561 = vld [vmem:[#allocation10 + $0x180] sm:$0xff]
    %v3562 = vld [vmem:[#allocation10 + $0x188] sm:$0xff]
    %v3563 = vld [vmem:[#allocation10 + $0x190] sm:$0xff]
    %v3564 = vld [vmem:[#allocation10 + $0x198] sm:$0xff]
    %v3565 = vld [vmem:[#allocation10 + $0x1a0] sm:$0xff]
    %v3566 = vld [vmem:[#allocation10 + $0x1a8] sm:$0xff]
    %v3567 = vld [vmem:[#allocation10 + $0x1b0] sm:$0xff]
    %v3568 = vld [vmem:[#allocation10 + $0x1b8] sm:$0xff]
    %v3569 = vld [vmem:[#allocation10 + $0x1c0] sm:$0xff]
    %v3570 = vld [vmem:[#allocation10 + $0x1c8] sm:$0xff]
    %v3571 = vld [vmem:[#allocation10 + $0x1d0] sm:$0xff]
    %v3572 = vld [vmem:[#allocation10 + $0x1d8] sm:$0xff]
    %v3573 = vld [vmem:[#allocation10 + $0x1e0] sm:$0xff]
    %v3574 = vld [vmem:[#allocation10 + $0x1e8] sm:$0xff]
    %v3575 = vld [vmem:[#allocation10 + $0x1f0] sm:$0xff]
    %v3576 = vld [vmem:[#allocation10 + $0x1f8] sm:$0xff]
    %v3577 = vld [vmem:[#allocation10 + $0x200] sm:$0xff]
    %v3578 = vld [vmem:[#allocation10 + $0x208] sm:$0xff]
    %v3579 = vld [vmem:[#allocation10 + $0x210] sm:$0xff]
    %v3580 = vld [vmem:[#allocation10 + $0x218] sm:$0xff]
    %v3581 = vld [vmem:[#allocation10 + $0x220] sm:$0xff]
    %v3582 = vld [vmem:[#allocation10 + $0x228] sm:$0xff]
    %v3583 = vld [vmem:[#allocation10 + $0x230] sm:$0xff]
    %v3584 = vld [vmem:[#allocation10 + $0x238] sm:$0xff]
    %v3585 = vld [vmem:[#allocation10 + $0x240] sm:$0xff]
    %v3586 = vld [vmem:[#allocation10 + $0x248] sm:$0xff]
    %v3587 = vld [vmem:[#allocation10 + $0x250] sm:$0xff]
    %v3588 = vld [vmem:[#allocation10 + $0x258] sm:$0xff]
    %v3589 = vld [vmem:[#allocation10 + $0x260] sm:$0xff]
    %v3590 = vld [vmem:[#allocation10 + $0x268] sm:$0xff]
    %v3591 = vld [vmem:[#allocation10 + $0x270] sm:$0xff]
    %v3592 = vld [vmem:[#allocation10 + $0x278] sm:$0xff]
    %v3593 = vld [vmem:[#allocation10 + $0x280] sm:$0xff]
    %v3594 = vld [vmem:[#allocation10 + $0x288] sm:$0xff]
    %v3595 = vld [vmem:[#allocation10 + $0x290] sm:$0xff]
    %v3596 = vld [vmem:[#allocation10 + $0x298] sm:$0xff]
    %v3597 = vld [vmem:[#allocation10 + $0x2a0] sm:$0xff]
    %v3598 = vld [vmem:[#allocation10 + $0x2a8] sm:$0xff]
    %v3599 = vld [vmem:[#allocation10 + $0x2b0] sm:$0xff]
    %v3600 = vld [vmem:[#allocation10 + $0x2b8] sm:$0xff]
    %v3601 = vld [vmem:[#allocation10 + $0x2c0] sm:$0xff]
    %v3602 = vld [vmem:[#allocation10 + $0x2c8] sm:$0xff]
    %v3603 = vld [vmem:[#allocation10 + $0x2d0] sm:$0xff]
    %v3604 = vld [vmem:[#allocation10 + $0x2d8] sm:$0xff]
    %v3605 = vld [vmem:[#allocation10 + $0x2e0] sm:$0xff]
    %v3606 = vld [vmem:[#allocation10 + $0x2e8] sm:$0xff]
    %v3607 = vld [vmem:[#allocation10 + $0x2f0] sm:$0xff]
    %v3608 = vld [vmem:[#allocation10 + $0x2f8] sm:$0xff]
    %v3609 = vld [vmem:[#allocation10 + $0x300] sm:$0xff]
    %v3610 = vld [vmem:[#allocation10 + $0x308] sm:$0xff]
    %v3611 = vld [vmem:[#allocation10 + $0x310] sm:$0xff]
    %v3612 = vld [vmem:[#allocation10 + $0x318] sm:$0xff]
    %v3613 = vld [vmem:[#allocation10 + $0x320] sm:$0xff]
    %v3614 = vld [vmem:[#allocation10 + $0x328] sm:$0xff]
    %v3615 = vld [vmem:[#allocation10 + $0x330] sm:$0xff]
    %v3616 = vld [vmem:[#allocation10 + $0x338] sm:$0xff]
    %v3617 = vld [vmem:[#allocation10 + $0x340] sm:$0xff]
    %v3618 = vld [vmem:[#allocation10 + $0x348] sm:$0xff]
    %v3619 = vld [vmem:[#allocation10 + $0x350] sm:$0xff]
    %v3620 = vld [vmem:[#allocation10 + $0x358] sm:$0xff]
    %v3621 = vld [vmem:[#allocation10 + $0x360] sm:$0xff]
    %v3622 = vld [vmem:[#allocation10 + $0x368] sm:$0xff]
    %v3623 = vld [vmem:[#allocation10 + $0x370] sm:$0xff]
    %v3624 = vld [vmem:[#allocation10 + $0x378] sm:$0xff]
    %v3625 = vld [vmem:[#allocation10 + $0x380] sm:$0xff]
    %v3626 = vld [vmem:[#allocation10 + $0x388] sm:$0xff]
    %v3627 = vld [vmem:[#allocation10 + $0x390] sm:$0xff]
    %v3628 = vld [vmem:[#allocation10 + $0x398] sm:$0xff]
    %v3629 = vld [vmem:[#allocation10 + $0x3a0] sm:$0xff]
    %v3630 = vld [vmem:[#allocation10 + $0x3a8] sm:$0xff]
    %v3631 = vld [vmem:[#allocation10 + $0x3b0] sm:$0xff]
    %v3632 = vld [vmem:[#allocation10 + $0x3b8] sm:$0xff]
    %v3633 = vld [vmem:[#allocation10 + $0x3c0] sm:$0xff]
    %v3634 = vld [vmem:[#allocation10 + $0x3c8] sm:$0xff]
    %v3635 = vld [vmem:[#allocation10 + $0x3d0] sm:$0xff]
    %v3636 = vld [vmem:[#allocation10 + $0x3d8] sm:$0xff]
    %v3637 = vld [vmem:[#allocation10 + $0x3e0] sm:$0xff]
    %v3638 = vld [vmem:[#allocation10 + $0x3e8] sm:$0xff]
    %v3639 = vld [vmem:[#allocation10 + $0x3f0] sm:$0xff]
    %v3640 = vld [vmem:[#allocation10 + $0x3f8] sm:$0xff]
    %v3641 = vld [vmem:[#allocation11] sm:$0x3]
    %v3643 = vlaneseq
    %v3644 = vshrl.u32 %v3643, 7
    %v3645 = vsub.s32 0, %v3644
    %v3646 = vrot.slane %v3641, %v3645
    %v3647 = vlaneseq
    %v3648 = vshrl.u32 %v3647, 7
    %v3649 = vsub.s32 1, %v3648
    %v3650 = vrot.slane %v3641, %v3649
    %3653 = vmatprep.subr.mxu0 %v3514
    %3654 = vmatpush1.msra.mxu0 %v3513
    %3655 = vmatprep.subr.mxu0 %v3516
    %3656 = vmatpush1.msra.mxu0 %v3515
    %3657 = vmatprep.subr.mxu0 %v3518
    %3658 = vmatpush1.msra.mxu0 %v3517
    %3659 = vmatprep.subr.mxu0 %v3520
    %3660 = vmatpush1.msra.mxu0 %v3519
    %3661 = vmatprep.subr.mxu0 %v3522
    %3662 = vmatpush1.msra.mxu0 %v3521
    %3663 = vmatprep.subr.mxu0 %v3524
    %3664 = vmatpush1.msra.mxu0 %v3523
    %3665 = vmatprep.subr.mxu0 %v3526
    %3666 = vmatpush1.msra.mxu0 %v3525
    %3667 = vmatprep.subr.mxu0 %v3528
    %3668 = vmatpush1.msra.mxu0 %v3527
    %3669 = vmatprep.subr.mxu0 %v3530
    %3670 = vmatpush1.msra.mxu0 %v3529
    %3671 = vmatprep.subr.mxu0 %v3532
    %3672 = vmatpush1.msra.mxu0 %v3531
    %3673 = vmatprep.subr.mxu0 %v3534
    %3674 = vmatpush1.msra.mxu0 %v3533
    %3675 = vmatprep.subr.mxu0 %v3536
    %3676 = vmatpush1.msra.mxu0 %v3535
    %3677 = vmatprep.subr.mxu0 %v3538
    %3678 = vmatpush1.msra.mxu0 %v3537
    %3679 = vmatprep.subr.mxu0 %v3540
    %3680 = vmatpush1.msra.mxu0 %v3539
    %3681 = vmatprep.subr.mxu0 %v3542
    %3682 = vmatpush1.msra.mxu0 %v3541
    %3683 = vmatprep.subr.mxu0 %v3544
    %3684 = vmatpush1.msra.mxu0 %v3543
    %3685 = vmatprep.subr.mxu0 %v3546
    %3686 = vmatpush1.msra.mxu0 %v3545
    %3687 = vmatprep.subr.mxu0 %v3548
    %3688 = vmatpush1.msra.mxu0 %v3547
    %3689 = vmatprep.subr.mxu0 %v3550
    %3690 = vmatpush1.msra.mxu0 %v3549
    %3691 = vmatprep.subr.mxu0 %v3552
    %3692 = vmatpush1.msra.mxu0 %v3551
    %3693 = vmatprep.subr.mxu0 %v3554
    %3694 = vmatpush1.msra.mxu0 %v3553
    %3695 = vmatprep.subr.mxu0 %v3556
    %3696 = vmatpush1.msra.mxu0 %v3555
    %3697 = vmatprep.subr.mxu0 %v3558
    %3698 = vmatpush1.msra.mxu0 %v3557
    %3699 = vmatprep.subr.mxu0 %v3560
    %3700 = vmatpush1.msra.mxu0 %v3559
    %3701 = vmatprep.subr.mxu0 %v3562
    %3702 = vmatpush1.msra.mxu0 %v3561
    %3703 = vmatprep.subr.mxu0 %v3564
    %3704 = vmatpush1.msra.mxu0 %v3563
    %3705 = vmatprep.subr.mxu0 %v3566
    %3706 = vmatpush1.msra.mxu0 %v3565
    %3707 = vmatprep.subr.mxu0 %v3568
    %3708 = vmatpush1.msra.mxu0 %v3567
    %3709 = vmatprep.subr.mxu0 %v3570
    %3710 = vmatpush1.msra.mxu0 %v3569
    %3711 = vmatprep.subr.mxu0 %v3572
    %3712 = vmatpush1.msra.mxu0 %v3571
    %3713 = vmatprep.subr.mxu0 %v3574
    %3714 = vmatpush1.msra.mxu0 %v3573
    %3715 = vmatprep.subr.mxu0 %v3576
    %3716 = vmatpush1.msra.mxu0 %v3575
    %3717 = vmatprep.mubr.f32.mxu0 %v3510
    %3718 = vmatmul.mubr.f32.gmra.mrb[0].mxu0 %v3509
    %v3719 = vpop.f32.mrb[0].mxu0
    %v3720 = vadd.f32 %v3646, %v3719
    %v3721 = vpop.f32.mrb[0].mxu0
    %v3722 = vadd.f32 %v3650, %v3721
    %3723 = vdwg.mxu0
    %3724 = vmatprep.subr.mxu0 %v3578
    %3725 = vmatpush1.msra.mxu0 %v3577
    %3726 = vmatprep.subr.mxu0 %v3580
    %3727 = vmatpush1.msra.mxu0 %v3579
    %3728 = vmatprep.subr.mxu0 %v3582
    %3729 = vmatpush1.msra.mxu0 %v3581
    %3730 = vmatprep.subr.mxu0 %v3584
    %3731 = vmatpush1.msra.mxu0 %v3583
    %3732 = vmatprep.subr.mxu0 %v3586
    %3733 = vmatpush1.msra.mxu0 %v3585
    %3734 = vmatprep.subr.mxu0 %v3588
    %3735 = vmatpush1.msra.mxu0 %v3587
    %3736 = vmatprep.subr.mxu0 %v3590
    %3737 = vmatpush1.msra.mxu0 %v3589
    %3738 = vmatprep.subr.mxu0 %v3592
    %3739 = vmatpush1.msra.mxu0 %v3591
    %3740 = vmatprep.subr.mxu0 %v3594
    %3741 = vmatpush1.msra.mxu0 %v3593
    %3742 = vmatprep.subr.mxu0 %v3596
    %3743 = vmatpush1.msra.mxu0 %v3595
    %3744 = vmatprep.subr.mxu0 %v3598
    %3745 = vmatpush1.msra.mxu0 %v3597
    %3746 = vmatprep.subr.mxu0 %v3600
    %3747 = vmatpush1.msra.mxu0 %v3599
    %3748 = vmatprep.subr.mxu0 %v3602
    %3749 = vmatpush1.msra.mxu0 %v3601
    %3750 = vmatprep.subr.mxu0 %v3604
    %3751 = vmatpush1.msra.mxu0 %v3603
    %3752 = vmatprep.subr.mxu0 %v3606
    %3753 = vmatpush1.msra.mxu0 %v3605
    %3754 = vmatprep.subr.mxu0 %v3608
    %3755 = vmatpush1.msra.mxu0 %v3607
    %3756 = vmatprep.subr.mxu0 %v3610
    %3757 = vmatpush1.msra.mxu0 %v3609
    %3758 = vmatprep.subr.mxu0 %v3612
    %3759 = vmatpush1.msra.mxu0 %v3611
    %3760 = vmatprep.subr.mxu0 %v3614
    %3761 = vmatpush1.msra.mxu0 %v3613
    %3762 = vmatprep.subr.mxu0 %v3616
    %3763 = vmatpush1.msra.mxu0 %v3615
    %3764 = vmatprep.subr.mxu0 %v3618
    %3765 = vmatpush1.msra.mxu0 %v3617
    %3766 = vmatprep.subr.mxu0 %v3620
    %3767 = vmatpush1.msra.mxu0 %v3619
    %3768 = vmatprep.subr.mxu0 %v3622
    %3769 = vmatpush1.msra.mxu0 %v3621
    %3770 = vmatprep.subr.mxu0 %v3624
    %3771 = vmatpush1.msra.mxu0 %v3623
    %3772 = vmatprep.subr.mxu0 %v3626
    %3773 = vmatpush1.msra.mxu0 %v3625
    %3774 = vmatprep.subr.mxu0 %v3628
    %3775 = vmatpush1.msra.mxu0 %v3627
    %3776 = vmatprep.subr.mxu0 %v3630
    %3777 = vmatpush1.msra.mxu0 %v3629
    %3778 = vmatprep.subr.mxu0 %v3632
    %3779 = vmatpush1.msra.mxu0 %v3631
    %3780 = vmatprep.subr.mxu0 %v3634
    %3781 = vmatpush1.msra.mxu0 %v3633
    %3782 = vmatprep.subr.mxu0 %v3636
    %3783 = vmatpush1.msra.mxu0 %v3635
    %3784 = vmatprep.subr.mxu0 %v3638
    %3785 = vmatpush1.msra.mxu0 %v3637
    %3786 = vmatprep.subr.mxu0 %v3640
    %3787 = vmatpush1.msra.mxu0 %v3639
    %3788 = vmatprep.mubr.f32.mxu0 %v3512
    %3789 = vmatmul.mubr.f32.gmra.mrb[0].mxu0 %v3511
    %v3790 = vpop.f32.mrb[0].mxu0
    %v3791 = vadd.f32 %v3720, %v3790
    %v3792 = vpop.f32.mrb[0].mxu0
    %v3793 = vadd.f32 %v3722, %v3792
    %3794 = vdwg.mxu0
    %vm3795 = vcmp.ge.f32.partialorder %v3791, 0.0
    %vm3796 = vcmp.ge.f32.partialorder %v3793, 0.0
    %v3797 = vmul.f32 %v3791, 0.2
    %v3798 = vmul.f32 %v3793, 0.2
    %v3799 = vsel %vm3795, %v3791, %v3797
    %v3800 = vsel %vm3796, %v3793, %v3798
    %v3801 = vld [vmem:[%s7] sm:$0xff]
    %v3802 = vld [vmem:[%s7 + $0x8] sm:$0xff]
    %v3803 = vld [vmem:[%s7 + $0x10] sm:$0xff]
    %v3804 = vld [vmem:[%s7 + $0x18] sm:$0xff]
    %v3805 = vld [vmem:[%s7 + $0x20] sm:$0xff]
    %v3806 = vld [vmem:[%s7 + $0x28] sm:$0xff]
    %v3807 = vld [vmem:[%s7 + $0x30] sm:$0xff]
    %v3808 = vld [vmem:[%s7 + $0x38] sm:$0xff]
    %v3809 = vld [vmem:[%s7 + $0x40] sm:$0xff]
    %v3810 = vld [vmem:[%s7 + $0x48] sm:$0xff]
    %v3811 = vld [vmem:[%s7 + $0x50] sm:$0xff]
    %v3812 = vld [vmem:[%s7 + $0x58] sm:$0xff]
    %v3813 = vld [vmem:[%s7 + $0x60] sm:$0xff]
    %v3814 = vld [vmem:[%s7 + $0x68] sm:$0xff]
    %v3815 = vld [vmem:[%s7 + $0x70] sm:$0xff]
    %v3816 = vld [vmem:[%s7 + $0x78] sm:$0xff]
    %v3817 = vld [vmem:[%s7 + $0x80] sm:$0xff]
    %v3818 = vld [vmem:[%s7 + $0x88] sm:$0xff]
    %v3819 = vld [vmem:[%s7 + $0x90] sm:$0xff]
    %v3820 = vld [vmem:[%s7 + $0x98] sm:$0xff]
    %v3821 = vld [vmem:[%s7 + $0xa0] sm:$0xff]
    %v3822 = vld [vmem:[%s7 + $0xa8] sm:$0xff]
    %v3823 = vld [vmem:[%s7 + $0xb0] sm:$0xff]
    %v3824 = vld [vmem:[%s7 + $0xb8] sm:$0xff]
    %v3825 = vld [vmem:[%s7 + $0xc0] sm:$0xff]
    %v3826 = vld [vmem:[%s7 + $0xc8] sm:$0xff]
    %v3827 = vld [vmem:[%s7 + $0xd0] sm:$0xff]
    %v3828 = vld [vmem:[%s7 + $0xd8] sm:$0xff]
    %v3829 = vld [vmem:[%s7 + $0xe0] sm:$0xff]
    %v3830 = vld [vmem:[%s7 + $0xe8] sm:$0xff]
    %v3831 = vld [vmem:[%s7 + $0xf0] sm:$0xff]
    %v3832 = vld [vmem:[%s7 + $0xf8] sm:$0xff]
    %v3833 = vld [vmem:[#allocation13] sm:$0x1]
    %v3835 = vlaneseq
    %v3836 = vshrl.u32 %v3835, 7
    %v3837 = vsub.s32 0, %v3836
    %v3838 = vrot.slane %v3833, %v3837
    %3840 = vmatprep.subr.mxu0 0.0
    %3841 = vmatpush1.msra.mxu0 %v3801
    %3842 = vmatprep.subr.mxu0 0.0
    %3843 = vmatpush1.msra.mxu0 %v3802
    %3844 = vmatprep.subr.mxu0 0.0
    %3845 = vmatpush1.msra.mxu0 %v3803
    %3846 = vmatprep.subr.mxu0 0.0
    %3847 = vmatpush1.msra.mxu0 %v3804
    %3848 = vmatprep.subr.mxu0 0.0
    %3849 = vmatpush1.msra.mxu0 %v3805
    %3850 = vmatprep.subr.mxu0 0.0
    %3851 = vmatpush1.msra.mxu0 %v3806
    %3852 = vmatprep.subr.mxu0 0.0
    %3853 = vmatpush1.msra.mxu0 %v3807
    %3854 = vmatprep.subr.mxu0 0.0
    %3855 = vmatpush1.msra.mxu0 %v3808
    %3856 = vmatprep.subr.mxu0 0.0
    %3857 = vmatpush1.msra.mxu0 %v3809
    %3858 = vmatprep.subr.mxu0 0.0
    %3859 = vmatpush1.msra.mxu0 %v3810
    %3860 = vmatprep.subr.mxu0 0.0
    %3861 = vmatpush1.msra.mxu0 %v3811
    %3862 = vmatprep.subr.mxu0 0.0
    %3863 = vmatpush1.msra.mxu0 %v3812
    %3864 = vmatprep.subr.mxu0 0.0
    %3865 = vmatpush1.msra.mxu0 %v3813
    %3866 = vmatprep.subr.mxu0 0.0
    %3867 = vmatpush1.msra.mxu0 %v3814
    %3868 = vmatprep.subr.mxu0 0.0
    %3869 = vmatpush1.msra.mxu0 %v3815
    %3870 = vmatprep.subr.mxu0 0.0
    %3871 = vmatpush1.msra.mxu0 %v3816
    %3872 = vmatprep.subr.mxu0 0.0
    %3873 = vmatpush1.msra.mxu0 %v3817
    %3874 = vmatprep.subr.mxu0 0.0
    %3875 = vmatpush1.msra.mxu0 %v3818
    %3876 = vmatprep.subr.mxu0 0.0
    %3877 = vmatpush1.msra.mxu0 %v3819
    %3878 = vmatprep.subr.mxu0 0.0
    %3879 = vmatpush1.msra.mxu0 %v3820
    %3880 = vmatprep.subr.mxu0 0.0
    %3881 = vmatpush1.msra.mxu0 %v3821
    %3882 = vmatprep.subr.mxu0 0.0
    %3883 = vmatpush1.msra.mxu0 %v3822
    %3884 = vmatprep.subr.mxu0 0.0
    %3885 = vmatpush1.msra.mxu0 %v3823
    %3886 = vmatprep.subr.mxu0 0.0
    %3887 = vmatpush1.msra.mxu0 %v3824
    %3888 = vmatprep.subr.mxu0 0.0
    %3889 = vmatpush1.msra.mxu0 %v3825
    %3890 = vmatprep.subr.mxu0 0.0
    %3891 = vmatpush1.msra.mxu0 %v3826
    %3892 = vmatprep.subr.mxu0 0.0
    %3893 = vmatpush1.msra.mxu0 %v3827
    %3894 = vmatprep.subr.mxu0 0.0
    %3895 = vmatpush1.msra.mxu0 %v3828
    %3896 = vmatprep.subr.mxu0 0.0
    %3897 = vmatpush1.msra.mxu0 %v3829
    %3898 = vmatprep.subr.mxu0 0.0
    %3899 = vmatpush1.msra.mxu0 %v3830
    %3900 = vmatprep.subr.mxu0 0.0
    %3901 = vmatpush1.msra.mxu0 %v3831
    %3902 = vmatprep.subr.mxu0 0.0
    %3903 = vmatpush1.msra.mxu0 %v3832
    %3904 = vmatprep.mubr.f32.mxu0 %v3800
    %3905 = vmatmul.mubr.f32.gmra.mrb[0].mxu0 %v3799
    %v3906 = vpop.f32.mrb[0].mxu0
    %v3907 = vadd.f32 %v3838, %v3906
    %v3908 = vpop.f32.mrb[0].mxu0
    %3909 = vdwg.mxu0
    %v3910 = vld [vmem:[%s9] sm:$0xff]
    %v3911 = vld [vmem:[%s9 + $0x8] sm:$0xff]
    %v3912 = vld [vmem:[%s9 + $0x10] sm:$0xff]
    %v3913 = vld [vmem:[%s9 + $0x18] sm:$0xff]
    %v3914 = vld [vmem:[%s9 + $0x20] sm:$0xff]
    %v3915 = vld [vmem:[%s9 + $0x28] sm:$0xff]
    %v3916 = vld [vmem:[%s9 + $0x30] sm:$0xff]
    %v3917 = vld [vmem:[%s9 + $0x38] sm:$0xff]
    %v3918 = vld [vmem:[#allocation2] sm:$0x1]
    %v3920 = vlaneseq
    %v3921 = vshrl.u32 %v3920, 7
    %v3922 = vsub.s32 0, %v3921
    %v3923 = vrot.slane %v3918, %v3922
    %vm3925 = vcmask 523264
    %v3927 = vsel %vm3925, %v3907, 0
    %3929 = vmatprep.subr.mxu0 0.0
    %3930 = vmatpush1.msra.mxu0 %v3910
    %3931 = vmatprep.subr.mxu0 0.0
    %3932 = vmatpush1.msra.mxu0 %v3911
    %3933 = vmatprep.subr.mxu0 0.0
    %3934 = vmatpush1.msra.mxu0 %v3912
    %3935 = vmatprep.subr.mxu0 0.0
    %3936 = vmatpush1.msra.mxu0 %v3913
    %3937 = vmatprep.subr.mxu0 0.0
    %3938 = vmatpush1.msra.mxu0 %v3914
    %3939 = vmatprep.subr.mxu0 0.0
    %3940 = vmatpush1.msra.mxu0 %v3915
    %3941 = vmatprep.subr.mxu0 0.0
    %3942 = vmatpush1.msra.mxu0 %v3916
    %3943 = vmatprep.subr.mxu0 0.0
    %3944 = vmatpush1.msra.mxu0 %v3917
    %3945 = vmatprep.subr.mxu0 0.0
    %3946 = vmatpush1.msra.mxu0 0.0
    %3947 = vmatprep.subr.mxu0 0.0
    %3948 = vmatpush1.msra.mxu0 0.0
    %3949 = vmatprep.subr.mxu0 0.0
    %3950 = vmatpush1.msra.mxu0 0.0
    %3951 = vmatprep.subr.mxu0 0.0
    %3952 = vmatpush1.msra.mxu0 0.0
    %3953 = vmatprep.subr.mxu0 0.0
    %3954 = vmatpush1.msra.mxu0 0.0
    %3955 = vmatprep.subr.mxu0 0.0
    %3956 = vmatpush1.msra.mxu0 0.0
    %3957 = vmatprep.subr.mxu0 0.0
    %3958 = vmatpush1.msra.mxu0 0.0
    %3959 = vmatprep.subr.mxu0 0.0
    %3960 = vmatpush1.msra.mxu0 0.0
    %3961 = vmatprep.subr.mxu0 0.0
    %3962 = vmatpush1.msra.mxu0 0.0
    %3963 = vmatprep.subr.mxu0 0.0
    %3964 = vmatpush1.msra.mxu0 0.0
    %3965 = vmatprep.subr.mxu0 0.0
    %3966 = vmatpush1.msra.mxu0 0.0
    %3967 = vmatprep.subr.mxu0 0.0
    %3968 = vmatpush1.msra.mxu0 0.0
    %3969 = vmatprep.subr.mxu0 0.0
    %3970 = vmatpush1.msra.mxu0 0.0
    %3971 = vmatprep.subr.mxu0 0.0
    %3972 = vmatpush1.msra.mxu0 0.0
    %3973 = vmatprep.subr.mxu0 0.0
    %3974 = vmatpush1.msra.mxu0 0.0
    %3975 = vmatprep.subr.mxu0 0.0
    %3976 = vmatpush1.msra.mxu0 0.0
    %3977 = vmatprep.subr.mxu0 0.0
    %3978 = vmatpush1.msra.mxu0 0.0
    %3979 = vmatprep.subr.mxu0 0.0
    %3980 = vmatpush1.msra.mxu0 0.0
    %3981 = vmatprep.subr.mxu0 0.0
    %3982 = vmatpush1.msra.mxu0 0.0
    %3983 = vmatprep.subr.mxu0 0.0
    %3984 = vmatpush1.msra.mxu0 0.0
    %3985 = vmatprep.subr.mxu0 0.0
    %3986 = vmatpush1.msra.mxu0 0.0
    %3987 = vmatprep.subr.mxu0 0.0
    %3988 = vmatpush1.msra.mxu0 0.0
    %3989 = vmatprep.subr.mxu0 0.0
    %3990 = vmatpush1.msra.mxu0 0.0
    %3991 = vmatprep.subr.mxu0 0.0
    %3992 = vmatpush1.msra.mxu0 0.0
    %3993 = vmatprep.mubr.f32.mxu0 0.0
    %3994 = vmatmul.mubr.f32.gmra.mrb[0].mxu0 %v3927
    %v3995 = vpop.f32.mrb[0].mxu0
    %v3996 = vadd.f32 %v3923, %v3995
    %v3997 = vpop.f32.mrb[0].mxu0
    %3998 = vdwg.mxu0
    %vm3999 = vcmask 1024
    %4000 = vst.msk [vmem:[%s11] sm:$0x3] %vm3999, %v3996
    // Predicated region
    $region74: #{discriminator2d_forward.1} parent=1 // pred_check
      _
    $region75: #{discriminator2d_forward.1} parent=1 // pred_check_branch
      %4002 = sbr.rel (0) target = $region77
    $region76: #{discriminator2d_forward.1} parent=1 // pred_region
      _
    $region77: #{discriminator2d_forward.1} parent=1 // pred_fallthru
      _
    // Predicated region
    $region78: #{discriminator2d_forward.1} parent=1 // pred_check
      _
    $region79: #{discriminator2d_forward.1} parent=1 // pred_check_branch
      %4004 = sbr.rel (0) target = $region81
    $region80: #{discriminator2d_forward.1} parent=1 // pred_region
      _
    $region81: #{discriminator2d_forward.1} parent=1 // pred_fallthru
      _
    %4005 = vsyncpa [#allocation4], 1
    %4006 = vsyncpa [#allocation6], 1
    %4007 = vsyncpa [#allocation9], 1
    %4008 = vsyncpa [#allocation12], 1

</llo_original>
